<compile_context>
chip_gen: v7x
topology: tpu7x:2x2x1
jax: 0.10.0
libtpu: 0.0.40
codegen_flags: <defaults>
</compile_context>

<pallas_src>
import functools

import jax
import jax.numpy as jnp
from jax.experimental import pallas as pl
from jax.experimental.pallas import tpu as pltpu


def _rup(n, m):
    return ((n + m - 1) // m) * m


# ------------------------------ fused kernel ------------------------------

def seq2seq_kernel(tgt_ref, tf_ref, src_ref, enc_w_ref, enc_b_ref,
                   dec_w_ref, dec_b_ref, wfc_ref, bfc_ref, out_ref,
                   *, src_len, tgt_len, batch, bp, hp, vp, real_v):
    f32 = jnp.float32

    # weights stay VMEM-resident for the whole sequence
    enc_w = enc_w_ref[...]                               # (EP+HP, 4*HP) bf16
    dec_w = dec_w_ref[...]                               # (VP+HP, 4*HP) bf16
    wfc = wfc_ref[...]                                   # (HP, VP)      bf16

    # hoisted broadcasts / iotas / masks (outside both recurrences)
    enc_b = jnp.broadcast_to(enc_b_ref[...], (bp, 4 * hp))
    dec_b = jnp.broadcast_to(dec_b_ref[...], (bp, 4 * hp))
    bfc = jnp.broadcast_to(bfc_ref[...], (bp, vp))
    col_i = jax.lax.broadcasted_iota(jnp.int32, (bp, vp), 1)
    row_i = jax.lax.broadcasted_iota(jnp.int32, (bp, 1), 0)
    valid_col = col_i < real_v                            # mask padded vocab cols

    def lstm_cell(gates, c):
        i = jax.nn.sigmoid(gates[:, 0 * hp:1 * hp])       # lane-aligned slices
        f = jax.nn.sigmoid(gates[:, 1 * hp:2 * hp])
        g = jnp.tanh(gates[:, 2 * hp:3 * hp])
        o = jax.nn.sigmoid(gates[:, 3 * hp:4 * hp])
        c_new = f * c + i * g
        h_new = o * jnp.tanh(c_new)
        return h_new, c_new

    # ------------------------------ encoder ------------------------------
    def enc_step(t, carry):
        h, c = carry
        xin = jnp.concatenate([src_ref[t], h.astype(enc_w.dtype)], axis=1)
        gates = jnp.dot(xin, enc_w, preferred_element_type=f32) + enc_b
        return lstm_cell(gates, c)

    h0 = jnp.zeros((bp, hp), f32)
    c0 = jnp.zeros((bp, hp), f32)
    h, c = jax.lax.fori_loop(0, src_len, enc_step, (h0, c0), unroll=True)

    # ------------------------------ decoder ------------------------------
    out_ref[0] = jnp.zeros((bp, vp), f32)                 # outputs[0] stays zero

    def tgt_ids_col(t):
        # (BP, 1) int32 column of target[t]; padded batch rows get `vp` (=> zero one-hot)
        ids = jnp.full((bp, 1), vp, jnp.int32)
        for b in range(batch):
            ids = jnp.where(row_i == b, tgt_ref[t * batch + b], ids)
        return ids

    def dec_step(t, carry):
        h, c, x_ids = carry
        # teacher-forced / model-fed one-hot built in-kernel (iota compare)
        x1h = jnp.where(col_i == x_ids, 1.0, 0.0).astype(dec_w.dtype)
        xin = jnp.concatenate([x1h, h.astype(dec_w.dtype)], axis=1)
        gates = jnp.dot(xin, dec_w, preferred_element_type=f32) + dec_b
        h_new, c_new = lstm_cell(gates, c)
        logits = jnp.dot(h_new.astype(wfc.dtype), wfc,
                         preferred_element_type=f32) + bfc        # (BP, VP) lane-dense
        out_ref[t] = logits

        # argmax over the real vocab (first-max tie-break, like torch.argmax)
        masked = jnp.where(valid_col, logits, jnp.float32(-1e30))
        mx = jnp.max(masked, axis=1, keepdims=True)
        cand = jnp.where(masked == mx, col_i, vp)
        best = jnp.min(cand, axis=1, keepdims=True)               # (BP, 1) int32

        # next input: target[t] if teacher forcing else best_guess (arithmetic blend)
        use_t = tf_ref[t]                                          # 0/1 scalar from SMEM
        x_next = use_t * tgt_ids_col(t) + (1 - use_t) * best
        return (h_new, c_new, x_next)

    x0 = tgt_ids_col(0)                                            # x = target[0]
    jax.lax.fori_loop(1, tgt_len, dec_step, (h, c, x0), unroll=True)


def run_seq2seq_kernel(tgt_flat, tf_flags, src_emb_p, enc_w, enc_b,
                       dec_w, dec_b, wfc, bfc, *, tgt_len, batch, real_v):
    S, BP, _ = src_emb_p.shape
    HP = wfc.shape[0]
    VP = wfc.shape[1]
    kern = functools.partial(seq2seq_kernel, src_len=S, tgt_len=tgt_len,
                             batch=batch, bp=BP, hp=HP, vp=VP, real_v=real_v)
    vmem = pl.BlockSpec(memory_space=pltpu.MemorySpace.VMEM)
    smem = pl.BlockSpec(memory_space=pltpu.MemorySpace.SMEM)
    return pl.pallas_call(
        kern,
        out_shape=jax.ShapeDtypeStruct((tgt_len, BP, VP), jnp.float32),
        in_specs=[smem, smem, vmem, vmem, vmem, vmem, vmem, vmem, vmem],
        out_specs=vmem,
    )(tgt_flat, tf_flags, src_emb_p, enc_w, enc_b, dec_w, dec_b, wfc, bfc)


# ------------------------------ Seq2Seq glue ------------------------------

def init_params(key, src_vocab, tgt_vocab, embed, hidden):
    ks = jax.random.split(key, 10)
    u = lambda k, shape, scale: jax.random.uniform(k, shape, jnp.float32, -scale, scale)
    s = 1.0 / jnp.sqrt(hidden)
    return {
        "enc_emb":   u(ks[0], (src_vocab, embed), 0.1),
        "enc_wih_t": u(ks[1], (embed, 4 * hidden), s),
        "enc_whh_t": u(ks[2], (hidden, 4 * hidden), s),
        "enc_b":     u(ks[3], (1, 4 * hidden), s),        # b_ih + b_hh folded together
        "dec_emb":   u(ks[4], (tgt_vocab, embed), 0.1),
        "dec_wih_t": u(ks[5], (embed, 4 * hidden), s),
        "dec_whh_t": u(ks[6], (hidden, 4 * hidden), s),
        "dec_b":     u(ks[7], (1, 4 * hidden), s),
        "dec_wfc_t": u(ks[8], (hidden, tgt_vocab), s),
        "dec_bfc":   u(ks[9], (1, tgt_vocab), s),
    }


def _pad_gate_mat(w, rows, h, rp, hp):
    """(rows, 4*h) -> (rp, 4*hp), padding each of the i/f/g/o blocks independently."""
    w4 = w.reshape(rows, 4, h)
    out = jnp.zeros((rp, 4, hp), w.dtype).at[:rows, :, :h].set(w4)
    return out.reshape(rp, 4 * hp)


def _pad2(w, r, c, rp, cp):
    return jnp.zeros((rp, cp), w.dtype).at[:r, :c].set(w)


def seq2seq_forward(params, source, target, key, teacher_force_ratio=0.5):
    """source: (src_len, B) int32, target: (tgt_len, B) int32 ->
       outputs: (tgt_len, B, tgt_vocab) float32  (row 0 is zeros, as in the module)."""
    S, B = source.shape
    T, _ = target.shape
    E = params["enc_emb"].shape[1]
    H = params["enc_whh_t"].shape[0]
    V = params["dec_wfc_t"].shape[1]
    Vt = params["dec_emb"].shape[0]

    BP = _rup(B, 8)
    EP = _rup(E, 128)
    HP = _rup(H, 128)
    VP = _rup(V, 128)

    wdt = jnp.bfloat16   # bf16 MXU path for all matmul operands; f32 gate math / accum

    # encoder stacked weight: concat([x, h]) @ [Wih ; Whh]
    enc_w = jnp.concatenate(
        [_pad_gate_mat(params["enc_wih_t"], E, H, EP, HP),
         _pad_gate_mat(params["enc_whh_t"], H, H, HP, HP)], axis=0).astype(wdt)
    enc_b = _pad_gate_mat(params["enc_b"], 1, H, 1, HP)

    # decoder: fold embedding into the input-gate matmul, stack with Whh
    emb_wih = jnp.dot(params["dec_emb"], params["dec_wih_t"])          # (Vt, 4H) f32
    dec_w = jnp.concatenate(
        [_pad_gate_mat(emb_wih, Vt, H, VP, HP),
         _pad_gate_mat(params["dec_whh_t"], H, H, HP, HP)], axis=0).astype(wdt)
    dec_b = _pad_gate_mat(params["dec_b"], 1, H, 1, HP)

    wfc = _pad2(params["dec_wfc_t"], H, V, HP, VP).astype(wdt)
    bfc = _pad2(params["dec_bfc"], 1, V, 1, VP)                        # pad cols -> 0

    # TODO(synk): nn.Dropout on the embeddings (train-mode only) is omitted (eval mode).
    src_emb = jnp.take(params["enc_emb"], source, axis=0)              # (S, B, E) f32
    src_emb_p = jnp.zeros((S, BP, EP), wdt).at[:, :B, :E].set(src_emb.astype(wdt))

    # token ids + pre-sampled teacher-forcing coin flips -> SMEM (int32)
    tgt_flat = target.reshape(-1).astype(jnp.int32)                    # (T*B,)
    tf_flags = (jax.random.uniform(key, (T,)) < teacher_force_ratio).astype(jnp.int32)

    out_p = run_seq2seq_kernel(tgt_flat, tf_flags, src_emb_p, enc_w, enc_b,
                               dec_w, dec_b, wfc, bfc,
                               tgt_len=T, batch=B, real_v=V)           # (T, BP, VP)
    return out_p[:, :B, :V]


# ---------------------------------- main ----------------------------------

if __name__ == "__main__":
    SRC_LEN, TGT_LEN, BATCH = 8, 8, 2
    EMBED, HIDDEN = 32, 32
    SRC_VOCAB, TGT_VOCAB = 64, 48

    root = jax.random.PRNGKey(0)
    k_par, k_src, k_tgt, k_tf = jax.random.split(root, 4)

    params = init_params(k_par, SRC_VOCAB, TGT_VOCAB, EMBED, HIDDEN)
    source = jax.random.randint(k_src, (SRC_LEN, BATCH), 0, SRC_VOCAB, dtype=jnp.int32)
    target = jax.random.randint(k_tgt, (TGT_LEN, BATCH), 0, TGT_VOCAB, dtype=jnp.int32)

    fwd = jax.jit(functools.partial(seq2seq_forward, teacher_force_ratio=0.5))
    outputs = fwd(params, source, target, k_tf)
    outputs = jax.block_until_ready(outputs)

    assert outputs.shape == (TGT_LEN, BATCH, TGT_VOCAB)
    assert bool(jnp.all(outputs[0] == 0.0))
    assert bool(jnp.all(jnp.isfinite(outputs)))
    print("KERNEL_OK")
</pallas_src>

<mosaic_0001>
module attributes {stable_mosaic.version = 11 : i64} {
  func.func @seq2seq_kernel(%arg0: memref<16xi32, #tpu.memory_space<smem>>, %arg1: memref<8xi32, #tpu.memory_space<smem>>, %arg2: memref<8x8x128xbf16, #tpu.memory_space<vmem>>, %arg3: memref<256x512xbf16, #tpu.memory_space<vmem>>, %arg4: memref<1x512xf32, #tpu.memory_space<vmem>>, %arg5: memref<256x512xbf16, #tpu.memory_space<vmem>>, %arg6: memref<1x512xf32, #tpu.memory_space<vmem>>, %arg7: memref<128x128xbf16, #tpu.memory_space<vmem>>, %arg8: memref<1x128xf32, #tpu.memory_space<vmem>>, %arg9: memref<8x8x128xf32, #tpu.memory_space<vmem>>) attributes {dimension_semantics = [], scalar_prefetch = 0 : i64, scratch_operands = 0 : i64, tpu.core_type = #tpu.core_type<tc>} {
    %c0 = arith.constant 0 : index
    %c0_0 = arith.constant 0 : index
    %0 = vector.load %arg3[%c0, %c0_0] : memref<256x512xbf16, #tpu.memory_space<vmem>>, vector<256x512xbf16>
    %c0_1 = arith.constant 0 : index
    %c0_2 = arith.constant 0 : index
    %1 = vector.load %arg5[%c0_1, %c0_2] : memref<256x512xbf16, #tpu.memory_space<vmem>>, vector<256x512xbf16>
    %c0_3 = arith.constant 0 : index
    %c0_4 = arith.constant 0 : index
    %2 = vector.load %arg7[%c0_3, %c0_4] : memref<128x128xbf16, #tpu.memory_space<vmem>>, vector<128x128xbf16>
    %c0_5 = arith.constant 0 : index
    %c0_6 = arith.constant 0 : index
    %3 = vector.load %arg4[%c0_5, %c0_6] : memref<1x512xf32, #tpu.memory_space<vmem>>, vector<1x512xf32>
    %4 = vector.shape_cast %3 : vector<1x512xf32> to vector<1x512xf32>
    %5 = vector.broadcast %4 : vector<1x512xf32> to vector<8x512xf32>
    %c0_7 = arith.constant 0 : index
    %c0_8 = arith.constant 0 : index
    %6 = vector.load %arg6[%c0_7, %c0_8] : memref<1x512xf32, #tpu.memory_space<vmem>>, vector<1x512xf32>
    %7 = vector.shape_cast %6 : vector<1x512xf32> to vector<1x512xf32>
    %8 = vector.broadcast %7 : vector<1x512xf32> to vector<8x512xf32>
    %c0_9 = arith.constant 0 : index
    %c0_10 = arith.constant 0 : index
    %9 = vector.load %arg8[%c0_9, %c0_10] : memref<1x128xf32, #tpu.memory_space<vmem>>, vector<1x128xf32>
    %10 = vector.shape_cast %9 : vector<1x128xf32> to vector<1x128xf32>
    %11 = vector.broadcast %10 : vector<1x128xf32> to vector<8x128xf32>
    %12 = tpu.iota {dimensions = array<i32: 1>} : vector<8x128xi32>
    %13 = tpu.iota {dimensions = array<i32: 0>} : vector<8x1xi32>
    %c48_i32 = arith.constant 48 : i32
    %14 = vector.broadcast %c48_i32 : i32 to vector<8x128xi32>
    %15 = arith.cmpi slt, %12, %14 : vector<8x128xi32>
    %cst = arith.constant 0.000000e+00 : f32
    %16 = vector.broadcast %cst : f32 to vector<8x128xf32>
    %cst_11 = arith.constant 0.000000e+00 : f32
    %17 = vector.broadcast %cst_11 : f32 to vector<8x128xf32>
    %c0_i32 = arith.constant 0 : i32
    %18 = arith.index_cast %c0_i32 : i32 to index
    %c0_12 = arith.constant 0 : index
    %c0_13 = arith.constant 0 : index
    %19 = vector.load %arg2[%18, %c0_12, %c0_13] : memref<8x8x128xbf16, #tpu.memory_space<vmem>>, vector<1x8x128xbf16>
    %20 = vector.shape_cast %19 : vector<1x8x128xbf16> to vector<8x128xbf16>
    %21 = arith.truncf %16 : vector<8x128xf32> to vector<8x128xbf16>
    %22 = tpu.concatenate %20, %21 in 1 : vector<8x128xbf16>, vector<8x128xbf16> -> vector<8x256xbf16>
    %cst_14 = arith.constant dense<0.000000e+00> : vector<8x512xf32>
    %23 = tpu.matmul %22, %0, %cst_14 {dimension_numbers = #tpu.dot_dimension_numbers<[1], [0], [0], [1], [0, 0, 1, 1], [], []>} : vector<8x256xbf16>, vector<256x512xbf16>, vector<8x512xf32> -> vector<8x512xf32>
    %24 = arith.addf %23, %5 : vector<8x512xf32>
    %25 = vector.extract_strided_slice %24 {offsets = [0, 0], sizes = [8, 128], strides = [1, 1]} : vector<8x512xf32> to vector<8x128xf32>
    %26 = arith.negf %25 : vector<8x128xf32>
    %27 = math.exp %26 : vector<8x128xf32>
    %cst_15 = arith.constant 1.000000e+00 : f32
    %28 = vector.broadcast %cst_15 : f32 to vector<8x128xf32>
    %29 = arith.addf %28, %27 : vector<8x128xf32>
    %30 = arith.divf %28, %29 : vector<8x128xf32>
    %31 = vector.extract_strided_slice %24 {offsets = [0, 128], sizes = [8, 128], strides = [1, 1]} : vector<8x512xf32> to vector<8x128xf32>
    %32 = arith.negf %31 : vector<8x128xf32>
    %33 = math.exp %32 : vector<8x128xf32>
    %cst_16 = arith.constant 1.000000e+00 : f32
    %34 = vector.broadcast %cst_16 : f32 to vector<8x128xf32>
    %35 = arith.addf %34, %33 : vector<8x128xf32>
    %36 = arith.divf %34, %35 : vector<8x128xf32>
    %37 = vector.extract_strided_slice %24 {offsets = [0, 256], sizes = [8, 128], strides = [1, 1]} : vector<8x512xf32> to vector<8x128xf32>
    %38 = math.tanh %37 : vector<8x128xf32>
    %39 = vector.extract_strided_slice %24 {offsets = [0, 384], sizes = [8, 128], strides = [1, 1]} : vector<8x512xf32> to vector<8x128xf32>
    %40 = arith.negf %39 : vector<8x128xf32>
    %41 = math.exp %40 : vector<8x128xf32>
    %cst_17 = arith.constant 1.000000e+00 : f32
    %42 = vector.broadcast %cst_17 : f32 to vector<8x128xf32>
    %43 = arith.addf %42, %41 : vector<8x128xf32>
    %44 = arith.divf %42, %43 : vector<8x128xf32>
    %45 = arith.mulf %36, %17 : vector<8x128xf32>
    %46 = arith.mulf %30, %38 : vector<8x128xf32>
    %47 = arith.addf %45, %46 : vector<8x128xf32>
    %48 = math.tanh %47 : vector<8x128xf32>
    %49 = arith.mulf %44, %48 : vector<8x128xf32>
    %c1_i32 = arith.constant 1 : i32
    %50 = arith.index_cast %c1_i32 : i32 to index
    %c0_18 = arith.constant 0 : index
    %c0_19 = arith.constant 0 : index
    %51 = vector.load %arg2[%50, %c0_18, %c0_19] : memref<8x8x128xbf16, #tpu.memory_space<vmem>>, vector<1x8x128xbf16>
    %52 = vector.shape_cast %51 : vector<1x8x128xbf16> to vector<8x128xbf16>
    %53 = arith.truncf %49 : vector<8x128xf32> to vector<8x128xbf16>
    %54 = tpu.concatenate %52, %53 in 1 : vector<8x128xbf16>, vector<8x128xbf16> -> vector<8x256xbf16>
    %cst_20 = arith.constant dense<0.000000e+00> : vector<8x512xf32>
    %55 = tpu.matmul %54, %0, %cst_20 {dimension_numbers = #tpu.dot_dimension_numbers<[1], [0], [0], [1], [0, 0, 1, 1], [], []>} : vector<8x256xbf16>, vector<256x512xbf16>, vector<8x512xf32> -> vector<8x512xf32>
    %56 = arith.addf %55, %5 : vector<8x512xf32>
    %57 = vector.extract_strided_slice %56 {offsets = [0, 0], sizes = [8, 128], strides = [1, 1]} : vector<8x512xf32> to vector<8x128xf32>
    %58 = arith.negf %57 : vector<8x128xf32>
    %59 = math.exp %58 : vector<8x128xf32>
    %cst_21 = arith.constant 1.000000e+00 : f32
    %60 = vector.broadcast %cst_21 : f32 to vector<8x128xf32>
    %61 = arith.addf %60, %59 : vector<8x128xf32>
    %62 = arith.divf %60, %61 : vector<8x128xf32>
    %63 = vector.extract_strided_slice %56 {offsets = [0, 128], sizes = [8, 128], strides = [1, 1]} : vector<8x512xf32> to vector<8x128xf32>
    %64 = arith.negf %63 : vector<8x128xf32>
    %65 = math.exp %64 : vector<8x128xf32>
    %cst_22 = arith.constant 1.000000e+00 : f32
    %66 = vector.broadcast %cst_22 : f32 to vector<8x128xf32>
    %67 = arith.addf %66, %65 : vector<8x128xf32>
    %68 = arith.divf %66, %67 : vector<8x128xf32>
    %69 = vector.extract_strided_slice %56 {offsets = [0, 256], sizes = [8, 128], strides = [1, 1]} : vector<8x512xf32> to vector<8x128xf32>
    %70 = math.tanh %69 : vector<8x128xf32>
    %71 = vector.extract_strided_slice %56 {offsets = [0, 384], sizes = [8, 128], strides = [1, 1]} : vector<8x512xf32> to vector<8x128xf32>
    %72 = arith.negf %71 : vector<8x128xf32>
    %73 = math.exp %72 : vector<8x128xf32>
    %cst_23 = arith.constant 1.000000e+00 : f32
    %74 = vector.broadcast %cst_23 : f32 to vector<8x128xf32>
    %75 = arith.addf %74, %73 : vector<8x128xf32>
    %76 = arith.divf %74, %75 : vector<8x128xf32>
    %77 = arith.mulf %68, %47 : vector<8x128xf32>
    %78 = arith.mulf %62, %70 : vector<8x128xf32>
    %79 = arith.addf %77, %78 : vector<8x128xf32>
    %80 = math.tanh %79 : vector<8x128xf32>
    %81 = arith.mulf %76, %80 : vector<8x128xf32>
    %c2_i32 = arith.constant 2 : i32
    %82 = arith.index_cast %c2_i32 : i32 to index
    %c0_24 = arith.constant 0 : index
    %c0_25 = arith.constant 0 : index
    %83 = vector.load %arg2[%82, %c0_24, %c0_25] : memref<8x8x128xbf16, #tpu.memory_space<vmem>>, vector<1x8x128xbf16>
    %84 = vector.shape_cast %83 : vector<1x8x128xbf16> to vector<8x128xbf16>
    %85 = arith.truncf %81 : vector<8x128xf32> to vector<8x128xbf16>
    %86 = tpu.concatenate %84, %85 in 1 : vector<8x128xbf16>, vector<8x128xbf16> -> vector<8x256xbf16>
    %cst_26 = arith.constant dense<0.000000e+00> : vector<8x512xf32>
    %87 = tpu.matmul %86, %0, %cst_26 {dimension_numbers = #tpu.dot_dimension_numbers<[1], [0], [0], [1], [0, 0, 1, 1], [], []>} : vector<8x256xbf16>, vector<256x512xbf16>, vector<8x512xf32> -> vector<8x512xf32>
    %88 = arith.addf %87, %5 : vector<8x512xf32>
    %89 = vector.extract_strided_slice %88 {offsets = [0, 0], sizes = [8, 128], strides = [1, 1]} : vector<8x512xf32> to vector<8x128xf32>
    %90 = arith.negf %89 : vector<8x128xf32>
    %91 = math.exp %90 : vector<8x128xf32>
    %cst_27 = arith.constant 1.000000e+00 : f32
    %92 = vector.broadcast %cst_27 : f32 to vector<8x128xf32>
    %93 = arith.addf %92, %91 : vector<8x128xf32>
    %94 = arith.divf %92, %93 : vector<8x128xf32>
    %95 = vector.extract_strided_slice %88 {offsets = [0, 128], sizes = [8, 128], strides = [1, 1]} : vector<8x512xf32> to vector<8x128xf32>
    %96 = arith.negf %95 : vector<8x128xf32>
    %97 = math.exp %96 : vector<8x128xf32>
    %cst_28 = arith.constant 1.000000e+00 : f32
    %98 = vector.broadcast %cst_28 : f32 to vector<8x128xf32>
    %99 = arith.addf %98, %97 : vector<8x128xf32>
    %100 = arith.divf %98, %99 : vector<8x128xf32>
    %101 = vector.extract_strided_slice %88 {offsets = [0, 256], sizes = [8, 128], strides = [1, 1]} : vector<8x512xf32> to vector<8x128xf32>
    %102 = math.tanh %101 : vector<8x128xf32>
    %103 = vector.extract_strided_slice %88 {offsets = [0, 384], sizes = [8, 128], strides = [1, 1]} : vector<8x512xf32> to vector<8x128xf32>
    %104 = arith.negf %103 : vector<8x128xf32>
    %105 = math.exp %104 : vector<8x128xf32>
    %cst_29 = arith.constant 1.000000e+00 : f32
    %106 = vector.broadcast %cst_29 : f32 to vector<8x128xf32>
    %107 = arith.addf %106, %105 : vector<8x128xf32>
    %108 = arith.divf %106, %107 : vector<8x128xf32>
    %109 = arith.mulf %100, %79 : vector<8x128xf32>
    %110 = arith.mulf %94, %102 : vector<8x128xf32>
    %111 = arith.addf %109, %110 : vector<8x128xf32>
    %112 = math.tanh %111 : vector<8x128xf32>
    %113 = arith.mulf %108, %112 : vector<8x128xf32>
    %c3_i32 = arith.constant 3 : i32
    %114 = arith.index_cast %c3_i32 : i32 to index
    %c0_30 = arith.constant 0 : index
    %c0_31 = arith.constant 0 : index
    %115 = vector.load %arg2[%114, %c0_30, %c0_31] : memref<8x8x128xbf16, #tpu.memory_space<vmem>>, vector<1x8x128xbf16>
    %116 = vector.shape_cast %115 : vector<1x8x128xbf16> to vector<8x128xbf16>
    %117 = arith.truncf %113 : vector<8x128xf32> to vector<8x128xbf16>
    %118 = tpu.concatenate %116, %117 in 1 : vector<8x128xbf16>, vector<8x128xbf16> -> vector<8x256xbf16>
    %cst_32 = arith.constant dense<0.000000e+00> : vector<8x512xf32>
    %119 = tpu.matmul %118, %0, %cst_32 {dimension_numbers = #tpu.dot_dimension_numbers<[1], [0], [0], [1], [0, 0, 1, 1], [], []>} : vector<8x256xbf16>, vector<256x512xbf16>, vector<8x512xf32> -> vector<8x512xf32>
    %120 = arith.addf %119, %5 : vector<8x512xf32>
    %121 = vector.extract_strided_slice %120 {offsets = [0, 0], sizes = [8, 128], strides = [1, 1]} : vector<8x512xf32> to vector<8x128xf32>
    %122 = arith.negf %121 : vector<8x128xf32>
    %123 = math.exp %122 : vector<8x128xf32>
    %cst_33 = arith.constant 1.000000e+00 : f32
    %124 = vector.broadcast %cst_33 : f32 to vector<8x128xf32>
    %125 = arith.addf %124, %123 : vector<8x128xf32>
    %126 = arith.divf %124, %125 : vector<8x128xf32>
    %127 = vector.extract_strided_slice %120 {offsets = [0, 128], sizes = [8, 128], strides = [1, 1]} : vector<8x512xf32> to vector<8x128xf32>
    %128 = arith.negf %127 : vector<8x128xf32>
    %129 = math.exp %128 : vector<8x128xf32>
    %cst_34 = arith.constant 1.000000e+00 : f32
    %130 = vector.broadcast %cst_34 : f32 to vector<8x128xf32>
    %131 = arith.addf %130, %129 : vector<8x128xf32>
    %132 = arith.divf %130, %131 : vector<8x128xf32>
    %133 = vector.extract_strided_slice %120 {offsets = [0, 256], sizes = [8, 128], strides = [1, 1]} : vector<8x512xf32> to vector<8x128xf32>
    %134 = math.tanh %133 : vector<8x128xf32>
    %135 = vector.extract_strided_slice %120 {offsets = [0, 384], sizes = [8, 128], strides = [1, 1]} : vector<8x512xf32> to vector<8x128xf32>
    %136 = arith.negf %135 : vector<8x128xf32>
    %137 = math.exp %136 : vector<8x128xf32>
    %cst_35 = arith.constant 1.000000e+00 : f32
    %138 = vector.broadcast %cst_35 : f32 to vector<8x128xf32>
    %139 = arith.addf %138, %137 : vector<8x128xf32>
    %140 = arith.divf %138, %139 : vector<8x128xf32>
    %141 = arith.mulf %132, %111 : vector<8x128xf32>
    %142 = arith.mulf %126, %134 : vector<8x128xf32>
    %143 = arith.addf %141, %142 : vector<8x128xf32>
    %144 = math.tanh %143 : vector<8x128xf32>
    %145 = arith.mulf %140, %144 : vector<8x128xf32>
    %c4_i32 = arith.constant 4 : i32
    %146 = arith.index_cast %c4_i32 : i32 to index
    %c0_36 = arith.constant 0 : index
    %c0_37 = arith.constant 0 : index
    %147 = vector.load %arg2[%146, %c0_36, %c0_37] : memref<8x8x128xbf16, #tpu.memory_space<vmem>>, vector<1x8x128xbf16>
    %148 = vector.shape_cast %147 : vector<1x8x128xbf16> to vector<8x128xbf16>
    %149 = arith.truncf %145 : vector<8x128xf32> to vector<8x128xbf16>
    %150 = tpu.concatenate %148, %149 in 1 : vector<8x128xbf16>, vector<8x128xbf16> -> vector<8x256xbf16>
    %cst_38 = arith.constant dense<0.000000e+00> : vector<8x512xf32>
    %151 = tpu.matmul %150, %0, %cst_38 {dimension_numbers = #tpu.dot_dimension_numbers<[1], [0], [0], [1], [0, 0, 1, 1], [], []>} : vector<8x256xbf16>, vector<256x512xbf16>, vector<8x512xf32> -> vector<8x512xf32>
    %152 = arith.addf %151, %5 : vector<8x512xf32>
    %153 = vector.extract_strided_slice %152 {offsets = [0, 0], sizes = [8, 128], strides = [1, 1]} : vector<8x512xf32> to vector<8x128xf32>
    %154 = arith.negf %153 : vector<8x128xf32>
    %155 = math.exp %154 : vector<8x128xf32>
    %cst_39 = arith.constant 1.000000e+00 : f32
    %156 = vector.broadcast %cst_39 : f32 to vector<8x128xf32>
    %157 = arith.addf %156, %155 : vector<8x128xf32>
    %158 = arith.divf %156, %157 : vector<8x128xf32>
    %159 = vector.extract_strided_slice %152 {offsets = [0, 128], sizes = [8, 128], strides = [1, 1]} : vector<8x512xf32> to vector<8x128xf32>
    %160 = arith.negf %159 : vector<8x128xf32>
    %161 = math.exp %160 : vector<8x128xf32>
    %cst_40 = arith.constant 1.000000e+00 : f32
    %162 = vector.broadcast %cst_40 : f32 to vector<8x128xf32>
    %163 = arith.addf %162, %161 : vector<8x128xf32>
    %164 = arith.divf %162, %163 : vector<8x128xf32>
    %165 = vector.extract_strided_slice %152 {offsets = [0, 256], sizes = [8, 128], strides = [1, 1]} : vector<8x512xf32> to vector<8x128xf32>
    %166 = math.tanh %165 : vector<8x128xf32>
    %167 = vector.extract_strided_slice %152 {offsets = [0, 384], sizes = [8, 128], strides = [1, 1]} : vector<8x512xf32> to vector<8x128xf32>
    %168 = arith.negf %167 : vector<8x128xf32>
    %169 = math.exp %168 : vector<8x128xf32>
    %cst_41 = arith.constant 1.000000e+00 : f32
    %170 = vector.broadcast %cst_41 : f32 to vector<8x128xf32>
    %171 = arith.addf %170, %169 : vector<8x128xf32>
    %172 = arith.divf %170, %171 : vector<8x128xf32>
    %173 = arith.mulf %164, %143 : vector<8x128xf32>
    %174 = arith.mulf %158, %166 : vector<8x128xf32>
    %175 = arith.addf %173, %174 : vector<8x128xf32>
    %176 = math.tanh %175 : vector<8x128xf32>
    %177 = arith.mulf %172, %176 : vector<8x128xf32>
    %c5_i32 = arith.constant 5 : i32
    %178 = arith.index_cast %c5_i32 : i32 to index
    %c0_42 = arith.constant 0 : index
    %c0_43 = arith.constant 0 : index
    %179 = vector.load %arg2[%178, %c0_42, %c0_43] : memref<8x8x128xbf16, #tpu.memory_space<vmem>>, vector<1x8x128xbf16>
    %180 = vector.shape_cast %179 : vector<1x8x128xbf16> to vector<8x128xbf16>
    %181 = arith.truncf %177 : vector<8x128xf32> to vector<8x128xbf16>
    %182 = tpu.concatenate %180, %181 in 1 : vector<8x128xbf16>, vector<8x128xbf16> -> vector<8x256xbf16>
    %cst_44 = arith.constant dense<0.000000e+00> : vector<8x512xf32>
    %183 = tpu.matmul %182, %0, %cst_44 {dimension_numbers = #tpu.dot_dimension_numbers<[1], [0], [0], [1], [0, 0, 1, 1], [], []>} : vector<8x256xbf16>, vector<256x512xbf16>, vector<8x512xf32> -> vector<8x512xf32>
    %184 = arith.addf %183, %5 : vector<8x512xf32>
    %185 = vector.extract_strided_slice %184 {offsets = [0, 0], sizes = [8, 128], strides = [1, 1]} : vector<8x512xf32> to vector<8x128xf32>
    %186 = arith.negf %185 : vector<8x128xf32>
    %187 = math.exp %186 : vector<8x128xf32>
    %cst_45 = arith.constant 1.000000e+00 : f32
    %188 = vector.broadcast %cst_45 : f32 to vector<8x128xf32>
    %189 = arith.addf %188, %187 : vector<8x128xf32>
    %190 = arith.divf %188, %189 : vector<8x128xf32>
    %191 = vector.extract_strided_slice %184 {offsets = [0, 128], sizes = [8, 128], strides = [1, 1]} : vector<8x512xf32> to vector<8x128xf32>
    %192 = arith.negf %191 : vector<8x128xf32>
    %193 = math.exp %192 : vector<8x128xf32>
    %cst_46 = arith.constant 1.000000e+00 : f32
    %194 = vector.broadcast %cst_46 : f32 to vector<8x128xf32>
    %195 = arith.addf %194, %193 : vector<8x128xf32>
    %196 = arith.divf %194, %195 : vector<8x128xf32>
    %197 = vector.extract_strided_slice %184 {offsets = [0, 256], sizes = [8, 128], strides = [1, 1]} : vector<8x512xf32> to vector<8x128xf32>
    %198 = math.tanh %197 : vector<8x128xf32>
    %199 = vector.extract_strided_slice %184 {offsets = [0, 384], sizes = [8, 128], strides = [1, 1]} : vector<8x512xf32> to vector<8x128xf32>
    %200 = arith.negf %199 : vector<8x128xf32>
    %201 = math.exp %200 : vector<8x128xf32>
    %cst_47 = arith.constant 1.000000e+00 : f32
    %202 = vector.broadcast %cst_47 : f32 to vector<8x128xf32>
    %203 = arith.addf %202, %201 : vector<8x128xf32>
    %204 = arith.divf %202, %203 : vector<8x128xf32>
    %205 = arith.mulf %196, %175 : vector<8x128xf32>
    %206 = arith.mulf %190, %198 : vector<8x128xf32>
    %207 = arith.addf %205, %206 : vector<8x128xf32>
    %208 = math.tanh %207 : vector<8x128xf32>
    %209 = arith.mulf %204, %208 : vector<8x128xf32>
    %c6_i32 = arith.constant 6 : i32
    %210 = arith.index_cast %c6_i32 : i32 to index
    %c0_48 = arith.constant 0 : index
    %c0_49 = arith.constant 0 : index
    %211 = vector.load %arg2[%210, %c0_48, %c0_49] : memref<8x8x128xbf16, #tpu.memory_space<vmem>>, vector<1x8x128xbf16>
    %212 = vector.shape_cast %211 : vector<1x8x128xbf16> to vector<8x128xbf16>
    %213 = arith.truncf %209 : vector<8x128xf32> to vector<8x128xbf16>
    %214 = tpu.concatenate %212, %213 in 1 : vector<8x128xbf16>, vector<8x128xbf16> -> vector<8x256xbf16>
    %cst_50 = arith.constant dense<0.000000e+00> : vector<8x512xf32>
    %215 = tpu.matmul %214, %0, %cst_50 {dimension_numbers = #tpu.dot_dimension_numbers<[1], [0], [0], [1], [0, 0, 1, 1], [], []>} : vector<8x256xbf16>, vector<256x512xbf16>, vector<8x512xf32> -> vector<8x512xf32>
    %216 = arith.addf %215, %5 : vector<8x512xf32>
    %217 = vector.extract_strided_slice %216 {offsets = [0, 0], sizes = [8, 128], strides = [1, 1]} : vector<8x512xf32> to vector<8x128xf32>
    %218 = arith.negf %217 : vector<8x128xf32>
    %219 = math.exp %218 : vector<8x128xf32>
    %cst_51 = arith.constant 1.000000e+00 : f32
    %220 = vector.broadcast %cst_51 : f32 to vector<8x128xf32>
    %221 = arith.addf %220, %219 : vector<8x128xf32>
    %222 = arith.divf %220, %221 : vector<8x128xf32>
    %223 = vector.extract_strided_slice %216 {offsets = [0, 128], sizes = [8, 128], strides = [1, 1]} : vector<8x512xf32> to vector<8x128xf32>
    %224 = arith.negf %223 : vector<8x128xf32>
    %225 = math.exp %224 : vector<8x128xf32>
    %cst_52 = arith.constant 1.000000e+00 : f32
    %226 = vector.broadcast %cst_52 : f32 to vector<8x128xf32>
    %227 = arith.addf %226, %225 : vector<8x128xf32>
    %228 = arith.divf %226, %227 : vector<8x128xf32>
    %229 = vector.extract_strided_slice %216 {offsets = [0, 256], sizes = [8, 128], strides = [1, 1]} : vector<8x512xf32> to vector<8x128xf32>
    %230 = math.tanh %229 : vector<8x128xf32>
    %231 = vector.extract_strided_slice %216 {offsets = [0, 384], sizes = [8, 128], strides = [1, 1]} : vector<8x512xf32> to vector<8x128xf32>
    %232 = arith.negf %231 : vector<8x128xf32>
    %233 = math.exp %232 : vector<8x128xf32>
    %cst_53 = arith.constant 1.000000e+00 : f32
    %234 = vector.broadcast %cst_53 : f32 to vector<8x128xf32>
    %235 = arith.addf %234, %233 : vector<8x128xf32>
    %236 = arith.divf %234, %235 : vector<8x128xf32>
    %237 = arith.mulf %228, %207 : vector<8x128xf32>
    %238 = arith.mulf %222, %230 : vector<8x128xf32>
    %239 = arith.addf %237, %238 : vector<8x128xf32>
    %240 = math.tanh %239 : vector<8x128xf32>
    %241 = arith.mulf %236, %240 : vector<8x128xf32>
    %c7_i32 = arith.constant 7 : i32
    %242 = arith.index_cast %c7_i32 : i32 to index
    %c0_54 = arith.constant 0 : index
    %c0_55 = arith.constant 0 : index
    %243 = vector.load %arg2[%242, %c0_54, %c0_55] : memref<8x8x128xbf16, #tpu.memory_space<vmem>>, vector<1x8x128xbf16>
    %244 = vector.shape_cast %243 : vector<1x8x128xbf16> to vector<8x128xbf16>
    %245 = arith.truncf %241 : vector<8x128xf32> to vector<8x128xbf16>
    %246 = tpu.concatenate %244, %245 in 1 : vector<8x128xbf16>, vector<8x128xbf16> -> vector<8x256xbf16>
    %cst_56 = arith.constant dense<0.000000e+00> : vector<8x512xf32>
    %247 = tpu.matmul %246, %0, %cst_56 {dimension_numbers = #tpu.dot_dimension_numbers<[1], [0], [0], [1], [0, 0, 1, 1], [], []>} : vector<8x256xbf16>, vector<256x512xbf16>, vector<8x512xf32> -> vector<8x512xf32>
    %248 = arith.addf %247, %5 : vector<8x512xf32>
    %249 = vector.extract_strided_slice %248 {offsets = [0, 0], sizes = [8, 128], strides = [1, 1]} : vector<8x512xf32> to vector<8x128xf32>
    %250 = arith.negf %249 : vector<8x128xf32>
    %251 = math.exp %250 : vector<8x128xf32>
    %cst_57 = arith.constant 1.000000e+00 : f32
    %252 = vector.broadcast %cst_57 : f32 to vector<8x128xf32>
    %253 = arith.addf %252, %251 : vector<8x128xf32>
    %254 = arith.divf %252, %253 : vector<8x128xf32>
    %255 = vector.extract_strided_slice %248 {offsets = [0, 128], sizes = [8, 128], strides = [1, 1]} : vector<8x512xf32> to vector<8x128xf32>
    %256 = arith.negf %255 : vector<8x128xf32>
    %257 = math.exp %256 : vector<8x128xf32>
    %cst_58 = arith.constant 1.000000e+00 : f32
    %258 = vector.broadcast %cst_58 : f32 to vector<8x128xf32>
    %259 = arith.addf %258, %257 : vector<8x128xf32>
    %260 = arith.divf %258, %259 : vector<8x128xf32>
    %261 = vector.extract_strided_slice %248 {offsets = [0, 256], sizes = [8, 128], strides = [1, 1]} : vector<8x512xf32> to vector<8x128xf32>
    %262 = math.tanh %261 : vector<8x128xf32>
    %263 = vector.extract_strided_slice %248 {offsets = [0, 384], sizes = [8, 128], strides = [1, 1]} : vector<8x512xf32> to vector<8x128xf32>
    %264 = arith.negf %263 : vector<8x128xf32>
    %265 = math.exp %264 : vector<8x128xf32>
    %cst_59 = arith.constant 1.000000e+00 : f32
    %266 = vector.broadcast %cst_59 : f32 to vector<8x128xf32>
    %267 = arith.addf %266, %265 : vector<8x128xf32>
    %268 = arith.divf %266, %267 : vector<8x128xf32>
    %269 = arith.mulf %260, %239 : vector<8x128xf32>
    %270 = arith.mulf %254, %262 : vector<8x128xf32>
    %271 = arith.addf %269, %270 : vector<8x128xf32>
    %272 = math.tanh %271 : vector<8x128xf32>
    %273 = arith.mulf %268, %272 : vector<8x128xf32>
    %c8_i32 = arith.constant 8 : i32
    %cst_60 = arith.constant 0.000000e+00 : f32
    %274 = vector.broadcast %cst_60 : f32 to vector<8x128xf32>
    %c0_61 = arith.constant 0 : index
    %c0_62 = arith.constant 0 : index
    %c0_63 = arith.constant 0 : index
    %275 = vector.load %arg9[%c0_61, %c0_62, %c0_63] : memref<8x8x128xf32, #tpu.memory_space<vmem>>, vector<1x8x128xf32>
    %276 = vector.shape_cast %275 : vector<1x8x128xf32> to vector<8x128xf32>
    %277 = vector.shape_cast %274 : vector<8x128xf32> to vector<1x8x128xf32>
    tpu.vector_store %arg9[%c0_61, %c0_62, %c0_63], %277 {strides = array<i32>} : memref<8x8x128xf32, #tpu.memory_space<vmem>>, vector<1x8x128xf32>,
    %c128_i32 = arith.constant 128 : i32
    %278 = vector.broadcast %c128_i32 : i32 to vector<8x1xi32>
    %c0_i32_64 = arith.constant 0 : i32
    %279 = vector.broadcast %c0_i32_64 : i32 to vector<8x1xi32>
    %280 = arith.cmpi eq, %13, %279 : vector<8x1xi32>
    %c0_65 = arith.constant 0 : index
    %281 = memref.load %arg0[%c0_65] : memref<16xi32, #tpu.memory_space<smem>>
    %282 = vector.broadcast %281 : i32 to vector<8x1xi32>
    %283 = arith.select %280, %282, %278 : vector<8x1xi1>, vector<8x1xi32>
    %c1_i32_66 = arith.constant 1 : i32
    %284 = vector.broadcast %c1_i32_66 : i32 to vector<8x1xi32>
    %285 = arith.cmpi eq, %13, %284 : vector<8x1xi32>
    %c1 = arith.constant 1 : index
    %286 = memref.load %arg0[%c1] : memref<16xi32, #tpu.memory_space<smem>>
    %287 = vector.broadcast %286 : i32 to vector<8x1xi32>
    %288 = arith.select %285, %287, %283 : vector<8x1xi1>, vector<8x1xi32>
    %c1_i32_67 = arith.constant 1 : i32
    %289 = vector.broadcast %288 : vector<8x1xi32> to vector<8x128xi32>
    %290 = arith.cmpi eq, %12, %289 : vector<8x128xi32>
    %cst_68 = arith.constant 1.000000e+00 : f32
    %cst_69 = arith.constant 0.000000e+00 : f32
    %291 = vector.broadcast %cst_68 : f32 to vector<8x128xf32>
    %292 = vector.broadcast %cst_69 : f32 to vector<8x128xf32>
    %293 = arith.select %290, %291, %292 : vector<8x128xi1>, vector<8x128xf32>
    %294 = arith.truncf %293 : vector<8x128xf32> to vector<8x128xbf16>
    %295 = arith.truncf %273 : vector<8x128xf32> to vector<8x128xbf16>
    %296 = tpu.concatenate %294, %295 in 1 : vector<8x128xbf16>, vector<8x128xbf16> -> vector<8x256xbf16>
    %cst_70 = arith.constant dense<0.000000e+00> : vector<8x512xf32>
    %297 = tpu.matmul %296, %1, %cst_70 {dimension_numbers = #tpu.dot_dimension_numbers<[1], [0], [0], [1], [0, 0, 1, 1], [], []>} : vector<8x256xbf16>, vector<256x512xbf16>, vector<8x512xf32> -> vector<8x512xf32>
    %298 = arith.addf %297, %8 : vector<8x512xf32>
    %299 = vector.extract_strided_slice %298 {offsets = [0, 0], sizes = [8, 128], strides = [1, 1]} : vector<8x512xf32> to vector<8x128xf32>
    %300 = arith.negf %299 : vector<8x128xf32>
    %301 = math.exp %300 : vector<8x128xf32>
    %cst_71 = arith.constant 1.000000e+00 : f32
    %302 = vector.broadcast %cst_71 : f32 to vector<8x128xf32>
    %303 = arith.addf %302, %301 : vector<8x128xf32>
    %304 = arith.divf %302, %303 : vector<8x128xf32>
    %305 = vector.extract_strided_slice %298 {offsets = [0, 128], sizes = [8, 128], strides = [1, 1]} : vector<8x512xf32> to vector<8x128xf32>
    %306 = arith.negf %305 : vector<8x128xf32>
    %307 = math.exp %306 : vector<8x128xf32>
    %cst_72 = arith.constant 1.000000e+00 : f32
    %308 = vector.broadcast %cst_72 : f32 to vector<8x128xf32>
    %309 = arith.addf %308, %307 : vector<8x128xf32>
    %310 = arith.divf %308, %309 : vector<8x128xf32>
    %311 = vector.extract_strided_slice %298 {offsets = [0, 256], sizes = [8, 128], strides = [1, 1]} : vector<8x512xf32> to vector<8x128xf32>
    %312 = math.tanh %311 : vector<8x128xf32>
    %313 = vector.extract_strided_slice %298 {offsets = [0, 384], sizes = [8, 128], strides = [1, 1]} : vector<8x512xf32> to vector<8x128xf32>
    %314 = arith.negf %313 : vector<8x128xf32>
    %315 = math.exp %314 : vector<8x128xf32>
    %cst_73 = arith.constant 1.000000e+00 : f32
    %316 = vector.broadcast %cst_73 : f32 to vector<8x128xf32>
    %317 = arith.addf %316, %315 : vector<8x128xf32>
    %318 = arith.divf %316, %317 : vector<8x128xf32>
    %319 = arith.mulf %310, %271 : vector<8x128xf32>
    %320 = arith.mulf %304, %312 : vector<8x128xf32>
    %321 = arith.addf %319, %320 : vector<8x128xf32>
    %322 = math.tanh %321 : vector<8x128xf32>
    %323 = arith.mulf %318, %322 : vector<8x128xf32>
    %324 = arith.truncf %323 : vector<8x128xf32> to vector<8x128xbf16>
    %cst_74 = arith.constant dense<0.000000e+00> : vector<8x128xf32>
    %325 = tpu.matmul %324, %2, %cst_74 {dimension_numbers = #tpu.dot_dimension_numbers<[1], [0], [0], [1], [0, 0, 1, 1], [], []>} : vector<8x128xbf16>, vector<128x128xbf16>, vector<8x128xf32> -> vector<8x128xf32>
    %326 = arith.addf %325, %11 : vector<8x128xf32>
    %327 = arith.index_cast %c1_i32_67 : i32 to index
    %c0_75 = arith.constant 0 : index
    %c0_76 = arith.constant 0 : index
    %328 = vector.load %arg9[%327, %c0_75, %c0_76] : memref<8x8x128xf32, #tpu.memory_space<vmem>>, vector<1x8x128xf32>
    %329 = vector.shape_cast %328 : vector<1x8x128xf32> to vector<8x128xf32>
    %330 = vector.shape_cast %326 : vector<8x128xf32> to vector<1x8x128xf32>
    tpu.vector_store %arg9[%327, %c0_75, %c0_76], %330 {strides = array<i32>} : memref<8x8x128xf32, #tpu.memory_space<vmem>>, vector<1x8x128xf32>,
    %cst_77 = arith.constant -1.000000e+30 : f32
    %331 = vector.broadcast %cst_77 : f32 to vector<8x128xf32>
    %332 = arith.select %15, %326, %331 : vector<8x128xi1>, vector<8x128xf32>
    %cst_78 = arith.constant dense<0xFF800000> : vector<8xf32>
    %333 = vector.multi_reduction <maximumf>, %332, %cst_78 [1] : vector<8x128xf32> to vector<8xf32>
    %334 = vector.shape_cast %333 : vector<8xf32> to vector<8x1xf32>
    %335 = vector.broadcast %334 : vector<8x1xf32> to vector<8x128xf32>
    %336 = arith.cmpf oeq, %332, %335 : vector<8x128xf32>
    %c128_i32_79 = arith.constant 128 : i32
    %337 = vector.broadcast %c128_i32_79 : i32 to vector<8x128xi32>
    %338 = arith.select %336, %12, %337 : vector<8x128xi1>, vector<8x128xi32>
    %cst_80 = arith.constant dense<2147483647> : vector<8xi32>
    %339 = vector.multi_reduction <minsi>, %338, %cst_80 [1] : vector<8x128xi32> to vector<8xi32>
    %340 = vector.shape_cast %339 : vector<8xi32> to vector<8x1xi32>
    %341 = arith.index_cast %c1_i32_67 : i32 to index
    %342 = memref.load %arg1[%341] : memref<8xi32, #tpu.memory_space<smem>>
    %c128_i32_81 = arith.constant 128 : i32
    %343 = vector.broadcast %c128_i32_81 : i32 to vector<8x1xi32>
    %c0_i32_82 = arith.constant 0 : i32
    %344 = vector.broadcast %c0_i32_82 : i32 to vector<8x1xi32>
    %345 = arith.cmpi eq, %13, %344 : vector<8x1xi32>
    %c2_i32_83 = arith.constant 2 : i32
    %346 = arith.muli %c1_i32_67, %c2_i32_83 : i32
    %c0_i32_84 = arith.constant 0 : i32
    %347 = arith.addi %346, %c0_i32_84 : i32
    %348 = arith.index_cast %347 : i32 to index
    %349 = memref.load %arg0[%348] : memref<16xi32, #tpu.memory_space<smem>>
    %350 = vector.broadcast %349 : i32 to vector<8x1xi32>
    %351 = arith.select %345, %350, %343 : vector<8x1xi1>, vector<8x1xi32>
    %c1_i32_85 = arith.constant 1 : i32
    %352 = vector.broadcast %c1_i32_85 : i32 to vector<8x1xi32>
    %353 = arith.cmpi eq, %13, %352 : vector<8x1xi32>
    %c2_i32_86 = arith.constant 2 : i32
    %354 = arith.muli %c1_i32_67, %c2_i32_86 : i32
    %c1_i32_87 = arith.constant 1 : i32
    %355 = arith.addi %354, %c1_i32_87 : i32
    %356 = arith.index_cast %355 : i32 to index
    %357 = memref.load %arg0[%356] : memref<16xi32, #tpu.memory_space<smem>>
    %358 = vector.broadcast %357 : i32 to vector<8x1xi32>
    %359 = arith.select %353, %358, %351 : vector<8x1xi1>, vector<8x1xi32>
    %360 = vector.broadcast %342 : i32 to vector<8x1xi32>
    %361 = arith.muli %360, %359 : vector<8x1xi32>
    %c1_i32_88 = arith.constant 1 : i32
    %362 = arith.subi %c1_i32_88, %342 : i32
    %363 = vector.broadcast %362 : i32 to vector<8x1xi32>
    %364 = arith.muli %363, %340 : vector<8x1xi32>
    %365 = arith.addi %361, %364 : vector<8x1xi32>
    %c2_i32_89 = arith.constant 2 : i32
    %366 = vector.broadcast %365 : vector<8x1xi32> to vector<8x128xi32>
    %367 = arith.cmpi eq, %12, %366 : vector<8x128xi32>
    %cst_90 = arith.constant 1.000000e+00 : f32
    %cst_91 = arith.constant 0.000000e+00 : f32
    %368 = vector.broadcast %cst_90 : f32 to vector<8x128xf32>
    %369 = vector.broadcast %cst_91 : f32 to vector<8x128xf32>
    %370 = arith.select %367, %368, %369 : vector<8x128xi1>, vector<8x128xf32>
    %371 = arith.truncf %370 : vector<8x128xf32> to vector<8x128xbf16>
    %372 = arith.truncf %323 : vector<8x128xf32> to vector<8x128xbf16>
    %373 = tpu.concatenate %371, %372 in 1 : vector<8x128xbf16>, vector<8x128xbf16> -> vector<8x256xbf16>
    %cst_92 = arith.constant dense<0.000000e+00> : vector<8x512xf32>
    %374 = tpu.matmul %373, %1, %cst_92 {dimension_numbers = #tpu.dot_dimension_numbers<[1], [0], [0], [1], [0, 0, 1, 1], [], []>} : vector<8x256xbf16>, vector<256x512xbf16>, vector<8x512xf32> -> vector<8x512xf32>
    %375 = arith.addf %374, %8 : vector<8x512xf32>
    %376 = vector.extract_strided_slice %375 {offsets = [0, 0], sizes = [8, 128], strides = [1, 1]} : vector<8x512xf32> to vector<8x128xf32>
    %377 = arith.negf %376 : vector<8x128xf32>
    %378 = math.exp %377 : vector<8x128xf32>
    %cst_93 = arith.constant 1.000000e+00 : f32
    %379 = vector.broadcast %cst_93 : f32 to vector<8x128xf32>
    %380 = arith.addf %379, %378 : vector<8x128xf32>
    %381 = arith.divf %379, %380 : vector<8x128xf32>
    %382 = vector.extract_strided_slice %375 {offsets = [0, 128], sizes = [8, 128], strides = [1, 1]} : vector<8x512xf32> to vector<8x128xf32>
    %383 = arith.negf %382 : vector<8x128xf32>
    %384 = math.exp %383 : vector<8x128xf32>
    %cst_94 = arith.constant 1.000000e+00 : f32
    %385 = vector.broadcast %cst_94 : f32 to vector<8x128xf32>
    %386 = arith.addf %385, %384 : vector<8x128xf32>
    %387 = arith.divf %385, %386 : vector<8x128xf32>
    %388 = vector.extract_strided_slice %375 {offsets = [0, 256], sizes = [8, 128], strides = [1, 1]} : vector<8x512xf32> to vector<8x128xf32>
    %389 = math.tanh %388 : vector<8x128xf32>
    %390 = vector.extract_strided_slice %375 {offsets = [0, 384], sizes = [8, 128], strides = [1, 1]} : vector<8x512xf32> to vector<8x128xf32>
    %391 = arith.negf %390 : vector<8x128xf32>
    %392 = math.exp %391 : vector<8x128xf32>
    %cst_95 = arith.constant 1.000000e+00 : f32
    %393 = vector.broadcast %cst_95 : f32 to vector<8x128xf32>
    %394 = arith.addf %393, %392 : vector<8x128xf32>
    %395 = arith.divf %393, %394 : vector<8x128xf32>
    %396 = arith.mulf %387, %321 : vector<8x128xf32>
    %397 = arith.mulf %381, %389 : vector<8x128xf32>
    %398 = arith.addf %396, %397 : vector<8x128xf32>
    %399 = math.tanh %398 : vector<8x128xf32>
    %400 = arith.mulf %395, %399 : vector<8x128xf32>
    %401 = arith.truncf %400 : vector<8x128xf32> to vector<8x128xbf16>
    %cst_96 = arith.constant dense<0.000000e+00> : vector<8x128xf32>
    %402 = tpu.matmul %401, %2, %cst_96 {dimension_numbers = #tpu.dot_dimension_numbers<[1], [0], [0], [1], [0, 0, 1, 1], [], []>} : vector<8x128xbf16>, vector<128x128xbf16>, vector<8x128xf32> -> vector<8x128xf32>
    %403 = arith.addf %402, %11 : vector<8x128xf32>
    %404 = arith.index_cast %c2_i32_89 : i32 to index
    %c0_97 = arith.constant 0 : index
    %c0_98 = arith.constant 0 : index
    %405 = vector.load %arg9[%404, %c0_97, %c0_98] : memref<8x8x128xf32, #tpu.memory_space<vmem>>, vector<1x8x128xf32>
    %406 = vector.shape_cast %405 : vector<1x8x128xf32> to vector<8x128xf32>
    %407 = vector.shape_cast %403 : vector<8x128xf32> to vector<1x8x128xf32>
    tpu.vector_store %arg9[%404, %c0_97, %c0_98], %407 {strides = array<i32>} : memref<8x8x128xf32, #tpu.memory_space<vmem>>, vector<1x8x128xf32>,
    %cst_99 = arith.constant -1.000000e+30 : f32
    %408 = vector.broadcast %cst_99 : f32 to vector<8x128xf32>
    %409 = arith.select %15, %403, %408 : vector<8x128xi1>, vector<8x128xf32>
    %cst_100 = arith.constant dense<0xFF800000> : vector<8xf32>
    %410 = vector.multi_reduction <maximumf>, %409, %cst_100 [1] : vector<8x128xf32> to vector<8xf32>
    %411 = vector.shape_cast %410 : vector<8xf32> to vector<8x1xf32>
    %412 = vector.broadcast %411 : vector<8x1xf32> to vector<8x128xf32>
    %413 = arith.cmpf oeq, %409, %412 : vector<8x128xf32>
    %c128_i32_101 = arith.constant 128 : i32
    %414 = vector.broadcast %c128_i32_101 : i32 to vector<8x128xi32>
    %415 = arith.select %413, %12, %414 : vector<8x128xi1>, vector<8x128xi32>
    %cst_102 = arith.constant dense<2147483647> : vector<8xi32>
    %416 = vector.multi_reduction <minsi>, %415, %cst_102 [1] : vector<8x128xi32> to vector<8xi32>
    %417 = vector.shape_cast %416 : vector<8xi32> to vector<8x1xi32>
    %418 = arith.index_cast %c2_i32_89 : i32 to index
    %419 = memref.load %arg1[%418] : memref<8xi32, #tpu.memory_space<smem>>
    %c128_i32_103 = arith.constant 128 : i32
    %420 = vector.broadcast %c128_i32_103 : i32 to vector<8x1xi32>
    %c0_i32_104 = arith.constant 0 : i32
    %421 = vector.broadcast %c0_i32_104 : i32 to vector<8x1xi32>
    %422 = arith.cmpi eq, %13, %421 : vector<8x1xi32>
    %c2_i32_105 = arith.constant 2 : i32
    %423 = arith.muli %c2_i32_89, %c2_i32_105 : i32
    %c0_i32_106 = arith.constant 0 : i32
    %424 = arith.addi %423, %c0_i32_106 : i32
    %425 = arith.index_cast %424 : i32 to index
    %426 = memref.load %arg0[%425] : memref<16xi32, #tpu.memory_space<smem>>
    %427 = vector.broadcast %426 : i32 to vector<8x1xi32>
    %428 = arith.select %422, %427, %420 : vector<8x1xi1>, vector<8x1xi32>
    %c1_i32_107 = arith.constant 1 : i32
    %429 = vector.broadcast %c1_i32_107 : i32 to vector<8x1xi32>
    %430 = arith.cmpi eq, %13, %429 : vector<8x1xi32>
    %c2_i32_108 = arith.constant 2 : i32
    %431 = arith.muli %c2_i32_89, %c2_i32_108 : i32
    %c1_i32_109 = arith.constant 1 : i32
    %432 = arith.addi %431, %c1_i32_109 : i32
    %433 = arith.index_cast %432 : i32 to index
    %434 = memref.load %arg0[%433] : memref<16xi32, #tpu.memory_space<smem>>
    %435 = vector.broadcast %434 : i32 to vector<8x1xi32>
    %436 = arith.select %430, %435, %428 : vector<8x1xi1>, vector<8x1xi32>
    %437 = vector.broadcast %419 : i32 to vector<8x1xi32>
    %438 = arith.muli %437, %436 : vector<8x1xi32>
    %c1_i32_110 = arith.constant 1 : i32
    %439 = arith.subi %c1_i32_110, %419 : i32
    %440 = vector.broadcast %439 : i32 to vector<8x1xi32>
    %441 = arith.muli %440, %417 : vector<8x1xi32>
    %442 = arith.addi %438, %441 : vector<8x1xi32>
    %c3_i32_111 = arith.constant 3 : i32
    %443 = vector.broadcast %442 : vector<8x1xi32> to vector<8x128xi32>
    %444 = arith.cmpi eq, %12, %443 : vector<8x128xi32>
    %cst_112 = arith.constant 1.000000e+00 : f32
    %cst_113 = arith.constant 0.000000e+00 : f32
    %445 = vector.broadcast %cst_112 : f32 to vector<8x128xf32>
    %446 = vector.broadcast %cst_113 : f32 to vector<8x128xf32>
    %447 = arith.select %444, %445, %446 : vector<8x128xi1>, vector<8x128xf32>
    %448 = arith.truncf %447 : vector<8x128xf32> to vector<8x128xbf16>
    %449 = arith.truncf %400 : vector<8x128xf32> to vector<8x128xbf16>
    %450 = tpu.concatenate %448, %449 in 1 : vector<8x128xbf16>, vector<8x128xbf16> -> vector<8x256xbf16>
    %cst_114 = arith.constant dense<0.000000e+00> : vector<8x512xf32>
    %451 = tpu.matmul %450, %1, %cst_114 {dimension_numbers = #tpu.dot_dimension_numbers<[1], [0], [0], [1], [0, 0, 1, 1], [], []>} : vector<8x256xbf16>, vector<256x512xbf16>, vector<8x512xf32> -> vector<8x512xf32>
    %452 = arith.addf %451, %8 : vector<8x512xf32>
    %453 = vector.extract_strided_slice %452 {offsets = [0, 0], sizes = [8, 128], strides = [1, 1]} : vector<8x512xf32> to vector<8x128xf32>
    %454 = arith.negf %453 : vector<8x128xf32>
    %455 = math.exp %454 : vector<8x128xf32>
    %cst_115 = arith.constant 1.000000e+00 : f32
    %456 = vector.broadcast %cst_115 : f32 to vector<8x128xf32>
    %457 = arith.addf %456, %455 : vector<8x128xf32>
    %458 = arith.divf %456, %457 : vector<8x128xf32>
    %459 = vector.extract_strided_slice %452 {offsets = [0, 128], sizes = [8, 128], strides = [1, 1]} : vector<8x512xf32> to vector<8x128xf32>
    %460 = arith.negf %459 : vector<8x128xf32>
    %461 = math.exp %460 : vector<8x128xf32>
    %cst_116 = arith.constant 1.000000e+00 : f32
    %462 = vector.broadcast %cst_116 : f32 to vector<8x128xf32>
    %463 = arith.addf %462, %461 : vector<8x128xf32>
    %464 = arith.divf %462, %463 : vector<8x128xf32>
    %465 = vector.extract_strided_slice %452 {offsets = [0, 256], sizes = [8, 128], strides = [1, 1]} : vector<8x512xf32> to vector<8x128xf32>
    %466 = math.tanh %465 : vector<8x128xf32>
    %467 = vector.extract_strided_slice %452 {offsets = [0, 384], sizes = [8, 128], strides = [1, 1]} : vector<8x512xf32> to vector<8x128xf32>
    %468 = arith.negf %467 : vector<8x128xf32>
    %469 = math.exp %468 : vector<8x128xf32>
    %cst_117 = arith.constant 1.000000e+00 : f32
    %470 = vector.broadcast %cst_117 : f32 to vector<8x128xf32>
    %471 = arith.addf %470, %469 : vector<8x128xf32>
    %472 = arith.divf %470, %471 : vector<8x128xf32>
    %473 = arith.mulf %464, %398 : vector<8x128xf32>
    %474 = arith.mulf %458, %466 : vector<8x128xf32>
    %475 = arith.addf %473, %474 : vector<8x128xf32>
    %476 = math.tanh %475 : vector<8x128xf32>
    %477 = arith.mulf %472, %476 : vector<8x128xf32>
    %478 = arith.truncf %477 : vector<8x128xf32> to vector<8x128xbf16>
    %cst_118 = arith.constant dense<0.000000e+00> : vector<8x128xf32>
    %479 = tpu.matmul %478, %2, %cst_118 {dimension_numbers = #tpu.dot_dimension_numbers<[1], [0], [0], [1], [0, 0, 1, 1], [], []>} : vector<8x128xbf16>, vector<128x128xbf16>, vector<8x128xf32> -> vector<8x128xf32>
    %480 = arith.addf %479, %11 : vector<8x128xf32>
    %481 = arith.index_cast %c3_i32_111 : i32 to index
    %c0_119 = arith.constant 0 : index
    %c0_120 = arith.constant 0 : index
    %482 = vector.load %arg9[%481, %c0_119, %c0_120] : memref<8x8x128xf32, #tpu.memory_space<vmem>>, vector<1x8x128xf32>
    %483 = vector.shape_cast %482 : vector<1x8x128xf32> to vector<8x128xf32>
    %484 = vector.shape_cast %480 : vector<8x128xf32> to vector<1x8x128xf32>
    tpu.vector_store %arg9[%481, %c0_119, %c0_120], %484 {strides = array<i32>} : memref<8x8x128xf32, #tpu.memory_space<vmem>>, vector<1x8x128xf32>,
    %cst_121 = arith.constant -1.000000e+30 : f32
    %485 = vector.broadcast %cst_121 : f32 to vector<8x128xf32>
    %486 = arith.select %15, %480, %485 : vector<8x128xi1>, vector<8x128xf32>
    %cst_122 = arith.constant dense<0xFF800000> : vector<8xf32>
    %487 = vector.multi_reduction <maximumf>, %486, %cst_122 [1] : vector<8x128xf32> to vector<8xf32>
    %488 = vector.shape_cast %487 : vector<8xf32> to vector<8x1xf32>
    %489 = vector.broadcast %488 : vector<8x1xf32> to vector<8x128xf32>
    %490 = arith.cmpf oeq, %486, %489 : vector<8x128xf32>
    %c128_i32_123 = arith.constant 128 : i32
    %491 = vector.broadcast %c128_i32_123 : i32 to vector<8x128xi32>
    %492 = arith.select %490, %12, %491 : vector<8x128xi1>, vector<8x128xi32>
    %cst_124 = arith.constant dense<2147483647> : vector<8xi32>
    %493 = vector.multi_reduction <minsi>, %492, %cst_124 [1] : vector<8x128xi32> to vector<8xi32>
    %494 = vector.shape_cast %493 : vector<8xi32> to vector<8x1xi32>
    %495 = arith.index_cast %c3_i32_111 : i32 to index
    %496 = memref.load %arg1[%495] : memref<8xi32, #tpu.memory_space<smem>>
    %c128_i32_125 = arith.constant 128 : i32
    %497 = vector.broadcast %c128_i32_125 : i32 to vector<8x1xi32>
    %c0_i32_126 = arith.constant 0 : i32
    %498 = vector.broadcast %c0_i32_126 : i32 to vector<8x1xi32>
    %499 = arith.cmpi eq, %13, %498 : vector<8x1xi32>
    %c2_i32_127 = arith.constant 2 : i32
    %500 = arith.muli %c3_i32_111, %c2_i32_127 : i32
    %c0_i32_128 = arith.constant 0 : i32
    %501 = arith.addi %500, %c0_i32_128 : i32
    %502 = arith.index_cast %501 : i32 to index
    %503 = memref.load %arg0[%502] : memref<16xi32, #tpu.memory_space<smem>>
    %504 = vector.broadcast %503 : i32 to vector<8x1xi32>
    %505 = arith.select %499, %504, %497 : vector<8x1xi1>, vector<8x1xi32>
    %c1_i32_129 = arith.constant 1 : i32
    %506 = vector.broadcast %c1_i32_129 : i32 to vector<8x1xi32>
    %507 = arith.cmpi eq, %13, %506 : vector<8x1xi32>
    %c2_i32_130 = arith.constant 2 : i32
    %508 = arith.muli %c3_i32_111, %c2_i32_130 : i32
    %c1_i32_131 = arith.constant 1 : i32
    %509 = arith.addi %508, %c1_i32_131 : i32
    %510 = arith.index_cast %509 : i32 to index
    %511 = memref.load %arg0[%510] : memref<16xi32, #tpu.memory_space<smem>>
    %512 = vector.broadcast %511 : i32 to vector<8x1xi32>
    %513 = arith.select %507, %512, %505 : vector<8x1xi1>, vector<8x1xi32>
    %514 = vector.broadcast %496 : i32 to vector<8x1xi32>
    %515 = arith.muli %514, %513 : vector<8x1xi32>
    %c1_i32_132 = arith.constant 1 : i32
    %516 = arith.subi %c1_i32_132, %496 : i32
    %517 = vector.broadcast %516 : i32 to vector<8x1xi32>
    %518 = arith.muli %517, %494 : vector<8x1xi32>
    %519 = arith.addi %515, %518 : vector<8x1xi32>
    %c4_i32_133 = arith.constant 4 : i32
    %520 = vector.broadcast %519 : vector<8x1xi32> to vector<8x128xi32>
    %521 = arith.cmpi eq, %12, %520 : vector<8x128xi32>
    %cst_134 = arith.constant 1.000000e+00 : f32
    %cst_135 = arith.constant 0.000000e+00 : f32
    %522 = vector.broadcast %cst_134 : f32 to vector<8x128xf32>
    %523 = vector.broadcast %cst_135 : f32 to vector<8x128xf32>
    %524 = arith.select %521, %522, %523 : vector<8x128xi1>, vector<8x128xf32>
    %525 = arith.truncf %524 : vector<8x128xf32> to vector<8x128xbf16>
    %526 = arith.truncf %477 : vector<8x128xf32> to vector<8x128xbf16>
    %527 = tpu.concatenate %525, %526 in 1 : vector<8x128xbf16>, vector<8x128xbf16> -> vector<8x256xbf16>
    %cst_136 = arith.constant dense<0.000000e+00> : vector<8x512xf32>
    %528 = tpu.matmul %527, %1, %cst_136 {dimension_numbers = #tpu.dot_dimension_numbers<[1], [0], [0], [1], [0, 0, 1, 1], [], []>} : vector<8x256xbf16>, vector<256x512xbf16>, vector<8x512xf32> -> vector<8x512xf32>
    %529 = arith.addf %528, %8 : vector<8x512xf32>
    %530 = vector.extract_strided_slice %529 {offsets = [0, 0], sizes = [8, 128], strides = [1, 1]} : vector<8x512xf32> to vector<8x128xf32>
    %531 = arith.negf %530 : vector<8x128xf32>
    %532 = math.exp %531 : vector<8x128xf32>
    %cst_137 = arith.constant 1.000000e+00 : f32
    %533 = vector.broadcast %cst_137 : f32 to vector<8x128xf32>
    %534 = arith.addf %533, %532 : vector<8x128xf32>
    %535 = arith.divf %533, %534 : vector<8x128xf32>
    %536 = vector.extract_strided_slice %529 {offsets = [0, 128], sizes = [8, 128], strides = [1, 1]} : vector<8x512xf32> to vector<8x128xf32>
    %537 = arith.negf %536 : vector<8x128xf32>
    %538 = math.exp %537 : vector<8x128xf32>
    %cst_138 = arith.constant 1.000000e+00 : f32
    %539 = vector.broadcast %cst_138 : f32 to vector<8x128xf32>
    %540 = arith.addf %539, %538 : vector<8x128xf32>
    %541 = arith.divf %539, %540 : vector<8x128xf32>
    %542 = vector.extract_strided_slice %529 {offsets = [0, 256], sizes = [8, 128], strides = [1, 1]} : vector<8x512xf32> to vector<8x128xf32>
    %543 = math.tanh %542 : vector<8x128xf32>
    %544 = vector.extract_strided_slice %529 {offsets = [0, 384], sizes = [8, 128], strides = [1, 1]} : vector<8x512xf32> to vector<8x128xf32>
    %545 = arith.negf %544 : vector<8x128xf32>
    %546 = math.exp %545 : vector<8x128xf32>
    %cst_139 = arith.constant 1.000000e+00 : f32
    %547 = vector.broadcast %cst_139 : f32 to vector<8x128xf32>
    %548 = arith.addf %547, %546 : vector<8x128xf32>
    %549 = arith.divf %547, %548 : vector<8x128xf32>
    %550 = arith.mulf %541, %475 : vector<8x128xf32>
    %551 = arith.mulf %535, %543 : vector<8x128xf32>
    %552 = arith.addf %550, %551 : vector<8x128xf32>
    %553 = math.tanh %552 : vector<8x128xf32>
    %554 = arith.mulf %549, %553 : vector<8x128xf32>
    %555 = arith.truncf %554 : vector<8x128xf32> to vector<8x128xbf16>
    %cst_140 = arith.constant dense<0.000000e+00> : vector<8x128xf32>
    %556 = tpu.matmul %555, %2, %cst_140 {dimension_numbers = #tpu.dot_dimension_numbers<[1], [0], [0], [1], [0, 0, 1, 1], [], []>} : vector<8x128xbf16>, vector<128x128xbf16>, vector<8x128xf32> -> vector<8x128xf32>
    %557 = arith.addf %556, %11 : vector<8x128xf32>
    %558 = arith.index_cast %c4_i32_133 : i32 to index
    %c0_141 = arith.constant 0 : index
    %c0_142 = arith.constant 0 : index
    %559 = vector.load %arg9[%558, %c0_141, %c0_142] : memref<8x8x128xf32, #tpu.memory_space<vmem>>, vector<1x8x128xf32>
    %560 = vector.shape_cast %559 : vector<1x8x128xf32> to vector<8x128xf32>
    %561 = vector.shape_cast %557 : vector<8x128xf32> to vector<1x8x128xf32>
    tpu.vector_store %arg9[%558, %c0_141, %c0_142], %561 {strides = array<i32>} : memref<8x8x128xf32, #tpu.memory_space<vmem>>, vector<1x8x128xf32>,
    %cst_143 = arith.constant -1.000000e+30 : f32
    %562 = vector.broadcast %cst_143 : f32 to vector<8x128xf32>
    %563 = arith.select %15, %557, %562 : vector<8x128xi1>, vector<8x128xf32>
    %cst_144 = arith.constant dense<0xFF800000> : vector<8xf32>
    %564 = vector.multi_reduction <maximumf>, %563, %cst_144 [1] : vector<8x128xf32> to vector<8xf32>
    %565 = vector.shape_cast %564 : vector<8xf32> to vector<8x1xf32>
    %566 = vector.broadcast %565 : vector<8x1xf32> to vector<8x128xf32>
    %567 = arith.cmpf oeq, %563, %566 : vector<8x128xf32>
    %c128_i32_145 = arith.constant 128 : i32
    %568 = vector.broadcast %c128_i32_145 : i32 to vector<8x128xi32>
    %569 = arith.select %567, %12, %568 : vector<8x128xi1>, vector<8x128xi32>
    %cst_146 = arith.constant dense<2147483647> : vector<8xi32>
    %570 = vector.multi_reduction <minsi>, %569, %cst_146 [1] : vector<8x128xi32> to vector<8xi32>
    %571 = vector.shape_cast %570 : vector<8xi32> to vector<8x1xi32>
    %572 = arith.index_cast %c4_i32_133 : i32 to index
    %573 = memref.load %arg1[%572] : memref<8xi32, #tpu.memory_space<smem>>
    %c128_i32_147 = arith.constant 128 : i32
    %574 = vector.broadcast %c128_i32_147 : i32 to vector<8x1xi32>
    %c0_i32_148 = arith.constant 0 : i32
    %575 = vector.broadcast %c0_i32_148 : i32 to vector<8x1xi32>
    %576 = arith.cmpi eq, %13, %575 : vector<8x1xi32>
    %c2_i32_149 = arith.constant 2 : i32
    %577 = arith.muli %c4_i32_133, %c2_i32_149 : i32
    %c0_i32_150 = arith.constant 0 : i32
    %578 = arith.addi %577, %c0_i32_150 : i32
    %579 = arith.index_cast %578 : i32 to index
    %580 = memref.load %arg0[%579] : memref<16xi32, #tpu.memory_space<smem>>
    %581 = vector.broadcast %580 : i32 to vector<8x1xi32>
    %582 = arith.select %576, %581, %574 : vector<8x1xi1>, vector<8x1xi32>
    %c1_i32_151 = arith.constant 1 : i32
    %583 = vector.broadcast %c1_i32_151 : i32 to vector<8x1xi32>
    %584 = arith.cmpi eq, %13, %583 : vector<8x1xi32>
    %c2_i32_152 = arith.constant 2 : i32
    %585 = arith.muli %c4_i32_133, %c2_i32_152 : i32
    %c1_i32_153 = arith.constant 1 : i32
    %586 = arith.addi %585, %c1_i32_153 : i32
    %587 = arith.index_cast %586 : i32 to index
    %588 = memref.load %arg0[%587] : memref<16xi32, #tpu.memory_space<smem>>
    %589 = vector.broadcast %588 : i32 to vector<8x1xi32>
    %590 = arith.select %584, %589, %582 : vector<8x1xi1>, vector<8x1xi32>
    %591 = vector.broadcast %573 : i32 to vector<8x1xi32>
    %592 = arith.muli %591, %590 : vector<8x1xi32>
    %c1_i32_154 = arith.constant 1 : i32
    %593 = arith.subi %c1_i32_154, %573 : i32
    %594 = vector.broadcast %593 : i32 to vector<8x1xi32>
    %595 = arith.muli %594, %571 : vector<8x1xi32>
    %596 = arith.addi %592, %595 : vector<8x1xi32>
    %c5_i32_155 = arith.constant 5 : i32
    %597 = vector.broadcast %596 : vector<8x1xi32> to vector<8x128xi32>
    %598 = arith.cmpi eq, %12, %597 : vector<8x128xi32>
    %cst_156 = arith.constant 1.000000e+00 : f32
    %cst_157 = arith.constant 0.000000e+00 : f32
    %599 = vector.broadcast %cst_156 : f32 to vector<8x128xf32>
    %600 = vector.broadcast %cst_157 : f32 to vector<8x128xf32>
    %601 = arith.select %598, %599, %600 : vector<8x128xi1>, vector<8x128xf32>
    %602 = arith.truncf %601 : vector<8x128xf32> to vector<8x128xbf16>
    %603 = arith.truncf %554 : vector<8x128xf32> to vector<8x128xbf16>
    %604 = tpu.concatenate %602, %603 in 1 : vector<8x128xbf16>, vector<8x128xbf16> -> vector<8x256xbf16>
    %cst_158 = arith.constant dense<0.000000e+00> : vector<8x512xf32>
    %605 = tpu.matmul %604, %1, %cst_158 {dimension_numbers = #tpu.dot_dimension_numbers<[1], [0], [0], [1], [0, 0, 1, 1], [], []>} : vector<8x256xbf16>, vector<256x512xbf16>, vector<8x512xf32> -> vector<8x512xf32>
    %606 = arith.addf %605, %8 : vector<8x512xf32>
    %607 = vector.extract_strided_slice %606 {offsets = [0, 0], sizes = [8, 128], strides = [1, 1]} : vector<8x512xf32> to vector<8x128xf32>
    %608 = arith.negf %607 : vector<8x128xf32>
    %609 = math.exp %608 : vector<8x128xf32>
    %cst_159 = arith.constant 1.000000e+00 : f32
    %610 = vector.broadcast %cst_159 : f32 to vector<8x128xf32>
    %611 = arith.addf %610, %609 : vector<8x128xf32>
    %612 = arith.divf %610, %611 : vector<8x128xf32>
    %613 = vector.extract_strided_slice %606 {offsets = [0, 128], sizes = [8, 128], strides = [1, 1]} : vector<8x512xf32> to vector<8x128xf32>
    %614 = arith.negf %613 : vector<8x128xf32>
    %615 = math.exp %614 : vector<8x128xf32>
    %cst_160 = arith.constant 1.000000e+00 : f32
    %616 = vector.broadcast %cst_160 : f32 to vector<8x128xf32>
    %617 = arith.addf %616, %615 : vector<8x128xf32>
    %618 = arith.divf %616, %617 : vector<8x128xf32>
    %619 = vector.extract_strided_slice %606 {offsets = [0, 256], sizes = [8, 128], strides = [1, 1]} : vector<8x512xf32> to vector<8x128xf32>
    %620 = math.tanh %619 : vector<8x128xf32>
    %621 = vector.extract_strided_slice %606 {offsets = [0, 384], sizes = [8, 128], strides = [1, 1]} : vector<8x512xf32> to vector<8x128xf32>
    %622 = arith.negf %621 : vector<8x128xf32>
    %623 = math.exp %622 : vector<8x128xf32>
    %cst_161 = arith.constant 1.000000e+00 : f32
    %624 = vector.broadcast %cst_161 : f32 to vector<8x128xf32>
    %625 = arith.addf %624, %623 : vector<8x128xf32>
    %626 = arith.divf %624, %625 : vector<8x128xf32>
    %627 = arith.mulf %618, %552 : vector<8x128xf32>
    %628 = arith.mulf %612, %620 : vector<8x128xf32>
    %629 = arith.addf %627, %628 : vector<8x128xf32>
    %630 = math.tanh %629 : vector<8x128xf32>
    %631 = arith.mulf %626, %630 : vector<8x128xf32>
    %632 = arith.truncf %631 : vector<8x128xf32> to vector<8x128xbf16>
    %cst_162 = arith.constant dense<0.000000e+00> : vector<8x128xf32>
    %633 = tpu.matmul %632, %2, %cst_162 {dimension_numbers = #tpu.dot_dimension_numbers<[1], [0], [0], [1], [0, 0, 1, 1], [], []>} : vector<8x128xbf16>, vector<128x128xbf16>, vector<8x128xf32> -> vector<8x128xf32>
    %634 = arith.addf %633, %11 : vector<8x128xf32>
    %635 = arith.index_cast %c5_i32_155 : i32 to index
    %c0_163 = arith.constant 0 : index
    %c0_164 = arith.constant 0 : index
    %636 = vector.load %arg9[%635, %c0_163, %c0_164] : memref<8x8x128xf32, #tpu.memory_space<vmem>>, vector<1x8x128xf32>
    %637 = vector.shape_cast %636 : vector<1x8x128xf32> to vector<8x128xf32>
    %638 = vector.shape_cast %634 : vector<8x128xf32> to vector<1x8x128xf32>
    tpu.vector_store %arg9[%635, %c0_163, %c0_164], %638 {strides = array<i32>} : memref<8x8x128xf32, #tpu.memory_space<vmem>>, vector<1x8x128xf32>,
    %cst_165 = arith.constant -1.000000e+30 : f32
    %639 = vector.broadcast %cst_165 : f32 to vector<8x128xf32>
    %640 = arith.select %15, %634, %639 : vector<8x128xi1>, vector<8x128xf32>
    %cst_166 = arith.constant dense<0xFF800000> : vector<8xf32>
    %641 = vector.multi_reduction <maximumf>, %640, %cst_166 [1] : vector<8x128xf32> to vector<8xf32>
    %642 = vector.shape_cast %641 : vector<8xf32> to vector<8x1xf32>
    %643 = vector.broadcast %642 : vector<8x1xf32> to vector<8x128xf32>
    %644 = arith.cmpf oeq, %640, %643 : vector<8x128xf32>
    %c128_i32_167 = arith.constant 128 : i32
    %645 = vector.broadcast %c128_i32_167 : i32 to vector<8x128xi32>
    %646 = arith.select %644, %12, %645 : vector<8x128xi1>, vector<8x128xi32>
    %cst_168 = arith.constant dense<2147483647> : vector<8xi32>
    %647 = vector.multi_reduction <minsi>, %646, %cst_168 [1] : vector<8x128xi32> to vector<8xi32>
    %648 = vector.shape_cast %647 : vector<8xi32> to vector<8x1xi32>
    %649 = arith.index_cast %c5_i32_155 : i32 to index
    %650 = memref.load %arg1[%649] : memref<8xi32, #tpu.memory_space<smem>>
    %c128_i32_169 = arith.constant 128 : i32
    %651 = vector.broadcast %c128_i32_169 : i32 to vector<8x1xi32>
    %c0_i32_170 = arith.constant 0 : i32
    %652 = vector.broadcast %c0_i32_170 : i32 to vector<8x1xi32>
    %653 = arith.cmpi eq, %13, %652 : vector<8x1xi32>
    %c2_i32_171 = arith.constant 2 : i32
    %654 = arith.muli %c5_i32_155, %c2_i32_171 : i32
    %c0_i32_172 = arith.constant 0 : i32
    %655 = arith.addi %654, %c0_i32_172 : i32
    %656 = arith.index_cast %655 : i32 to index
    %657 = memref.load %arg0[%656] : memref<16xi32, #tpu.memory_space<smem>>
    %658 = vector.broadcast %657 : i32 to vector<8x1xi32>
    %659 = arith.select %653, %658, %651 : vector<8x1xi1>, vector<8x1xi32>
    %c1_i32_173 = arith.constant 1 : i32
    %660 = vector.broadcast %c1_i32_173 : i32 to vector<8x1xi32>
    %661 = arith.cmpi eq, %13, %660 : vector<8x1xi32>
    %c2_i32_174 = arith.constant 2 : i32
    %662 = arith.muli %c5_i32_155, %c2_i32_174 : i32
    %c1_i32_175 = arith.constant 1 : i32
    %663 = arith.addi %662, %c1_i32_175 : i32
    %664 = arith.index_cast %663 : i32 to index
    %665 = memref.load %arg0[%664] : memref<16xi32, #tpu.memory_space<smem>>
    %666 = vector.broadcast %665 : i32 to vector<8x1xi32>
    %667 = arith.select %661, %666, %659 : vector<8x1xi1>, vector<8x1xi32>
    %668 = vector.broadcast %650 : i32 to vector<8x1xi32>
    %669 = arith.muli %668, %667 : vector<8x1xi32>
    %c1_i32_176 = arith.constant 1 : i32
    %670 = arith.subi %c1_i32_176, %650 : i32
    %671 = vector.broadcast %670 : i32 to vector<8x1xi32>
    %672 = arith.muli %671, %648 : vector<8x1xi32>
    %673 = arith.addi %669, %672 : vector<8x1xi32>
    %c6_i32_177 = arith.constant 6 : i32
    %674 = vector.broadcast %673 : vector<8x1xi32> to vector<8x128xi32>
    %675 = arith.cmpi eq, %12, %674 : vector<8x128xi32>
    %cst_178 = arith.constant 1.000000e+00 : f32
    %cst_179 = arith.constant 0.000000e+00 : f32
    %676 = vector.broadcast %cst_178 : f32 to vector<8x128xf32>
    %677 = vector.broadcast %cst_179 : f32 to vector<8x128xf32>
    %678 = arith.select %675, %676, %677 : vector<8x128xi1>, vector<8x128xf32>
    %679 = arith.truncf %678 : vector<8x128xf32> to vector<8x128xbf16>
    %680 = arith.truncf %631 : vector<8x128xf32> to vector<8x128xbf16>
    %681 = tpu.concatenate %679, %680 in 1 : vector<8x128xbf16>, vector<8x128xbf16> -> vector<8x256xbf16>
    %cst_180 = arith.constant dense<0.000000e+00> : vector<8x512xf32>
    %682 = tpu.matmul %681, %1, %cst_180 {dimension_numbers = #tpu.dot_dimension_numbers<[1], [0], [0], [1], [0, 0, 1, 1], [], []>} : vector<8x256xbf16>, vector<256x512xbf16>, vector<8x512xf32> -> vector<8x512xf32>
    %683 = arith.addf %682, %8 : vector<8x512xf32>
    %684 = vector.extract_strided_slice %683 {offsets = [0, 0], sizes = [8, 128], strides = [1, 1]} : vector<8x512xf32> to vector<8x128xf32>
    %685 = arith.negf %684 : vector<8x128xf32>
    %686 = math.exp %685 : vector<8x128xf32>
    %cst_181 = arith.constant 1.000000e+00 : f32
    %687 = vector.broadcast %cst_181 : f32 to vector<8x128xf32>
    %688 = arith.addf %687, %686 : vector<8x128xf32>
    %689 = arith.divf %687, %688 : vector<8x128xf32>
    %690 = vector.extract_strided_slice %683 {offsets = [0, 128], sizes = [8, 128], strides = [1, 1]} : vector<8x512xf32> to vector<8x128xf32>
    %691 = arith.negf %690 : vector<8x128xf32>
    %692 = math.exp %691 : vector<8x128xf32>
    %cst_182 = arith.constant 1.000000e+00 : f32
    %693 = vector.broadcast %cst_182 : f32 to vector<8x128xf32>
    %694 = arith.addf %693, %692 : vector<8x128xf32>
    %695 = arith.divf %693, %694 : vector<8x128xf32>
    %696 = vector.extract_strided_slice %683 {offsets = [0, 256], sizes = [8, 128], strides = [1, 1]} : vector<8x512xf32> to vector<8x128xf32>
    %697 = math.tanh %696 : vector<8x128xf32>
    %698 = vector.extract_strided_slice %683 {offsets = [0, 384], sizes = [8, 128], strides = [1, 1]} : vector<8x512xf32> to vector<8x128xf32>
    %699 = arith.negf %698 : vector<8x128xf32>
    %700 = math.exp %699 : vector<8x128xf32>
    %cst_183 = arith.constant 1.000000e+00 : f32
    %701 = vector.broadcast %cst_183 : f32 to vector<8x128xf32>
    %702 = arith.addf %701, %700 : vector<8x128xf32>
    %703 = arith.divf %701, %702 : vector<8x128xf32>
    %704 = arith.mulf %695, %629 : vector<8x128xf32>
    %705 = arith.mulf %689, %697 : vector<8x128xf32>
    %706 = arith.addf %704, %705 : vector<8x128xf32>
    %707 = math.tanh %706 : vector<8x128xf32>
    %708 = arith.mulf %703, %707 : vector<8x128xf32>
    %709 = arith.truncf %708 : vector<8x128xf32> to vector<8x128xbf16>
    %cst_184 = arith.constant dense<0.000000e+00> : vector<8x128xf32>
    %710 = tpu.matmul %709, %2, %cst_184 {dimension_numbers = #tpu.dot_dimension_numbers<[1], [0], [0], [1], [0, 0, 1, 1], [], []>} : vector<8x128xbf16>, vector<128x128xbf16>, vector<8x128xf32> -> vector<8x128xf32>
    %711 = arith.addf %710, %11 : vector<8x128xf32>
    %712 = arith.index_cast %c6_i32_177 : i32 to index
    %c0_185 = arith.constant 0 : index
    %c0_186 = arith.constant 0 : index
    %713 = vector.load %arg9[%712, %c0_185, %c0_186] : memref<8x8x128xf32, #tpu.memory_space<vmem>>, vector<1x8x128xf32>
    %714 = vector.shape_cast %713 : vector<1x8x128xf32> to vector<8x128xf32>
    %715 = vector.shape_cast %711 : vector<8x128xf32> to vector<1x8x128xf32>
    tpu.vector_store %arg9[%712, %c0_185, %c0_186], %715 {strides = array<i32>} : memref<8x8x128xf32, #tpu.memory_space<vmem>>, vector<1x8x128xf32>,
    %cst_187 = arith.constant -1.000000e+30 : f32
    %716 = vector.broadcast %cst_187 : f32 to vector<8x128xf32>
    %717 = arith.select %15, %711, %716 : vector<8x128xi1>, vector<8x128xf32>
    %cst_188 = arith.constant dense<0xFF800000> : vector<8xf32>
    %718 = vector.multi_reduction <maximumf>, %717, %cst_188 [1] : vector<8x128xf32> to vector<8xf32>
    %719 = vector.shape_cast %718 : vector<8xf32> to vector<8x1xf32>
    %720 = vector.broadcast %719 : vector<8x1xf32> to vector<8x128xf32>
    %721 = arith.cmpf oeq, %717, %720 : vector<8x128xf32>
    %c128_i32_189 = arith.constant 128 : i32
    %722 = vector.broadcast %c128_i32_189 : i32 to vector<8x128xi32>
    %723 = arith.select %721, %12, %722 : vector<8x128xi1>, vector<8x128xi32>
    %cst_190 = arith.constant dense<2147483647> : vector<8xi32>
    %724 = vector.multi_reduction <minsi>, %723, %cst_190 [1] : vector<8x128xi32> to vector<8xi32>
    %725 = vector.shape_cast %724 : vector<8xi32> to vector<8x1xi32>
    %726 = arith.index_cast %c6_i32_177 : i32 to index
    %727 = memref.load %arg1[%726] : memref<8xi32, #tpu.memory_space<smem>>
    %c128_i32_191 = arith.constant 128 : i32
    %728 = vector.broadcast %c128_i32_191 : i32 to vector<8x1xi32>
    %c0_i32_192 = arith.constant 0 : i32
    %729 = vector.broadcast %c0_i32_192 : i32 to vector<8x1xi32>
    %730 = arith.cmpi eq, %13, %729 : vector<8x1xi32>
    %c2_i32_193 = arith.constant 2 : i32
    %731 = arith.muli %c6_i32_177, %c2_i32_193 : i32
    %c0_i32_194 = arith.constant 0 : i32
    %732 = arith.addi %731, %c0_i32_194 : i32
    %733 = arith.index_cast %732 : i32 to index
    %734 = memref.load %arg0[%733] : memref<16xi32, #tpu.memory_space<smem>>
    %735 = vector.broadcast %734 : i32 to vector<8x1xi32>
    %736 = arith.select %730, %735, %728 : vector<8x1xi1>, vector<8x1xi32>
    %c1_i32_195 = arith.constant 1 : i32
    %737 = vector.broadcast %c1_i32_195 : i32 to vector<8x1xi32>
    %738 = arith.cmpi eq, %13, %737 : vector<8x1xi32>
    %c2_i32_196 = arith.constant 2 : i32
    %739 = arith.muli %c6_i32_177, %c2_i32_196 : i32
    %c1_i32_197 = arith.constant 1 : i32
    %740 = arith.addi %739, %c1_i32_197 : i32
    %741 = arith.index_cast %740 : i32 to index
    %742 = memref.load %arg0[%741] : memref<16xi32, #tpu.memory_space<smem>>
    %743 = vector.broadcast %742 : i32 to vector<8x1xi32>
    %744 = arith.select %738, %743, %736 : vector<8x1xi1>, vector<8x1xi32>
    %745 = vector.broadcast %727 : i32 to vector<8x1xi32>
    %746 = arith.muli %745, %744 : vector<8x1xi32>
    %c1_i32_198 = arith.constant 1 : i32
    %747 = arith.subi %c1_i32_198, %727 : i32
    %748 = vector.broadcast %747 : i32 to vector<8x1xi32>
    %749 = arith.muli %748, %725 : vector<8x1xi32>
    %750 = arith.addi %746, %749 : vector<8x1xi32>
    %c7_i32_199 = arith.constant 7 : i32
    %751 = vector.broadcast %750 : vector<8x1xi32> to vector<8x128xi32>
    %752 = arith.cmpi eq, %12, %751 : vector<8x128xi32>
    %cst_200 = arith.constant 1.000000e+00 : f32
    %cst_201 = arith.constant 0.000000e+00 : f32
    %753 = vector.broadcast %cst_200 : f32 to vector<8x128xf32>
    %754 = vector.broadcast %cst_201 : f32 to vector<8x128xf32>
    %755 = arith.select %752, %753, %754 : vector<8x128xi1>, vector<8x128xf32>
    %756 = arith.truncf %755 : vector<8x128xf32> to vector<8x128xbf16>
    %757 = arith.truncf %708 : vector<8x128xf32> to vector<8x128xbf16>
    %758 = tpu.concatenate %756, %757 in 1 : vector<8x128xbf16>, vector<8x128xbf16> -> vector<8x256xbf16>
    %cst_202 = arith.constant dense<0.000000e+00> : vector<8x512xf32>
    %759 = tpu.matmul %758, %1, %cst_202 {dimension_numbers = #tpu.dot_dimension_numbers<[1], [0], [0], [1], [0, 0, 1, 1], [], []>} : vector<8x256xbf16>, vector<256x512xbf16>, vector<8x512xf32> -> vector<8x512xf32>
    %760 = arith.addf %759, %8 : vector<8x512xf32>
    %761 = vector.extract_strided_slice %760 {offsets = [0, 0], sizes = [8, 128], strides = [1, 1]} : vector<8x512xf32> to vector<8x128xf32>
    %762 = arith.negf %761 : vector<8x128xf32>
    %763 = math.exp %762 : vector<8x128xf32>
    %cst_203 = arith.constant 1.000000e+00 : f32
    %764 = vector.broadcast %cst_203 : f32 to vector<8x128xf32>
    %765 = arith.addf %764, %763 : vector<8x128xf32>
    %766 = arith.divf %764, %765 : vector<8x128xf32>
    %767 = vector.extract_strided_slice %760 {offsets = [0, 128], sizes = [8, 128], strides = [1, 1]} : vector<8x512xf32> to vector<8x128xf32>
    %768 = arith.negf %767 : vector<8x128xf32>
    %769 = math.exp %768 : vector<8x128xf32>
    %cst_204 = arith.constant 1.000000e+00 : f32
    %770 = vector.broadcast %cst_204 : f32 to vector<8x128xf32>
    %771 = arith.addf %770, %769 : vector<8x128xf32>
    %772 = arith.divf %770, %771 : vector<8x128xf32>
    %773 = vector.extract_strided_slice %760 {offsets = [0, 256], sizes = [8, 128], strides = [1, 1]} : vector<8x512xf32> to vector<8x128xf32>
    %774 = math.tanh %773 : vector<8x128xf32>
    %775 = vector.extract_strided_slice %760 {offsets = [0, 384], sizes = [8, 128], strides = [1, 1]} : vector<8x512xf32> to vector<8x128xf32>
    %776 = arith.negf %775 : vector<8x128xf32>
    %777 = math.exp %776 : vector<8x128xf32>
    %cst_205 = arith.constant 1.000000e+00 : f32
    %778 = vector.broadcast %cst_205 : f32 to vector<8x128xf32>
    %779 = arith.addf %778, %777 : vector<8x128xf32>
    %780 = arith.divf %778, %779 : vector<8x128xf32>
    %781 = arith.mulf %772, %706 : vector<8x128xf32>
    %782 = arith.mulf %766, %774 : vector<8x128xf32>
    %783 = arith.addf %781, %782 : vector<8x128xf32>
    %784 = math.tanh %783 : vector<8x128xf32>
    %785 = arith.mulf %780, %784 : vector<8x128xf32>
    %786 = arith.truncf %785 : vector<8x128xf32> to vector<8x128xbf16>
    %cst_206 = arith.constant dense<0.000000e+00> : vector<8x128xf32>
    %787 = tpu.matmul %786, %2, %cst_206 {dimension_numbers = #tpu.dot_dimension_numbers<[1], [0], [0], [1], [0, 0, 1, 1], [], []>} : vector<8x128xbf16>, vector<128x128xbf16>, vector<8x128xf32> -> vector<8x128xf32>
    %788 = arith.addf %787, %11 : vector<8x128xf32>
    %789 = arith.index_cast %c7_i32_199 : i32 to index
    %c0_207 = arith.constant 0 : index
    %c0_208 = arith.constant 0 : index
    %790 = vector.load %arg9[%789, %c0_207, %c0_208] : memref<8x8x128xf32, #tpu.memory_space<vmem>>, vector<1x8x128xf32>
    %791 = vector.shape_cast %790 : vector<1x8x128xf32> to vector<8x128xf32>
    %792 = vector.shape_cast %788 : vector<8x128xf32> to vector<1x8x128xf32>
    tpu.vector_store %arg9[%789, %c0_207, %c0_208], %792 {strides = array<i32>} : memref<8x8x128xf32, #tpu.memory_space<vmem>>, vector<1x8x128xf32>,
    %cst_209 = arith.constant -1.000000e+30 : f32
    %793 = vector.broadcast %cst_209 : f32 to vector<8x128xf32>
    %794 = arith.select %15, %788, %793 : vector<8x128xi1>, vector<8x128xf32>
    %cst_210 = arith.constant dense<0xFF800000> : vector<8xf32>
    %795 = vector.multi_reduction <maximumf>, %794, %cst_210 [1] : vector<8x128xf32> to vector<8xf32>
    %796 = vector.shape_cast %795 : vector<8xf32> to vector<8x1xf32>
    %797 = vector.broadcast %796 : vector<8x1xf32> to vector<8x128xf32>
    %798 = arith.cmpf oeq, %794, %797 : vector<8x128xf32>
    %c128_i32_211 = arith.constant 128 : i32
    %799 = vector.broadcast %c128_i32_211 : i32 to vector<8x128xi32>
    %800 = arith.select %798, %12, %799 : vector<8x128xi1>, vector<8x128xi32>
    %cst_212 = arith.constant dense<2147483647> : vector<8xi32>
    %801 = vector.multi_reduction <minsi>, %800, %cst_212 [1] : vector<8x128xi32> to vector<8xi32>
    %802 = vector.shape_cast %801 : vector<8xi32> to vector<8x1xi32>
    %803 = arith.index_cast %c7_i32_199 : i32 to index
    %804 = memref.load %arg1[%803] : memref<8xi32, #tpu.memory_space<smem>>
    %c128_i32_213 = arith.constant 128 : i32
    %805 = vector.broadcast %c128_i32_213 : i32 to vector<8x1xi32>
    %c0_i32_214 = arith.constant 0 : i32
    %806 = vector.broadcast %c0_i32_214 : i32 to vector<8x1xi32>
    %807 = arith.cmpi eq, %13, %806 : vector<8x1xi32>
    %c2_i32_215 = arith.constant 2 : i32
    %808 = arith.muli %c7_i32_199, %c2_i32_215 : i32
    %c0_i32_216 = arith.constant 0 : i32
    %809 = arith.addi %808, %c0_i32_216 : i32
    %810 = arith.index_cast %809 : i32 to index
    %811 = memref.load %arg0[%810] : memref<16xi32, #tpu.memory_space<smem>>
    %812 = vector.broadcast %811 : i32 to vector<8x1xi32>
    %813 = arith.select %807, %812, %805 : vector<8x1xi1>, vector<8x1xi32>
    %c1_i32_217 = arith.constant 1 : i32
    %814 = vector.broadcast %c1_i32_217 : i32 to vector<8x1xi32>
    %815 = arith.cmpi eq, %13, %814 : vector<8x1xi32>
    %c2_i32_218 = arith.constant 2 : i32
    %816 = arith.muli %c7_i32_199, %c2_i32_218 : i32
    %c1_i32_219 = arith.constant 1 : i32
    %817 = arith.addi %816, %c1_i32_219 : i32
    %818 = arith.index_cast %817 : i32 to index
    %819 = memref.load %arg0[%818] : memref<16xi32, #tpu.memory_space<smem>>
    %820 = vector.broadcast %819 : i32 to vector<8x1xi32>
    %821 = arith.select %815, %820, %813 : vector<8x1xi1>, vector<8x1xi32>
    %822 = vector.broadcast %804 : i32 to vector<8x1xi32>
    %823 = arith.muli %822, %821 : vector<8x1xi32>
    %c1_i32_220 = arith.constant 1 : i32
    %824 = arith.subi %c1_i32_220, %804 : i32
    %825 = vector.broadcast %824 : i32 to vector<8x1xi32>
    %826 = arith.muli %825, %802 : vector<8x1xi32>
    %827 = arith.addi %823, %826 : vector<8x1xi32>
    %c7_i32_221 = arith.constant 7 : i32
    return
  }
}

</mosaic_0001>

<llo_original>
// kernel: seq2seq_forward.1
$region0: #{seq2seq_forward.1}
  #allocation0 [shape = 'u32[]', space=smem, size = 0x4, offset = 0x4, fixed_abs, tag = 'smem constant byte address 0x4 - core index']
  #allocation1 [shape = 'u32[144,128]{1,0:T(1,128)}', space=vmem, size = 0x12000, scoped, tag = 'internal scratch']
  %s0 = inlined_call_operand.vmem [shape: s32[16], index: 0, kind: input, shape index: {}]
  %s1 = inlined_call_operand.vmem [shape: s32[8], index: 1, kind: input, shape index: {}]
  %s2 = inlined_call_operand.vmem [shape: bf16[8,8,128], index: 2, kind: input, shape index: {}]
  %s3 = inlined_call_operand.vmem [shape: bf16[256,512], index: 3, kind: input, shape index: {}]
  %s4 = inlined_call_operand.vmem [shape: f32[1,512], index: 4, kind: input, shape index: {}]
  %s5 = inlined_call_operand.vmem [shape: bf16[256,512], index: 5, kind: input, shape index: {}]
  %s6 = inlined_call_operand.vmem [shape: f32[1,512], index: 6, kind: input, shape index: {}]
  %s7 = inlined_call_operand.vmem [shape: bf16[128,128], index: 7, kind: input, shape index: {}]
  %s8 = inlined_call_operand.vmem [shape: f32[1,128], index: 8, kind: input, shape index: {}]
  %s9 = inlined_call_operand.vmem [shape: f32[8,8,128], index: 9, kind: output, shape index: {}]
  %s10 = sld [smem:[#allocation0]]
  $region54: #{seq2seq_forward.1} parent=0
    _
  %s12 = ssub.s32 1, %s10
  %s13 = scalar_select 0, %s12, %s10
  $region1: #{seq2seq_forward.1} parent=0
    #allocation2 [shape = 'u8[512]{0}', space=smem, size = 0x200, scoped, tag = 'input window, operand 0, single buffered']
    #allocation3 [shape = 's32[1]{0}', space=sflag, size = 0x4, scoped, tag = 'scoped memory for seq2seq_forward.1']
    #allocation4 [shape = 'u8[512]{0}', space=smem, size = 0x200, scoped, tag = 'input window, operand 1, single buffered']
    #allocation5 [shape = 's32[1]{0}', space=sflag, size = 0x4, scoped, tag = 'scoped memory for seq2seq_forward.1']
    %14 = vsyncpa [#allocation3], 0
    %15 = vsyncpa [#allocation5], 0
    // Predicated region
    $region2: #{seq2seq_forward.1} parent=1 // pred_check
      _
    $region3: #{seq2seq_forward.1} parent=1 // pred_check_branch
      %17 = sbr.rel (0) target = $region5
    $region4: #{seq2seq_forward.1} parent=1 // pred_region
      %s19 = ssub.s32 16, 16
      %20 = vsyncadd [#allocation3], %s19
      %s22 = sshll.u32 %s0, 4
      %s23 = int_to_ptr.vmem [resolvable:$true] %s22
      %25 = dma.vmem_to_smem %s23, 16, [#allocation2], [#allocation3]
    $region5: #{seq2seq_forward.1} parent=1 // pred_fallthru
      _
    // Predicated region
    $region6: #{seq2seq_forward.1} parent=1 // pred_check
      _
    $region7: #{seq2seq_forward.1} parent=1 // pred_check_branch
      %27 = sbr.rel (0) target = $region9
    $region8: #{seq2seq_forward.1} parent=1 // pred_region
      %s29 = ssub.s32 16, 16
      %30 = vsyncadd [#allocation5], %s29
      %s32 = sshll.u32 %s1, 4
      %s33 = int_to_ptr.vmem [resolvable:$true] %s32
      %35 = dma.vmem_to_smem %s33, 16, [#allocation4], [#allocation5]
    $region9: #{seq2seq_forward.1} parent=1 // pred_fallthru
      _
    // Predicated region
    $region10: #{seq2seq_forward.1} parent=1 // pred_check
      _
    $region11: #{seq2seq_forward.1} parent=1 // pred_check_branch
      %37 = sbr.rel (0) target = $region13
    $region12: #{seq2seq_forward.1} parent=1 // pred_region
      _
    $region13: #{seq2seq_forward.1} parent=1 // pred_fallthru
      _
    // Predicated region
    $region14: #{seq2seq_forward.1} parent=1 // pred_check
      _
    $region15: #{seq2seq_forward.1} parent=1 // pred_check_branch
      %39 = sbr.rel (0) target = $region17
    $region16: #{seq2seq_forward.1} parent=1 // pred_region
      _
    $region17: #{seq2seq_forward.1} parent=1 // pred_fallthru
      _
    // Predicated region
    $region18: #{seq2seq_forward.1} parent=1 // pred_check
      _
    $region19: #{seq2seq_forward.1} parent=1 // pred_check_branch
      %41 = sbr.rel (0) target = $region21
    $region20: #{seq2seq_forward.1} parent=1 // pred_region
      _
    $region21: #{seq2seq_forward.1} parent=1 // pred_fallthru
      _
    // Predicated region
    $region22: #{seq2seq_forward.1} parent=1 // pred_check
      _
    $region23: #{seq2seq_forward.1} parent=1 // pred_check_branch
      %43 = sbr.rel (0) target = $region25
    $region24: #{seq2seq_forward.1} parent=1 // pred_region
      _
    $region25: #{seq2seq_forward.1} parent=1 // pred_fallthru
      _
    // Predicated region
    $region26: #{seq2seq_forward.1} parent=1 // pred_check
      _
    $region27: #{seq2seq_forward.1} parent=1 // pred_check_branch
      %45 = sbr.rel (0) target = $region29
    $region28: #{seq2seq_forward.1} parent=1 // pred_region
      _
    $region29: #{seq2seq_forward.1} parent=1 // pred_fallthru
      _
    // Predicated region
    $region30: #{seq2seq_forward.1} parent=1 // pred_check
      _
    $region31: #{seq2seq_forward.1} parent=1 // pred_check_branch
      %47 = sbr.rel (0) target = $region33
    $region32: #{seq2seq_forward.1} parent=1 // pred_region
      _
    $region33: #{seq2seq_forward.1} parent=1 // pred_fallthru
      _
    // Predicated region
    $region34: #{seq2seq_forward.1} parent=1 // pred_check
      _
    $region35: #{seq2seq_forward.1} parent=1 // pred_check_branch
      %49 = sbr.rel (0) target = $region37
    $region36: #{seq2seq_forward.1} parent=1 // pred_region
      _
    $region37: #{seq2seq_forward.1} parent=1 // pred_fallthru
      _
    // Predicated region
    $region38: #{seq2seq_forward.1} parent=1 // pred_check
      _
    $region39: #{seq2seq_forward.1} parent=1 // pred_check_branch
      %51 = sbr.rel (0) target = $region41
    $region40: #{seq2seq_forward.1} parent=1 // pred_region
      %52 = dma.done [#allocation3], 16
    $region41: #{seq2seq_forward.1} parent=1 // pred_fallthru
      _
    // Predicated region
    $region42: #{seq2seq_forward.1} parent=1 // pred_check
      _
    $region43: #{seq2seq_forward.1} parent=1 // pred_check_branch
      %54 = sbr.rel (0) target = $region45
    $region44: #{seq2seq_forward.1} parent=1 // pred_region
      %55 = dma.done [#allocation5], 16
    $region45: #{seq2seq_forward.1} parent=1 // pred_fallthru
      _
    %56 = sfence
    %v58 = vld [vmem:[%s3] sm:$0xff]
    %v59 = vld [vmem:[%s3 + $0x8] sm:$0xff]
    %v60 = vld [vmem:[%s3 + $0x10] sm:$0xff]
    %v61 = vld [vmem:[%s3 + $0x18] sm:$0xff]
    %v62 = vld [vmem:[%s3 + $0x20] sm:$0xff]
    %v63 = vld [vmem:[%s3 + $0x28] sm:$0xff]
    %v64 = vld [vmem:[%s3 + $0x30] sm:$0xff]
    %v65 = vld [vmem:[%s3 + $0x38] sm:$0xff]
    %v66 = vld [vmem:[%s3 + $0x40] sm:$0xff]
    %v67 = vld [vmem:[%s3 + $0x48] sm:$0xff]
    %v68 = vld [vmem:[%s3 + $0x50] sm:$0xff]
    %v69 = vld [vmem:[%s3 + $0x58] sm:$0xff]
    %v70 = vld [vmem:[%s3 + $0x60] sm:$0xff]
    %v71 = vld [vmem:[%s3 + $0x68] sm:$0xff]
    %v72 = vld [vmem:[%s3 + $0x70] sm:$0xff]
    %v73 = vld [vmem:[%s3 + $0x78] sm:$0xff]
    %v74 = vld [vmem:[%s3 + $0x80] sm:$0xff]
    %v75 = vld [vmem:[%s3 + $0x88] sm:$0xff]
    %v76 = vld [vmem:[%s3 + $0x90] sm:$0xff]
    %v77 = vld [vmem:[%s3 + $0x98] sm:$0xff]
    %v78 = vld [vmem:[%s3 + $0xa0] sm:$0xff]
    %v79 = vld [vmem:[%s3 + $0xa8] sm:$0xff]
    %v80 = vld [vmem:[%s3 + $0xb0] sm:$0xff]
    %v81 = vld [vmem:[%s3 + $0xb8] sm:$0xff]
    %v82 = vld [vmem:[%s3 + $0xc0] sm:$0xff]
    %v83 = vld [vmem:[%s3 + $0xc8] sm:$0xff]
    %v84 = vld [vmem:[%s3 + $0xd0] sm:$0xff]
    %v85 = vld [vmem:[%s3 + $0xd8] sm:$0xff]
    %v86 = vld [vmem:[%s3 + $0xe0] sm:$0xff]
    %v87 = vld [vmem:[%s3 + $0xe8] sm:$0xff]
    %v88 = vld [vmem:[%s3 + $0xf0] sm:$0xff]
    %v89 = vld [vmem:[%s3 + $0xf8] sm:$0xff]
    %v90 = vld [vmem:[%s3 + $0x100] sm:$0xff]
    %v91 = vld [vmem:[%s3 + $0x108] sm:$0xff]
    %v92 = vld [vmem:[%s3 + $0x110] sm:$0xff]
    %v93 = vld [vmem:[%s3 + $0x118] sm:$0xff]
    %v94 = vld [vmem:[%s3 + $0x120] sm:$0xff]
    %v95 = vld [vmem:[%s3 + $0x128] sm:$0xff]
    %v96 = vld [vmem:[%s3 + $0x130] sm:$0xff]
    %v97 = vld [vmem:[%s3 + $0x138] sm:$0xff]
    %v98 = vld [vmem:[%s3 + $0x140] sm:$0xff]
    %v99 = vld [vmem:[%s3 + $0x148] sm:$0xff]
    %v100 = vld [vmem:[%s3 + $0x150] sm:$0xff]
    %v101 = vld [vmem:[%s3 + $0x158] sm:$0xff]
    %v102 = vld [vmem:[%s3 + $0x160] sm:$0xff]
    %v103 = vld [vmem:[%s3 + $0x168] sm:$0xff]
    %v104 = vld [vmem:[%s3 + $0x170] sm:$0xff]
    %v105 = vld [vmem:[%s3 + $0x178] sm:$0xff]
    %v106 = vld [vmem:[%s3 + $0x180] sm:$0xff]
    %v107 = vld [vmem:[%s3 + $0x188] sm:$0xff]
    %v108 = vld [vmem:[%s3 + $0x190] sm:$0xff]
    %v109 = vld [vmem:[%s3 + $0x198] sm:$0xff]
    %v110 = vld [vmem:[%s3 + $0x1a0] sm:$0xff]
    %v111 = vld [vmem:[%s3 + $0x1a8] sm:$0xff]
    %v112 = vld [vmem:[%s3 + $0x1b0] sm:$0xff]
    %v113 = vld [vmem:[%s3 + $0x1b8] sm:$0xff]
    %v114 = vld [vmem:[%s3 + $0x1c0] sm:$0xff]
    %v115 = vld [vmem:[%s3 + $0x1c8] sm:$0xff]
    %v116 = vld [vmem:[%s3 + $0x1d0] sm:$0xff]
    %v117 = vld [vmem:[%s3 + $0x1d8] sm:$0xff]
    %v118 = vld [vmem:[%s3 + $0x1e0] sm:$0xff]
    %v119 = vld [vmem:[%s3 + $0x1e8] sm:$0xff]
    %v120 = vld [vmem:[%s3 + $0x1f0] sm:$0xff]
    %v121 = vld [vmem:[%s3 + $0x1f8] sm:$0xff]
    %v122 = vld [vmem:[%s5] sm:$0xff]
    %v123 = vld [vmem:[%s5 + $0x8] sm:$0xff]
    %v124 = vld [vmem:[%s5 + $0x10] sm:$0xff]
    %v125 = vld [vmem:[%s5 + $0x18] sm:$0xff]
    %v126 = vld [vmem:[%s5 + $0x20] sm:$0xff]
    %v127 = vld [vmem:[%s5 + $0x28] sm:$0xff]
    %v128 = vld [vmem:[%s5 + $0x30] sm:$0xff]
    %v129 = vld [vmem:[%s5 + $0x38] sm:$0xff]
    %v130 = vld [vmem:[%s5 + $0x40] sm:$0xff]
    %v131 = vld [vmem:[%s5 + $0x48] sm:$0xff]
    %v132 = vld [vmem:[%s5 + $0x50] sm:$0xff]
    %v133 = vld [vmem:[%s5 + $0x58] sm:$0xff]
    %v134 = vld [vmem:[%s5 + $0x60] sm:$0xff]
    %v135 = vld [vmem:[%s5 + $0x68] sm:$0xff]
    %v136 = vld [vmem:[%s5 + $0x70] sm:$0xff]
    %v137 = vld [vmem:[%s5 + $0x78] sm:$0xff]
    %v138 = vld [vmem:[%s5 + $0x80] sm:$0xff]
    %v139 = vld [vmem:[%s5 + $0x88] sm:$0xff]
    %v140 = vld [vmem:[%s5 + $0x90] sm:$0xff]
    %v141 = vld [vmem:[%s5 + $0x98] sm:$0xff]
    %v142 = vld [vmem:[%s5 + $0xa0] sm:$0xff]
    %v143 = vld [vmem:[%s5 + $0xa8] sm:$0xff]
    %v144 = vld [vmem:[%s5 + $0xb0] sm:$0xff]
    %v145 = vld [vmem:[%s5 + $0xb8] sm:$0xff]
    %v146 = vld [vmem:[%s5 + $0xc0] sm:$0xff]
    %v147 = vld [vmem:[%s5 + $0xc8] sm:$0xff]
    %v148 = vld [vmem:[%s5 + $0xd0] sm:$0xff]
    %v149 = vld [vmem:[%s5 + $0xd8] sm:$0xff]
    %v150 = vld [vmem:[%s5 + $0xe0] sm:$0xff]
    %v151 = vld [vmem:[%s5 + $0xe8] sm:$0xff]
    %v152 = vld [vmem:[%s5 + $0xf0] sm:$0xff]
    %v153 = vld [vmem:[%s5 + $0xf8] sm:$0xff]
    %v154 = vld [vmem:[%s5 + $0x100] sm:$0xff]
    %v155 = vld [vmem:[%s5 + $0x108] sm:$0xff]
    %v156 = vld [vmem:[%s5 + $0x110] sm:$0xff]
    %v157 = vld [vmem:[%s5 + $0x118] sm:$0xff]
    %v158 = vld [vmem:[%s5 + $0x120] sm:$0xff]
    %v159 = vld [vmem:[%s5 + $0x128] sm:$0xff]
    %v160 = vld [vmem:[%s5 + $0x130] sm:$0xff]
    %v161 = vld [vmem:[%s5 + $0x138] sm:$0xff]
    %v162 = vld [vmem:[%s5 + $0x140] sm:$0xff]
    %v163 = vld [vmem:[%s5 + $0x148] sm:$0xff]
    %v164 = vld [vmem:[%s5 + $0x150] sm:$0xff]
    %v165 = vld [vmem:[%s5 + $0x158] sm:$0xff]
    %v166 = vld [vmem:[%s5 + $0x160] sm:$0xff]
    %v167 = vld [vmem:[%s5 + $0x168] sm:$0xff]
    %v168 = vld [vmem:[%s5 + $0x170] sm:$0xff]
    %v169 = vld [vmem:[%s5 + $0x178] sm:$0xff]
    %v170 = vld [vmem:[%s5 + $0x180] sm:$0xff]
    %v171 = vld [vmem:[%s5 + $0x188] sm:$0xff]
    %v172 = vld [vmem:[%s5 + $0x190] sm:$0xff]
    %v173 = vld [vmem:[%s5 + $0x198] sm:$0xff]
    %v174 = vld [vmem:[%s5 + $0x1a0] sm:$0xff]
    %v175 = vld [vmem:[%s5 + $0x1a8] sm:$0xff]
    %v176 = vld [vmem:[%s5 + $0x1b0] sm:$0xff]
    %v177 = vld [vmem:[%s5 + $0x1b8] sm:$0xff]
    %v178 = vld [vmem:[%s5 + $0x1c0] sm:$0xff]
    %v179 = vld [vmem:[%s5 + $0x1c8] sm:$0xff]
    %v180 = vld [vmem:[%s5 + $0x1d0] sm:$0xff]
    %v181 = vld [vmem:[%s5 + $0x1d8] sm:$0xff]
    %v182 = vld [vmem:[%s5 + $0x1e0] sm:$0xff]
    %v183 = vld [vmem:[%s5 + $0x1e8] sm:$0xff]
    %v184 = vld [vmem:[%s5 + $0x1f0] sm:$0xff]
    %v185 = vld [vmem:[%s5 + $0x1f8] sm:$0xff]
    %v186 = vld [vmem:[%s7] sm:$0xf]
    %v187 = vld [vmem:[%s7 + $0x4] sm:$0xf]
    %v188 = vld [vmem:[%s7 + $0x8] sm:$0xf]
    %v189 = vld [vmem:[%s7 + $0xc] sm:$0xf]
    %v190 = vld [vmem:[%s7 + $0x10] sm:$0xf]
    %v191 = vld [vmem:[%s7 + $0x14] sm:$0xf]
    %v192 = vld [vmem:[%s7 + $0x18] sm:$0xf]
    %v193 = vld [vmem:[%s7 + $0x1c] sm:$0xf]
    %v194 = vld [vmem:[%s7 + $0x20] sm:$0xf]
    %v195 = vld [vmem:[%s7 + $0x24] sm:$0xf]
    %v196 = vld [vmem:[%s7 + $0x28] sm:$0xf]
    %v197 = vld [vmem:[%s7 + $0x2c] sm:$0xf]
    %v198 = vld [vmem:[%s7 + $0x30] sm:$0xf]
    %v199 = vld [vmem:[%s7 + $0x34] sm:$0xf]
    %v200 = vld [vmem:[%s7 + $0x38] sm:$0xf]
    %v201 = vld [vmem:[%s7 + $0x3c] sm:$0xf]
    %v202 = vld [vmem:[%s4] sm:$0xf]
    %v204 = vlaneseq
    %v205 = vshrl.u32 %v204, 7
    %v206 = vsub.s32 0, %v205
    %v207 = vrot.slane %v202, %v206
    %v208 = vlaneseq
    %v209 = vshrl.u32 %v208, 7
    %v210 = vsub.s32 1, %v209
    %v211 = vrot.slane %v202, %v210
    %v212 = vlaneseq
    %v213 = vshrl.u32 %v212, 7
    %v214 = vsub.s32 2, %v213
    %v215 = vrot.slane %v202, %v214
    %v216 = vlaneseq
    %v217 = vshrl.u32 %v216, 7
    %v218 = vsub.s32 3, %v217
    %v219 = vrot.slane %v202, %v218
    %v224 = vld [vmem:[%s6] sm:$0xf]
    %v226 = vlaneseq
    %v227 = vshrl.u32 %v226, 7
    %v228 = vsub.s32 0, %v227
    %v229 = vrot.slane %v224, %v228
    %v230 = vlaneseq
    %v231 = vshrl.u32 %v230, 7
    %v232 = vsub.s32 1, %v231
    %v233 = vrot.slane %v224, %v232
    %v234 = vlaneseq
    %v235 = vshrl.u32 %v234, 7
    %v236 = vsub.s32 2, %v235
    %v237 = vrot.slane %v224, %v236
    %v238 = vlaneseq
    %v239 = vshrl.u32 %v238, 7
    %v240 = vsub.s32 3, %v239
    %v241 = vrot.slane %v224, %v240
    %v246 = vld [vmem:[%s8] sm:$0x1]
    %v248 = vlaneseq
    %v249 = vshrl.u32 %v248, 7
    %v250 = vsub.s32 0, %v249
    %v251 = vrot.slane %v246, %v250
    %v253 = vlaneseq
    %v254 = vand.u32 %v253, 127
    %v255 = vlaneseq
    %v256 = vshrl.u32 %v255, 7
    %vm257 = vcmp.lt.s32.totalorder %v254, 48
    %v258 = vld [vmem:[%s2] sm:$0xf]
    %v323 = vunpack.c.l.b16 %v58
    %v324 = vunpack.c.h.b16 %v58
    %v325 = vunpack.c.l.b16 %v59
    %v326 = vunpack.c.h.b16 %v59
    %v327 = vunpack.c.l.b16 %v60
    %v328 = vunpack.c.h.b16 %v60
    %v329 = vunpack.c.l.b16 %v61
    %v330 = vunpack.c.h.b16 %v61
    %v331 = vunpack.c.l.b16 %v62
    %v332 = vunpack.c.h.b16 %v62
    %v333 = vunpack.c.l.b16 %v63
    %v334 = vunpack.c.h.b16 %v63
    %v335 = vunpack.c.l.b16 %v64
    %v336 = vunpack.c.h.b16 %v64
    %v337 = vunpack.c.l.b16 %v65
    %v338 = vunpack.c.h.b16 %v65
    %v339 = vunpack.c.l.b16 %v66
    %v340 = vunpack.c.h.b16 %v66
    %v341 = vunpack.c.l.b16 %v67
    %v342 = vunpack.c.h.b16 %v67
    %v343 = vunpack.c.l.b16 %v68
    %v344 = vunpack.c.h.b16 %v68
    %v345 = vunpack.c.l.b16 %v69
    %v346 = vunpack.c.h.b16 %v69
    %v347 = vunpack.c.l.b16 %v70
    %v348 = vunpack.c.h.b16 %v70
    %v349 = vunpack.c.l.b16 %v71
    %v350 = vunpack.c.h.b16 %v71
    %v351 = vunpack.c.l.b16 %v72
    %v352 = vunpack.c.h.b16 %v72
    %v353 = vunpack.c.l.b16 %v73
    %v354 = vunpack.c.h.b16 %v73
    %v355 = vunpack.c.l.b16 %v74
    %v356 = vunpack.c.h.b16 %v74
    %v357 = vunpack.c.l.b16 %v75
    %v358 = vunpack.c.h.b16 %v75
    %v359 = vunpack.c.l.b16 %v76
    %v360 = vunpack.c.h.b16 %v76
    %v361 = vunpack.c.l.b16 %v77
    %v362 = vunpack.c.h.b16 %v77
    %v363 = vunpack.c.l.b16 %v78
    %v364 = vunpack.c.h.b16 %v78
    %v365 = vunpack.c.l.b16 %v79
    %v366 = vunpack.c.h.b16 %v79
    %v367 = vunpack.c.l.b16 %v80
    %v368 = vunpack.c.h.b16 %v80
    %v369 = vunpack.c.l.b16 %v81
    %v370 = vunpack.c.h.b16 %v81
    %v371 = vunpack.c.l.b16 %v82
    %v372 = vunpack.c.h.b16 %v82
    %v373 = vunpack.c.l.b16 %v83
    %v374 = vunpack.c.h.b16 %v83
    %v375 = vunpack.c.l.b16 %v84
    %v376 = vunpack.c.h.b16 %v84
    %v377 = vunpack.c.l.b16 %v85
    %v378 = vunpack.c.h.b16 %v85
    %v379 = vunpack.c.l.b16 %v86
    %v380 = vunpack.c.h.b16 %v86
    %v381 = vunpack.c.l.b16 %v87
    %v382 = vunpack.c.h.b16 %v87
    %v383 = vunpack.c.l.b16 %v88
    %v384 = vunpack.c.h.b16 %v88
    %v385 = vunpack.c.l.b16 %v89
    %v386 = vunpack.c.h.b16 %v89
    %v387 = vunpack.c.l.b16 %v90
    %v388 = vunpack.c.h.b16 %v90
    %v389 = vunpack.c.l.b16 %v91
    %v390 = vunpack.c.h.b16 %v91
    %v391 = vunpack.c.l.b16 %v92
    %v392 = vunpack.c.h.b16 %v92
    %v393 = vunpack.c.l.b16 %v93
    %v394 = vunpack.c.h.b16 %v93
    %v395 = vunpack.c.l.b16 %v94
    %v396 = vunpack.c.h.b16 %v94
    %v397 = vunpack.c.l.b16 %v95
    %v398 = vunpack.c.h.b16 %v95
    %v399 = vunpack.c.l.b16 %v96
    %v400 = vunpack.c.h.b16 %v96
    %v401 = vunpack.c.l.b16 %v97
    %v402 = vunpack.c.h.b16 %v97
    %v403 = vunpack.c.l.b16 %v98
    %v404 = vunpack.c.h.b16 %v98
    %v405 = vunpack.c.l.b16 %v99
    %v406 = vunpack.c.h.b16 %v99
    %v407 = vunpack.c.l.b16 %v100
    %v408 = vunpack.c.h.b16 %v100
    %v409 = vunpack.c.l.b16 %v101
    %v410 = vunpack.c.h.b16 %v101
    %v411 = vunpack.c.l.b16 %v102
    %v412 = vunpack.c.h.b16 %v102
    %v413 = vunpack.c.l.b16 %v103
    %v414 = vunpack.c.h.b16 %v103
    %v415 = vunpack.c.l.b16 %v104
    %v416 = vunpack.c.h.b16 %v104
    %v417 = vunpack.c.l.b16 %v105
    %v418 = vunpack.c.h.b16 %v105
    %v419 = vunpack.c.l.b16 %v106
    %v420 = vunpack.c.h.b16 %v106
    %v421 = vunpack.c.l.b16 %v107
    %v422 = vunpack.c.h.b16 %v107
    %v423 = vunpack.c.l.b16 %v108
    %v424 = vunpack.c.h.b16 %v108
    %v425 = vunpack.c.l.b16 %v109
    %v426 = vunpack.c.h.b16 %v109
    %v427 = vunpack.c.l.b16 %v110
    %v428 = vunpack.c.h.b16 %v110
    %v429 = vunpack.c.l.b16 %v111
    %v430 = vunpack.c.h.b16 %v111
    %v431 = vunpack.c.l.b16 %v112
    %v432 = vunpack.c.h.b16 %v112
    %v433 = vunpack.c.l.b16 %v113
    %v434 = vunpack.c.h.b16 %v113
    %v435 = vunpack.c.l.b16 %v114
    %v436 = vunpack.c.h.b16 %v114
    %v437 = vunpack.c.l.b16 %v115
    %v438 = vunpack.c.h.b16 %v115
    %v439 = vunpack.c.l.b16 %v116
    %v440 = vunpack.c.h.b16 %v116
    %v441 = vunpack.c.l.b16 %v117
    %v442 = vunpack.c.h.b16 %v117
    %v443 = vunpack.c.l.b16 %v118
    %v444 = vunpack.c.h.b16 %v118
    %v445 = vunpack.c.l.b16 %v119
    %v446 = vunpack.c.h.b16 %v119
    %v447 = vunpack.c.l.b16 %v120
    %v448 = vunpack.c.h.b16 %v120
    %v449 = vunpack.c.l.b16 %v121
    %v450 = vunpack.c.h.b16 %v121
    %v451 = vpack.c.b16 %v327, %v323
    %v452 = vpack.c.b16 %v328, %v324
    %v453 = vpack.c.b16 %v329, %v325
    %v454 = vpack.c.b16 %v330, %v326
    %v455 = vpack.c.b16 %v335, %v331
    %v456 = vpack.c.b16 %v336, %v332
    %v457 = vpack.c.b16 %v337, %v333
    %v458 = vpack.c.b16 %v338, %v334
    %v459 = vpack.c.b16 %v343, %v339
    %v460 = vpack.c.b16 %v344, %v340
    %v461 = vpack.c.b16 %v345, %v341
    %v462 = vpack.c.b16 %v346, %v342
    %v463 = vpack.c.b16 %v351, %v347
    %v464 = vpack.c.b16 %v352, %v348
    %v465 = vpack.c.b16 %v353, %v349
    %v466 = vpack.c.b16 %v354, %v350
    %v467 = vpack.c.b16 %v359, %v355
    %v468 = vpack.c.b16 %v360, %v356
    %v469 = vpack.c.b16 %v361, %v357
    %v470 = vpack.c.b16 %v362, %v358
    %v471 = vpack.c.b16 %v367, %v363
    %v472 = vpack.c.b16 %v368, %v364
    %v473 = vpack.c.b16 %v369, %v365
    %v474 = vpack.c.b16 %v370, %v366
    %v475 = vpack.c.b16 %v375, %v371
    %v476 = vpack.c.b16 %v376, %v372
    %v477 = vpack.c.b16 %v377, %v373
    %v478 = vpack.c.b16 %v378, %v374
    %v479 = vpack.c.b16 %v383, %v379
    %v480 = vpack.c.b16 %v384, %v380
    %v481 = vpack.c.b16 %v385, %v381
    %v482 = vpack.c.b16 %v386, %v382
    %v483 = vpack.c.b16 %v391, %v387
    %v484 = vpack.c.b16 %v392, %v388
    %v485 = vpack.c.b16 %v393, %v389
    %v486 = vpack.c.b16 %v394, %v390
    %v487 = vpack.c.b16 %v399, %v395
    %v488 = vpack.c.b16 %v400, %v396
    %v489 = vpack.c.b16 %v401, %v397
    %v490 = vpack.c.b16 %v402, %v398
    %v491 = vpack.c.b16 %v407, %v403
    %v492 = vpack.c.b16 %v408, %v404
    %v493 = vpack.c.b16 %v409, %v405
    %v494 = vpack.c.b16 %v410, %v406
    %v495 = vpack.c.b16 %v415, %v411
    %v496 = vpack.c.b16 %v416, %v412
    %v497 = vpack.c.b16 %v417, %v413
    %v498 = vpack.c.b16 %v418, %v414
    %v499 = vpack.c.b16 %v423, %v419
    %v500 = vpack.c.b16 %v424, %v420
    %v501 = vpack.c.b16 %v425, %v421
    %v502 = vpack.c.b16 %v426, %v422
    %v503 = vpack.c.b16 %v431, %v427
    %v504 = vpack.c.b16 %v432, %v428
    %v505 = vpack.c.b16 %v433, %v429
    %v506 = vpack.c.b16 %v434, %v430
    %v507 = vpack.c.b16 %v439, %v435
    %v508 = vpack.c.b16 %v440, %v436
    %v509 = vpack.c.b16 %v441, %v437
    %v510 = vpack.c.b16 %v442, %v438
    %v511 = vpack.c.b16 %v447, %v443
    %v512 = vpack.c.b16 %v448, %v444
    %v513 = vpack.c.b16 %v449, %v445
    %v514 = vpack.c.b16 %v450, %v446
    %579 = vmatprep.subr.bf16.mxu0 %v452
    %580 = vmatpush1.bf16.msra.mxu0 %v451
    %581 = vmatprep.subr.bf16.mxu0 %v456
    %582 = vmatpush1.bf16.msra.mxu0 %v455
    %583 = vmatprep.subr.bf16.mxu0 %v460
    %584 = vmatpush1.bf16.msra.mxu0 %v459
    %585 = vmatprep.subr.bf16.mxu0 %v464
    %586 = vmatpush1.bf16.msra.mxu0 %v463
    %587 = vmatprep.subr.bf16.mxu0 %v468
    %588 = vmatpush1.bf16.msra.mxu0 %v467
    %589 = vmatprep.subr.bf16.mxu0 %v472
    %590 = vmatpush1.bf16.msra.mxu0 %v471
    %591 = vmatprep.subr.bf16.mxu0 %v476
    %592 = vmatpush1.bf16.msra.mxu0 %v475
    %593 = vmatprep.subr.bf16.mxu0 %v480
    %594 = vmatpush1.bf16.msra.mxu0 %v479
    %595 = vmatprep.subr.bf16.mxu0 %v484
    %596 = vmatpush1.bf16.msra.mxu0 %v483
    %597 = vmatprep.subr.bf16.mxu0 %v488
    %598 = vmatpush1.bf16.msra.mxu0 %v487
    %599 = vmatprep.subr.bf16.mxu0 %v492
    %600 = vmatpush1.bf16.msra.mxu0 %v491
    %601 = vmatprep.subr.bf16.mxu0 %v496
    %602 = vmatpush1.bf16.msra.mxu0 %v495
    %603 = vmatprep.subr.bf16.mxu0 %v500
    %604 = vmatpush1.bf16.msra.mxu0 %v499
    %605 = vmatprep.subr.bf16.mxu0 %v504
    %606 = vmatpush1.bf16.msra.mxu0 %v503
    %607 = vmatprep.subr.bf16.mxu0 %v508
    %608 = vmatpush1.bf16.msra.mxu0 %v507
    %609 = vmatprep.subr.bf16.mxu0 %v512
    %610 = vmatpush1.bf16.msra.mxu0 %v511
    %611 = vmatprep.mubr.bf16.mxu0 0
    %612 = vmatmul.mubr.bf16.gmra.mrb[0].mxu0 %v258
    %v613 = vpop.f32.mrb[0].mxu0
    %v614 = vadd.f32 %v207, %v613
    %v615 = vpop.f32.mrb[0].mxu0
    %v616 = vadd.f32 %v211, %v615
    %v617 = vpop.f32.mrb[0].mxu0
    %v618 = vpop.f32.mrb[0].mxu0
    %619 = vdwg.mxu0
    %620 = vmatprep.subr.bf16.mxu0 %v454
    %621 = vmatpush1.bf16.msra.mxu0 %v453
    %622 = vmatprep.subr.bf16.mxu0 %v458
    %623 = vmatpush1.bf16.msra.mxu0 %v457
    %624 = vmatprep.subr.bf16.mxu0 %v462
    %625 = vmatpush1.bf16.msra.mxu0 %v461
    %626 = vmatprep.subr.bf16.mxu0 %v466
    %627 = vmatpush1.bf16.msra.mxu0 %v465
    %628 = vmatprep.subr.bf16.mxu0 %v470
    %629 = vmatpush1.bf16.msra.mxu0 %v469
    %630 = vmatprep.subr.bf16.mxu0 %v474
    %631 = vmatpush1.bf16.msra.mxu0 %v473
    %632 = vmatprep.subr.bf16.mxu0 %v478
    %633 = vmatpush1.bf16.msra.mxu0 %v477
    %634 = vmatprep.subr.bf16.mxu0 %v482
    %635 = vmatpush1.bf16.msra.mxu0 %v481
    %636 = vmatprep.subr.bf16.mxu0 %v486
    %637 = vmatpush1.bf16.msra.mxu0 %v485
    %638 = vmatprep.subr.bf16.mxu0 %v490
    %639 = vmatpush1.bf16.msra.mxu0 %v489
    %640 = vmatprep.subr.bf16.mxu0 %v494
    %641 = vmatpush1.bf16.msra.mxu0 %v493
    %642 = vmatprep.subr.bf16.mxu0 %v498
    %643 = vmatpush1.bf16.msra.mxu0 %v497
    %644 = vmatprep.subr.bf16.mxu0 %v502
    %645 = vmatpush1.bf16.msra.mxu0 %v501
    %646 = vmatprep.subr.bf16.mxu0 %v506
    %647 = vmatpush1.bf16.msra.mxu0 %v505
    %648 = vmatprep.subr.bf16.mxu0 %v510
    %649 = vmatpush1.bf16.msra.mxu0 %v509
    %650 = vmatprep.subr.bf16.mxu0 %v514
    %651 = vmatpush1.bf16.msra.mxu0 %v513
    %652 = vmatprep.mubr.bf16.mxu0 0
    %653 = vmatmul.mubr.bf16.gmra.mrb[0].mxu0 %v258
    %v654 = vpop.f32.mrb[0].mxu0
    %v655 = vadd.f32 %v215, %v654
    %v656 = vpop.f32.mrb[0].mxu0
    %v657 = vadd.f32 %v219, %v656
    %v658 = vpop.f32.mrb[0].mxu0
    %v659 = vpop.f32.mrb[0].mxu0
    %660 = vdwg.mxu0
    %v661 = vxor.u32 %v614, 2147483648
    %v662 = vmul.f32 %v661, 1.442695
    %v663 = vpow.pop %v662
    %v664 = vadd.f32 %v663, 1.0
    %v665 = vrcp.pop %v664
    %v666 = vmul.f32 1.0, %v665
    %v667 = vxor.u32 %v616, 2147483648
    %v668 = vmul.f32 %v667, 1.442695
    %v669 = vpow.pop %v668
    %v670 = vadd.f32 %v669, 1.0
    %v671 = vrcp.pop %v670
    %v672 = vmul.f32 1.0, %v671
    %v673 = vtanh.pop %v655
    %v674 = vxor.u32 %v657, 2147483648
    %v675 = vmul.f32 %v674, 1.442695
    %v676 = vpow.pop %v675
    %v677 = vadd.f32 %v676, 1.0
    %v678 = vrcp.pop %v677
    %v679 = vmul.f32 1.0, %v678
    %v680 = vmul.f32 %v672, 0.0
    %v681 = vmul.f32 %v666, %v673
    %v682 = vadd.f32 %v680, %v681
    %v683 = vtanh.pop %v682
    %v684 = vmul.f32 %v679, %v683
    %s685 = scalar_lea.vmem %s2, 4
    %v686 = vld [vmem:[%s685] sm:$0xf]
    %v687 = vpack.c.bf16 %v684, %v684
    %688 = vmatprep.subr.bf16.mxu0 %v452
    %689 = vmatpush1.bf16.msra.mxu0 %v451
    %690 = vmatprep.subr.bf16.mxu0 %v456
    %691 = vmatpush1.bf16.msra.mxu0 %v455
    %692 = vmatprep.subr.bf16.mxu0 %v460
    %693 = vmatpush1.bf16.msra.mxu0 %v459
    %694 = vmatprep.subr.bf16.mxu0 %v464
    %695 = vmatpush1.bf16.msra.mxu0 %v463
    %696 = vmatprep.subr.bf16.mxu0 %v468
    %697 = vmatpush1.bf16.msra.mxu0 %v467
    %698 = vmatprep.subr.bf16.mxu0 %v472
    %699 = vmatpush1.bf16.msra.mxu0 %v471
    %700 = vmatprep.subr.bf16.mxu0 %v476
    %701 = vmatpush1.bf16.msra.mxu0 %v475
    %702 = vmatprep.subr.bf16.mxu0 %v480
    %703 = vmatpush1.bf16.msra.mxu0 %v479
    %704 = vmatprep.subr.bf16.mxu0 %v484
    %705 = vmatpush1.bf16.msra.mxu0 %v483
    %706 = vmatprep.subr.bf16.mxu0 %v488
    %707 = vmatpush1.bf16.msra.mxu0 %v487
    %708 = vmatprep.subr.bf16.mxu0 %v492
    %709 = vmatpush1.bf16.msra.mxu0 %v491
    %710 = vmatprep.subr.bf16.mxu0 %v496
    %711 = vmatpush1.bf16.msra.mxu0 %v495
    %712 = vmatprep.subr.bf16.mxu0 %v500
    %713 = vmatpush1.bf16.msra.mxu0 %v499
    %714 = vmatprep.subr.bf16.mxu0 %v504
    %715 = vmatpush1.bf16.msra.mxu0 %v503
    %716 = vmatprep.subr.bf16.mxu0 %v508
    %717 = vmatpush1.bf16.msra.mxu0 %v507
    %718 = vmatprep.subr.bf16.mxu0 %v512
    %719 = vmatpush1.bf16.msra.mxu0 %v511
    %720 = vmatprep.mubr.bf16.mxu0 %v687
    %721 = vmatmul.mubr.bf16.gmra.mrb[0].mxu0 %v686
    %v722 = vpop.f32.mrb[0].mxu0
    %v723 = vadd.f32 %v207, %v722
    %v724 = vpop.f32.mrb[0].mxu0
    %v725 = vadd.f32 %v211, %v724
    %v726 = vpop.f32.mrb[0].mxu0
    %v727 = vpop.f32.mrb[0].mxu0
    %728 = vdwg.mxu0
    %729 = vmatprep.subr.bf16.mxu0 %v454
    %730 = vmatpush1.bf16.msra.mxu0 %v453
    %731 = vmatprep.subr.bf16.mxu0 %v458
    %732 = vmatpush1.bf16.msra.mxu0 %v457
    %733 = vmatprep.subr.bf16.mxu0 %v462
    %734 = vmatpush1.bf16.msra.mxu0 %v461
    %735 = vmatprep.subr.bf16.mxu0 %v466
    %736 = vmatpush1.bf16.msra.mxu0 %v465
    %737 = vmatprep.subr.bf16.mxu0 %v470
    %738 = vmatpush1.bf16.msra.mxu0 %v469
    %739 = vmatprep.subr.bf16.mxu0 %v474
    %740 = vmatpush1.bf16.msra.mxu0 %v473
    %741 = vmatprep.subr.bf16.mxu0 %v478
    %742 = vmatpush1.bf16.msra.mxu0 %v477
    %743 = vmatprep.subr.bf16.mxu0 %v482
    %744 = vmatpush1.bf16.msra.mxu0 %v481
    %745 = vmatprep.subr.bf16.mxu0 %v486
    %746 = vmatpush1.bf16.msra.mxu0 %v485
    %747 = vmatprep.subr.bf16.mxu0 %v490
    %748 = vmatpush1.bf16.msra.mxu0 %v489
    %749 = vmatprep.subr.bf16.mxu0 %v494
    %750 = vmatpush1.bf16.msra.mxu0 %v493
    %751 = vmatprep.subr.bf16.mxu0 %v498
    %752 = vmatpush1.bf16.msra.mxu0 %v497
    %753 = vmatprep.subr.bf16.mxu0 %v502
    %754 = vmatpush1.bf16.msra.mxu0 %v501
    %755 = vmatprep.subr.bf16.mxu0 %v506
    %756 = vmatpush1.bf16.msra.mxu0 %v505
    %757 = vmatprep.subr.bf16.mxu0 %v510
    %758 = vmatpush1.bf16.msra.mxu0 %v509
    %759 = vmatprep.subr.bf16.mxu0 %v514
    %760 = vmatpush1.bf16.msra.mxu0 %v513
    %761 = vmatprep.mubr.bf16.mxu0 %v687
    %762 = vmatmul.mubr.bf16.gmra.mrb[0].mxu0 %v686
    %v763 = vpop.f32.mrb[0].mxu0
    %v764 = vadd.f32 %v215, %v763
    %v765 = vpop.f32.mrb[0].mxu0
    %v766 = vadd.f32 %v219, %v765
    %v767 = vpop.f32.mrb[0].mxu0
    %v768 = vpop.f32.mrb[0].mxu0
    %769 = vdwg.mxu0
    %v770 = vxor.u32 %v723, 2147483648
    %v771 = vmul.f32 %v770, 1.442695
    %v772 = vpow.pop %v771
    %v773 = vadd.f32 %v772, 1.0
    %v774 = vrcp.pop %v773
    %v775 = vmul.f32 1.0, %v774
    %v776 = vxor.u32 %v725, 2147483648
    %v777 = vmul.f32 %v776, 1.442695
    %v778 = vpow.pop %v777
    %v779 = vadd.f32 %v778, 1.0
    %v780 = vrcp.pop %v779
    %v781 = vmul.f32 1.0, %v780
    %v782 = vtanh.pop %v764
    %v783 = vxor.u32 %v766, 2147483648
    %v784 = vmul.f32 %v783, 1.442695
    %v785 = vpow.pop %v784
    %v786 = vadd.f32 %v785, 1.0
    %v787 = vrcp.pop %v786
    %v788 = vmul.f32 1.0, %v787
    %v789 = vmul.f32 %v781, %v682
    %v790 = vmul.f32 %v775, %v782
    %v791 = vadd.f32 %v789, %v790
    %v792 = vtanh.pop %v791
    %v793 = vmul.f32 %v788, %v792
    %s794 = scalar_lea.vmem %s2, 8
    %v795 = vld [vmem:[%s794] sm:$0xf]
    %v796 = vpack.c.bf16 %v793, %v793
    %797 = vmatprep.subr.bf16.mxu0 %v452
    %798 = vmatpush1.bf16.msra.mxu0 %v451
    %799 = vmatprep.subr.bf16.mxu0 %v456
    %800 = vmatpush1.bf16.msra.mxu0 %v455
    %801 = vmatprep.subr.bf16.mxu0 %v460
    %802 = vmatpush1.bf16.msra.mxu0 %v459
    %803 = vmatprep.subr.bf16.mxu0 %v464
    %804 = vmatpush1.bf16.msra.mxu0 %v463
    %805 = vmatprep.subr.bf16.mxu0 %v468
    %806 = vmatpush1.bf16.msra.mxu0 %v467
    %807 = vmatprep.subr.bf16.mxu0 %v472
    %808 = vmatpush1.bf16.msra.mxu0 %v471
    %809 = vmatprep.subr.bf16.mxu0 %v476
    %810 = vmatpush1.bf16.msra.mxu0 %v475
    %811 = vmatprep.subr.bf16.mxu0 %v480
    %812 = vmatpush1.bf16.msra.mxu0 %v479
    %813 = vmatprep.subr.bf16.mxu0 %v484
    %814 = vmatpush1.bf16.msra.mxu0 %v483
    %815 = vmatprep.subr.bf16.mxu0 %v488
    %816 = vmatpush1.bf16.msra.mxu0 %v487
    %817 = vmatprep.subr.bf16.mxu0 %v492
    %818 = vmatpush1.bf16.msra.mxu0 %v491
    %819 = vmatprep.subr.bf16.mxu0 %v496
    %820 = vmatpush1.bf16.msra.mxu0 %v495
    %821 = vmatprep.subr.bf16.mxu0 %v500
    %822 = vmatpush1.bf16.msra.mxu0 %v499
    %823 = vmatprep.subr.bf16.mxu0 %v504
    %824 = vmatpush1.bf16.msra.mxu0 %v503
    %825 = vmatprep.subr.bf16.mxu0 %v508
    %826 = vmatpush1.bf16.msra.mxu0 %v507
    %827 = vmatprep.subr.bf16.mxu0 %v512
    %828 = vmatpush1.bf16.msra.mxu0 %v511
    %829 = vmatprep.mubr.bf16.mxu0 %v796
    %830 = vmatmul.mubr.bf16.gmra.mrb[0].mxu0 %v795
    %v831 = vpop.f32.mrb[0].mxu0
    %v832 = vadd.f32 %v207, %v831
    %v833 = vpop.f32.mrb[0].mxu0
    %v834 = vadd.f32 %v211, %v833
    %v835 = vpop.f32.mrb[0].mxu0
    %v836 = vpop.f32.mrb[0].mxu0
    %837 = vdwg.mxu0
    %838 = vmatprep.subr.bf16.mxu0 %v454
    %839 = vmatpush1.bf16.msra.mxu0 %v453
    %840 = vmatprep.subr.bf16.mxu0 %v458
    %841 = vmatpush1.bf16.msra.mxu0 %v457
    %842 = vmatprep.subr.bf16.mxu0 %v462
    %843 = vmatpush1.bf16.msra.mxu0 %v461
    %844 = vmatprep.subr.bf16.mxu0 %v466
    %845 = vmatpush1.bf16.msra.mxu0 %v465
    %846 = vmatprep.subr.bf16.mxu0 %v470
    %847 = vmatpush1.bf16.msra.mxu0 %v469
    %848 = vmatprep.subr.bf16.mxu0 %v474
    %849 = vmatpush1.bf16.msra.mxu0 %v473
    %850 = vmatprep.subr.bf16.mxu0 %v478
    %851 = vmatpush1.bf16.msra.mxu0 %v477
    %852 = vmatprep.subr.bf16.mxu0 %v482
    %853 = vmatpush1.bf16.msra.mxu0 %v481
    %854 = vmatprep.subr.bf16.mxu0 %v486
    %855 = vmatpush1.bf16.msra.mxu0 %v485
    %856 = vmatprep.subr.bf16.mxu0 %v490
    %857 = vmatpush1.bf16.msra.mxu0 %v489
    %858 = vmatprep.subr.bf16.mxu0 %v494
    %859 = vmatpush1.bf16.msra.mxu0 %v493
    %860 = vmatprep.subr.bf16.mxu0 %v498
    %861 = vmatpush1.bf16.msra.mxu0 %v497
    %862 = vmatprep.subr.bf16.mxu0 %v502
    %863 = vmatpush1.bf16.msra.mxu0 %v501
    %864 = vmatprep.subr.bf16.mxu0 %v506
    %865 = vmatpush1.bf16.msra.mxu0 %v505
    %866 = vmatprep.subr.bf16.mxu0 %v510
    %867 = vmatpush1.bf16.msra.mxu0 %v509
    %868 = vmatprep.subr.bf16.mxu0 %v514
    %869 = vmatpush1.bf16.msra.mxu0 %v513
    %870 = vmatprep.mubr.bf16.mxu0 %v796
    %871 = vmatmul.mubr.bf16.gmra.mrb[0].mxu0 %v795
    %v872 = vpop.f32.mrb[0].mxu0
    %v873 = vadd.f32 %v215, %v872
    %v874 = vpop.f32.mrb[0].mxu0
    %v875 = vadd.f32 %v219, %v874
    %v876 = vpop.f32.mrb[0].mxu0
    %v877 = vpop.f32.mrb[0].mxu0
    %878 = vdwg.mxu0
    %v879 = vxor.u32 %v832, 2147483648
    %v880 = vmul.f32 %v879, 1.442695
    %v881 = vpow.pop %v880
    %v882 = vadd.f32 %v881, 1.0
    %v883 = vrcp.pop %v882
    %v884 = vmul.f32 1.0, %v883
    %v885 = vxor.u32 %v834, 2147483648
    %v886 = vmul.f32 %v885, 1.442695
    %v887 = vpow.pop %v886
    %v888 = vadd.f32 %v887, 1.0
    %v889 = vrcp.pop %v888
    %v890 = vmul.f32 1.0, %v889
    %v891 = vtanh.pop %v873
    %v892 = vxor.u32 %v875, 2147483648
    %v893 = vmul.f32 %v892, 1.442695
    %v894 = vpow.pop %v893
    %v895 = vadd.f32 %v894, 1.0
    %v896 = vrcp.pop %v895
    %v897 = vmul.f32 1.0, %v896
    %v898 = vmul.f32 %v890, %v791
    %v899 = vmul.f32 %v884, %v891
    %v900 = vadd.f32 %v898, %v899
    %v901 = vtanh.pop %v900
    %v902 = vmul.f32 %v897, %v901
    %s903 = scalar_lea.vmem %s2, 12
    %v904 = vld [vmem:[%s903] sm:$0xf]
    %v905 = vpack.c.bf16 %v902, %v902
    %906 = vmatprep.subr.bf16.mxu0 %v452
    %907 = vmatpush1.bf16.msra.mxu0 %v451
    %908 = vmatprep.subr.bf16.mxu0 %v456
    %909 = vmatpush1.bf16.msra.mxu0 %v455
    %910 = vmatprep.subr.bf16.mxu0 %v460
    %911 = vmatpush1.bf16.msra.mxu0 %v459
    %912 = vmatprep.subr.bf16.mxu0 %v464
    %913 = vmatpush1.bf16.msra.mxu0 %v463
    %914 = vmatprep.subr.bf16.mxu0 %v468
    %915 = vmatpush1.bf16.msra.mxu0 %v467
    %916 = vmatprep.subr.bf16.mxu0 %v472
    %917 = vmatpush1.bf16.msra.mxu0 %v471
    %918 = vmatprep.subr.bf16.mxu0 %v476
    %919 = vmatpush1.bf16.msra.mxu0 %v475
    %920 = vmatprep.subr.bf16.mxu0 %v480
    %921 = vmatpush1.bf16.msra.mxu0 %v479
    %922 = vmatprep.subr.bf16.mxu0 %v484
    %923 = vmatpush1.bf16.msra.mxu0 %v483
    %924 = vmatprep.subr.bf16.mxu0 %v488
    %925 = vmatpush1.bf16.msra.mxu0 %v487
    %926 = vmatprep.subr.bf16.mxu0 %v492
    %927 = vmatpush1.bf16.msra.mxu0 %v491
    %928 = vmatprep.subr.bf16.mxu0 %v496
    %929 = vmatpush1.bf16.msra.mxu0 %v495
    %930 = vmatprep.subr.bf16.mxu0 %v500
    %931 = vmatpush1.bf16.msra.mxu0 %v499
    %932 = vmatprep.subr.bf16.mxu0 %v504
    %933 = vmatpush1.bf16.msra.mxu0 %v503
    %934 = vmatprep.subr.bf16.mxu0 %v508
    %935 = vmatpush1.bf16.msra.mxu0 %v507
    %936 = vmatprep.subr.bf16.mxu0 %v512
    %937 = vmatpush1.bf16.msra.mxu0 %v511
    %938 = vmatprep.mubr.bf16.mxu0 %v905
    %939 = vmatmul.mubr.bf16.gmra.mrb[0].mxu0 %v904
    %v940 = vpop.f32.mrb[0].mxu0
    %v941 = vadd.f32 %v207, %v940
    %v942 = vpop.f32.mrb[0].mxu0
    %v943 = vadd.f32 %v211, %v942
    %v944 = vpop.f32.mrb[0].mxu0
    %v945 = vpop.f32.mrb[0].mxu0
    %946 = vdwg.mxu0
    %947 = vmatprep.subr.bf16.mxu0 %v454
    %948 = vmatpush1.bf16.msra.mxu0 %v453
    %949 = vmatprep.subr.bf16.mxu0 %v458
    %950 = vmatpush1.bf16.msra.mxu0 %v457
    %951 = vmatprep.subr.bf16.mxu0 %v462
    %952 = vmatpush1.bf16.msra.mxu0 %v461
    %953 = vmatprep.subr.bf16.mxu0 %v466
    %954 = vmatpush1.bf16.msra.mxu0 %v465
    %955 = vmatprep.subr.bf16.mxu0 %v470
    %956 = vmatpush1.bf16.msra.mxu0 %v469
    %957 = vmatprep.subr.bf16.mxu0 %v474
    %958 = vmatpush1.bf16.msra.mxu0 %v473
    %959 = vmatprep.subr.bf16.mxu0 %v478
    %960 = vmatpush1.bf16.msra.mxu0 %v477
    %961 = vmatprep.subr.bf16.mxu0 %v482
    %962 = vmatpush1.bf16.msra.mxu0 %v481
    %963 = vmatprep.subr.bf16.mxu0 %v486
    %964 = vmatpush1.bf16.msra.mxu0 %v485
    %965 = vmatprep.subr.bf16.mxu0 %v490
    %966 = vmatpush1.bf16.msra.mxu0 %v489
    %967 = vmatprep.subr.bf16.mxu0 %v494
    %968 = vmatpush1.bf16.msra.mxu0 %v493
    %969 = vmatprep.subr.bf16.mxu0 %v498
    %970 = vmatpush1.bf16.msra.mxu0 %v497
    %971 = vmatprep.subr.bf16.mxu0 %v502
    %972 = vmatpush1.bf16.msra.mxu0 %v501
    %973 = vmatprep.subr.bf16.mxu0 %v506
    %974 = vmatpush1.bf16.msra.mxu0 %v505
    %975 = vmatprep.subr.bf16.mxu0 %v510
    %976 = vmatpush1.bf16.msra.mxu0 %v509
    %977 = vmatprep.subr.bf16.mxu0 %v514
    %978 = vmatpush1.bf16.msra.mxu0 %v513
    %979 = vmatprep.mubr.bf16.mxu0 %v905
    %980 = vmatmul.mubr.bf16.gmra.mrb[0].mxu0 %v904
    %v981 = vpop.f32.mrb[0].mxu0
    %v982 = vadd.f32 %v215, %v981
    %v983 = vpop.f32.mrb[0].mxu0
    %v984 = vadd.f32 %v219, %v983
    %v985 = vpop.f32.mrb[0].mxu0
    %v986 = vpop.f32.mrb[0].mxu0
    %987 = vdwg.mxu0
    %v988 = vxor.u32 %v941, 2147483648
    %v989 = vmul.f32 %v988, 1.442695
    %v990 = vpow.pop %v989
    %v991 = vadd.f32 %v990, 1.0
    %v992 = vrcp.pop %v991
    %v993 = vmul.f32 1.0, %v992
    %v994 = vxor.u32 %v943, 2147483648
    %v995 = vmul.f32 %v994, 1.442695
    %v996 = vpow.pop %v995
    %v997 = vadd.f32 %v996, 1.0
    %v998 = vrcp.pop %v997
    %v999 = vmul.f32 1.0, %v998
    %v1000 = vtanh.pop %v982
    %v1001 = vxor.u32 %v984, 2147483648
    %v1002 = vmul.f32 %v1001, 1.442695
    %v1003 = vpow.pop %v1002
    %v1004 = vadd.f32 %v1003, 1.0
    %v1005 = vrcp.pop %v1004
    %v1006 = vmul.f32 1.0, %v1005
    %v1007 = vmul.f32 %v999, %v900
    %v1008 = vmul.f32 %v993, %v1000
    %v1009 = vadd.f32 %v1007, %v1008
    %v1010 = vtanh.pop %v1009
    %v1011 = vmul.f32 %v1006, %v1010
    %s1012 = scalar_lea.vmem %s2, 16
    %v1013 = vld [vmem:[%s1012] sm:$0xf]
    %v1014 = vpack.c.bf16 %v1011, %v1011
    %1015 = vmatprep.subr.bf16.mxu0 %v452
    %1016 = vmatpush1.bf16.msra.mxu0 %v451
    %1017 = vmatprep.subr.bf16.mxu0 %v456
    %1018 = vmatpush1.bf16.msra.mxu0 %v455
    %1019 = vmatprep.subr.bf16.mxu0 %v460
    %1020 = vmatpush1.bf16.msra.mxu0 %v459
    %1021 = vmatprep.subr.bf16.mxu0 %v464
    %1022 = vmatpush1.bf16.msra.mxu0 %v463
    %1023 = vmatprep.subr.bf16.mxu0 %v468
    %1024 = vmatpush1.bf16.msra.mxu0 %v467
    %1025 = vmatprep.subr.bf16.mxu0 %v472
    %1026 = vmatpush1.bf16.msra.mxu0 %v471
    %1027 = vmatprep.subr.bf16.mxu0 %v476
    %1028 = vmatpush1.bf16.msra.mxu0 %v475
    %1029 = vmatprep.subr.bf16.mxu0 %v480
    %1030 = vmatpush1.bf16.msra.mxu0 %v479
    %1031 = vmatprep.subr.bf16.mxu0 %v484
    %1032 = vmatpush1.bf16.msra.mxu0 %v483
    %1033 = vmatprep.subr.bf16.mxu0 %v488
    %1034 = vmatpush1.bf16.msra.mxu0 %v487
    %1035 = vmatprep.subr.bf16.mxu0 %v492
    %1036 = vmatpush1.bf16.msra.mxu0 %v491
    %1037 = vmatprep.subr.bf16.mxu0 %v496
    %1038 = vmatpush1.bf16.msra.mxu0 %v495
    %1039 = vmatprep.subr.bf16.mxu0 %v500
    %1040 = vmatpush1.bf16.msra.mxu0 %v499
    %1041 = vmatprep.subr.bf16.mxu0 %v504
    %1042 = vmatpush1.bf16.msra.mxu0 %v503
    %1043 = vmatprep.subr.bf16.mxu0 %v508
    %1044 = vmatpush1.bf16.msra.mxu0 %v507
    %1045 = vmatprep.subr.bf16.mxu0 %v512
    %1046 = vmatpush1.bf16.msra.mxu0 %v511
    %1047 = vmatprep.mubr.bf16.mxu0 %v1014
    %1048 = vmatmul.mubr.bf16.gmra.mrb[0].mxu0 %v1013
    %v1049 = vpop.f32.mrb[0].mxu0
    %v1050 = vadd.f32 %v207, %v1049
    %v1051 = vpop.f32.mrb[0].mxu0
    %v1052 = vadd.f32 %v211, %v1051
    %v1053 = vpop.f32.mrb[0].mxu0
    %v1054 = vpop.f32.mrb[0].mxu0
    %1055 = vdwg.mxu0
    %1056 = vmatprep.subr.bf16.mxu0 %v454
    %1057 = vmatpush1.bf16.msra.mxu0 %v453
    %1058 = vmatprep.subr.bf16.mxu0 %v458
    %1059 = vmatpush1.bf16.msra.mxu0 %v457
    %1060 = vmatprep.subr.bf16.mxu0 %v462
    %1061 = vmatpush1.bf16.msra.mxu0 %v461
    %1062 = vmatprep.subr.bf16.mxu0 %v466
    %1063 = vmatpush1.bf16.msra.mxu0 %v465
    %1064 = vmatprep.subr.bf16.mxu0 %v470
    %1065 = vmatpush1.bf16.msra.mxu0 %v469
    %1066 = vmatprep.subr.bf16.mxu0 %v474
    %1067 = vmatpush1.bf16.msra.mxu0 %v473
    %1068 = vmatprep.subr.bf16.mxu0 %v478
    %1069 = vmatpush1.bf16.msra.mxu0 %v477
    %1070 = vmatprep.subr.bf16.mxu0 %v482
    %1071 = vmatpush1.bf16.msra.mxu0 %v481
    %1072 = vmatprep.subr.bf16.mxu0 %v486
    %1073 = vmatpush1.bf16.msra.mxu0 %v485
    %1074 = vmatprep.subr.bf16.mxu0 %v490
    %1075 = vmatpush1.bf16.msra.mxu0 %v489
    %1076 = vmatprep.subr.bf16.mxu0 %v494
    %1077 = vmatpush1.bf16.msra.mxu0 %v493
    %1078 = vmatprep.subr.bf16.mxu0 %v498
    %1079 = vmatpush1.bf16.msra.mxu0 %v497
    %1080 = vmatprep.subr.bf16.mxu0 %v502
    %1081 = vmatpush1.bf16.msra.mxu0 %v501
    %1082 = vmatprep.subr.bf16.mxu0 %v506
    %1083 = vmatpush1.bf16.msra.mxu0 %v505
    %1084 = vmatprep.subr.bf16.mxu0 %v510
    %1085 = vmatpush1.bf16.msra.mxu0 %v509
    %1086 = vmatprep.subr.bf16.mxu0 %v514
    %1087 = vmatpush1.bf16.msra.mxu0 %v513
    %1088 = vmatprep.mubr.bf16.mxu0 %v1014
    %1089 = vmatmul.mubr.bf16.gmra.mrb[0].mxu0 %v1013
    %v1090 = vpop.f32.mrb[0].mxu0
    %v1091 = vadd.f32 %v215, %v1090
    %v1092 = vpop.f32.mrb[0].mxu0
    %v1093 = vadd.f32 %v219, %v1092
    %v1094 = vpop.f32.mrb[0].mxu0
    %v1095 = vpop.f32.mrb[0].mxu0
    %1096 = vdwg.mxu0
    %v1097 = vxor.u32 %v1050, 2147483648
    %v1098 = vmul.f32 %v1097, 1.442695
    %v1099 = vpow.pop %v1098
    %v1100 = vadd.f32 %v1099, 1.0
    %v1101 = vrcp.pop %v1100
    %v1102 = vmul.f32 1.0, %v1101
    %v1103 = vxor.u32 %v1052, 2147483648
    %v1104 = vmul.f32 %v1103, 1.442695
    %v1105 = vpow.pop %v1104
    %v1106 = vadd.f32 %v1105, 1.0
    %v1107 = vrcp.pop %v1106
    %v1108 = vmul.f32 1.0, %v1107
    %v1109 = vtanh.pop %v1091
    %v1110 = vxor.u32 %v1093, 2147483648
    %v1111 = vmul.f32 %v1110, 1.442695
    %v1112 = vpow.pop %v1111
    %v1113 = vadd.f32 %v1112, 1.0
    %v1114 = vrcp.pop %v1113
    %v1115 = vmul.f32 1.0, %v1114
    %v1116 = vmul.f32 %v1108, %v1009
    %v1117 = vmul.f32 %v1102, %v1109
    %v1118 = vadd.f32 %v1116, %v1117
    %v1119 = vtanh.pop %v1118
    %v1120 = vmul.f32 %v1115, %v1119
    %s1121 = scalar_lea.vmem %s2, 20
    %v1122 = vld [vmem:[%s1121] sm:$0xf]
    %v1123 = vpack.c.bf16 %v1120, %v1120
    %1124 = vmatprep.subr.bf16.mxu0 %v452
    %1125 = vmatpush1.bf16.msra.mxu0 %v451
    %1126 = vmatprep.subr.bf16.mxu0 %v456
    %1127 = vmatpush1.bf16.msra.mxu0 %v455
    %1128 = vmatprep.subr.bf16.mxu0 %v460
    %1129 = vmatpush1.bf16.msra.mxu0 %v459
    %1130 = vmatprep.subr.bf16.mxu0 %v464
    %1131 = vmatpush1.bf16.msra.mxu0 %v463
    %1132 = vmatprep.subr.bf16.mxu0 %v468
    %1133 = vmatpush1.bf16.msra.mxu0 %v467
    %1134 = vmatprep.subr.bf16.mxu0 %v472
    %1135 = vmatpush1.bf16.msra.mxu0 %v471
    %1136 = vmatprep.subr.bf16.mxu0 %v476
    %1137 = vmatpush1.bf16.msra.mxu0 %v475
    %1138 = vmatprep.subr.bf16.mxu0 %v480
    %1139 = vmatpush1.bf16.msra.mxu0 %v479
    %1140 = vmatprep.subr.bf16.mxu0 %v484
    %1141 = vmatpush1.bf16.msra.mxu0 %v483
    %1142 = vmatprep.subr.bf16.mxu0 %v488
    %1143 = vmatpush1.bf16.msra.mxu0 %v487
    %1144 = vmatprep.subr.bf16.mxu0 %v492
    %1145 = vmatpush1.bf16.msra.mxu0 %v491
    %1146 = vmatprep.subr.bf16.mxu0 %v496
    %1147 = vmatpush1.bf16.msra.mxu0 %v495
    %1148 = vmatprep.subr.bf16.mxu0 %v500
    %1149 = vmatpush1.bf16.msra.mxu0 %v499
    %1150 = vmatprep.subr.bf16.mxu0 %v504
    %1151 = vmatpush1.bf16.msra.mxu0 %v503
    %1152 = vmatprep.subr.bf16.mxu0 %v508
    %1153 = vmatpush1.bf16.msra.mxu0 %v507
    %1154 = vmatprep.subr.bf16.mxu0 %v512
    %1155 = vmatpush1.bf16.msra.mxu0 %v511
    %1156 = vmatprep.mubr.bf16.mxu0 %v1123
    %1157 = vmatmul.mubr.bf16.gmra.mrb[0].mxu0 %v1122
    %v1158 = vpop.f32.mrb[0].mxu0
    %v1159 = vadd.f32 %v207, %v1158
    %v1160 = vpop.f32.mrb[0].mxu0
    %v1161 = vadd.f32 %v211, %v1160
    %v1162 = vpop.f32.mrb[0].mxu0
    %v1163 = vpop.f32.mrb[0].mxu0
    %1164 = vdwg.mxu0
    %1165 = vmatprep.subr.bf16.mxu0 %v454
    %1166 = vmatpush1.bf16.msra.mxu0 %v453
    %1167 = vmatprep.subr.bf16.mxu0 %v458
    %1168 = vmatpush1.bf16.msra.mxu0 %v457
    %1169 = vmatprep.subr.bf16.mxu0 %v462
    %1170 = vmatpush1.bf16.msra.mxu0 %v461
    %1171 = vmatprep.subr.bf16.mxu0 %v466
    %1172 = vmatpush1.bf16.msra.mxu0 %v465
    %1173 = vmatprep.subr.bf16.mxu0 %v470
    %1174 = vmatpush1.bf16.msra.mxu0 %v469
    %1175 = vmatprep.subr.bf16.mxu0 %v474
    %1176 = vmatpush1.bf16.msra.mxu0 %v473
    %1177 = vmatprep.subr.bf16.mxu0 %v478
    %1178 = vmatpush1.bf16.msra.mxu0 %v477
    %1179 = vmatprep.subr.bf16.mxu0 %v482
    %1180 = vmatpush1.bf16.msra.mxu0 %v481
    %1181 = vmatprep.subr.bf16.mxu0 %v486
    %1182 = vmatpush1.bf16.msra.mxu0 %v485
    %1183 = vmatprep.subr.bf16.mxu0 %v490
    %1184 = vmatpush1.bf16.msra.mxu0 %v489
    %1185 = vmatprep.subr.bf16.mxu0 %v494
    %1186 = vmatpush1.bf16.msra.mxu0 %v493
    %1187 = vmatprep.subr.bf16.mxu0 %v498
    %1188 = vmatpush1.bf16.msra.mxu0 %v497
    %1189 = vmatprep.subr.bf16.mxu0 %v502
    %1190 = vmatpush1.bf16.msra.mxu0 %v501
    %1191 = vmatprep.subr.bf16.mxu0 %v506
    %1192 = vmatpush1.bf16.msra.mxu0 %v505
    %1193 = vmatprep.subr.bf16.mxu0 %v510
    %1194 = vmatpush1.bf16.msra.mxu0 %v509
    %1195 = vmatprep.subr.bf16.mxu0 %v514
    %1196 = vmatpush1.bf16.msra.mxu0 %v513
    %1197 = vmatprep.mubr.bf16.mxu0 %v1123
    %1198 = vmatmul.mubr.bf16.gmra.mrb[0].mxu0 %v1122
    %v1199 = vpop.f32.mrb[0].mxu0
    %v1200 = vadd.f32 %v215, %v1199
    %v1201 = vpop.f32.mrb[0].mxu0
    %v1202 = vadd.f32 %v219, %v1201
    %v1203 = vpop.f32.mrb[0].mxu0
    %v1204 = vpop.f32.mrb[0].mxu0
    %1205 = vdwg.mxu0
    %v1206 = vxor.u32 %v1159, 2147483648
    %v1207 = vmul.f32 %v1206, 1.442695
    %v1208 = vpow.pop %v1207
    %v1209 = vadd.f32 %v1208, 1.0
    %v1210 = vrcp.pop %v1209
    %v1211 = vmul.f32 1.0, %v1210
    %v1212 = vxor.u32 %v1161, 2147483648
    %v1213 = vmul.f32 %v1212, 1.442695
    %v1214 = vpow.pop %v1213
    %v1215 = vadd.f32 %v1214, 1.0
    %v1216 = vrcp.pop %v1215
    %v1217 = vmul.f32 1.0, %v1216
    %v1218 = vtanh.pop %v1200
    %v1219 = vxor.u32 %v1202, 2147483648
    %v1220 = vmul.f32 %v1219, 1.442695
    %v1221 = vpow.pop %v1220
    %v1222 = vadd.f32 %v1221, 1.0
    %v1223 = vrcp.pop %v1222
    %v1224 = vmul.f32 1.0, %v1223
    %v1225 = vmul.f32 %v1217, %v1118
    %v1226 = vmul.f32 %v1211, %v1218
    %v1227 = vadd.f32 %v1225, %v1226
    %v1228 = vtanh.pop %v1227
    %v1229 = vmul.f32 %v1224, %v1228
    %s1230 = scalar_lea.vmem %s2, 24
    %v1231 = vld [vmem:[%s1230] sm:$0xf]
    %v1232 = vpack.c.bf16 %v1229, %v1229
    %1233 = vmatprep.subr.bf16.mxu0 %v452
    %1234 = vmatpush1.bf16.msra.mxu0 %v451
    %1235 = vmatprep.subr.bf16.mxu0 %v456
    %1236 = vmatpush1.bf16.msra.mxu0 %v455
    %1237 = vmatprep.subr.bf16.mxu0 %v460
    %1238 = vmatpush1.bf16.msra.mxu0 %v459
    %1239 = vmatprep.subr.bf16.mxu0 %v464
    %1240 = vmatpush1.bf16.msra.mxu0 %v463
    %1241 = vmatprep.subr.bf16.mxu0 %v468
    %1242 = vmatpush1.bf16.msra.mxu0 %v467
    %1243 = vmatprep.subr.bf16.mxu0 %v472
    %1244 = vmatpush1.bf16.msra.mxu0 %v471
    %1245 = vmatprep.subr.bf16.mxu0 %v476
    %1246 = vmatpush1.bf16.msra.mxu0 %v475
    %1247 = vmatprep.subr.bf16.mxu0 %v480
    %1248 = vmatpush1.bf16.msra.mxu0 %v479
    %1249 = vmatprep.subr.bf16.mxu0 %v484
    %1250 = vmatpush1.bf16.msra.mxu0 %v483
    %1251 = vmatprep.subr.bf16.mxu0 %v488
    %1252 = vmatpush1.bf16.msra.mxu0 %v487
    %1253 = vmatprep.subr.bf16.mxu0 %v492
    %1254 = vmatpush1.bf16.msra.mxu0 %v491
    %1255 = vmatprep.subr.bf16.mxu0 %v496
    %1256 = vmatpush1.bf16.msra.mxu0 %v495
    %1257 = vmatprep.subr.bf16.mxu0 %v500
    %1258 = vmatpush1.bf16.msra.mxu0 %v499
    %1259 = vmatprep.subr.bf16.mxu0 %v504
    %1260 = vmatpush1.bf16.msra.mxu0 %v503
    %1261 = vmatprep.subr.bf16.mxu0 %v508
    %1262 = vmatpush1.bf16.msra.mxu0 %v507
    %1263 = vmatprep.subr.bf16.mxu0 %v512
    %1264 = vmatpush1.bf16.msra.mxu0 %v511
    %1265 = vmatprep.mubr.bf16.mxu0 %v1232
    %1266 = vmatmul.mubr.bf16.gmra.mrb[0].mxu0 %v1231
    %v1267 = vpop.f32.mrb[0].mxu0
    %v1268 = vadd.f32 %v207, %v1267
    %v1269 = vpop.f32.mrb[0].mxu0
    %v1270 = vadd.f32 %v211, %v1269
    %v1271 = vpop.f32.mrb[0].mxu0
    %v1272 = vpop.f32.mrb[0].mxu0
    %1273 = vdwg.mxu0
    %1274 = vmatprep.subr.bf16.mxu0 %v454
    %1275 = vmatpush1.bf16.msra.mxu0 %v453
    %1276 = vmatprep.subr.bf16.mxu0 %v458
    %1277 = vmatpush1.bf16.msra.mxu0 %v457
    %1278 = vmatprep.subr.bf16.mxu0 %v462
    %1279 = vmatpush1.bf16.msra.mxu0 %v461
    %1280 = vmatprep.subr.bf16.mxu0 %v466
    %1281 = vmatpush1.bf16.msra.mxu0 %v465
    %1282 = vmatprep.subr.bf16.mxu0 %v470
    %1283 = vmatpush1.bf16.msra.mxu0 %v469
    %1284 = vmatprep.subr.bf16.mxu0 %v474
    %1285 = vmatpush1.bf16.msra.mxu0 %v473
    %1286 = vmatprep.subr.bf16.mxu0 %v478
    %1287 = vmatpush1.bf16.msra.mxu0 %v477
    %1288 = vmatprep.subr.bf16.mxu0 %v482
    %1289 = vmatpush1.bf16.msra.mxu0 %v481
    %1290 = vmatprep.subr.bf16.mxu0 %v486
    %1291 = vmatpush1.bf16.msra.mxu0 %v485
    %1292 = vmatprep.subr.bf16.mxu0 %v490
    %1293 = vmatpush1.bf16.msra.mxu0 %v489
    %1294 = vmatprep.subr.bf16.mxu0 %v494
    %1295 = vmatpush1.bf16.msra.mxu0 %v493
    %1296 = vmatprep.subr.bf16.mxu0 %v498
    %1297 = vmatpush1.bf16.msra.mxu0 %v497
    %1298 = vmatprep.subr.bf16.mxu0 %v502
    %1299 = vmatpush1.bf16.msra.mxu0 %v501
    %1300 = vmatprep.subr.bf16.mxu0 %v506
    %1301 = vmatpush1.bf16.msra.mxu0 %v505
    %1302 = vmatprep.subr.bf16.mxu0 %v510
    %1303 = vmatpush1.bf16.msra.mxu0 %v509
    %1304 = vmatprep.subr.bf16.mxu0 %v514
    %1305 = vmatpush1.bf16.msra.mxu0 %v513
    %1306 = vmatprep.mubr.bf16.mxu0 %v1232
    %1307 = vmatmul.mubr.bf16.gmra.mrb[0].mxu0 %v1231
    %v1308 = vpop.f32.mrb[0].mxu0
    %v1309 = vadd.f32 %v215, %v1308
    %v1310 = vpop.f32.mrb[0].mxu0
    %v1311 = vadd.f32 %v219, %v1310
    %v1312 = vpop.f32.mrb[0].mxu0
    %v1313 = vpop.f32.mrb[0].mxu0
    %1314 = vdwg.mxu0
    %v1315 = vxor.u32 %v1268, 2147483648
    %v1316 = vmul.f32 %v1315, 1.442695
    %v1317 = vpow.pop %v1316
    %v1318 = vadd.f32 %v1317, 1.0
    %v1319 = vrcp.pop %v1318
    %v1320 = vmul.f32 1.0, %v1319
    %v1321 = vxor.u32 %v1270, 2147483648
    %v1322 = vmul.f32 %v1321, 1.442695
    %v1323 = vpow.pop %v1322
    %v1324 = vadd.f32 %v1323, 1.0
    %v1325 = vrcp.pop %v1324
    %v1326 = vmul.f32 1.0, %v1325
    %v1327 = vtanh.pop %v1309
    %v1328 = vxor.u32 %v1311, 2147483648
    %v1329 = vmul.f32 %v1328, 1.442695
    %v1330 = vpow.pop %v1329
    %v1331 = vadd.f32 %v1330, 1.0
    %v1332 = vrcp.pop %v1331
    %v1333 = vmul.f32 1.0, %v1332
    %v1334 = vmul.f32 %v1326, %v1227
    %v1335 = vmul.f32 %v1320, %v1327
    %v1336 = vadd.f32 %v1334, %v1335
    %v1337 = vtanh.pop %v1336
    %v1338 = vmul.f32 %v1333, %v1337
    %s1339 = scalar_lea.vmem %s2, 28
    %v1340 = vld [vmem:[%s1339] sm:$0xf]
    %v1341 = vpack.c.bf16 %v1338, %v1338
    %1342 = vmatprep.subr.bf16.mxu0 %v452
    %1343 = vmatpush1.bf16.msra.mxu0 %v451
    %1344 = vmatprep.subr.bf16.mxu0 %v456
    %1345 = vmatpush1.bf16.msra.mxu0 %v455
    %1346 = vmatprep.subr.bf16.mxu0 %v460
    %1347 = vmatpush1.bf16.msra.mxu0 %v459
    %1348 = vmatprep.subr.bf16.mxu0 %v464
    %1349 = vmatpush1.bf16.msra.mxu0 %v463
    %1350 = vmatprep.subr.bf16.mxu0 %v468
    %1351 = vmatpush1.bf16.msra.mxu0 %v467
    %1352 = vmatprep.subr.bf16.mxu0 %v472
    %1353 = vmatpush1.bf16.msra.mxu0 %v471
    %1354 = vmatprep.subr.bf16.mxu0 %v476
    %1355 = vmatpush1.bf16.msra.mxu0 %v475
    %1356 = vmatprep.subr.bf16.mxu0 %v480
    %1357 = vmatpush1.bf16.msra.mxu0 %v479
    %1358 = vmatprep.subr.bf16.mxu0 %v484
    %1359 = vmatpush1.bf16.msra.mxu0 %v483
    %1360 = vmatprep.subr.bf16.mxu0 %v488
    %1361 = vmatpush1.bf16.msra.mxu0 %v487
    %1362 = vmatprep.subr.bf16.mxu0 %v492
    %1363 = vmatpush1.bf16.msra.mxu0 %v491
    %1364 = vmatprep.subr.bf16.mxu0 %v496
    %1365 = vmatpush1.bf16.msra.mxu0 %v495
    %1366 = vmatprep.subr.bf16.mxu0 %v500
    %1367 = vmatpush1.bf16.msra.mxu0 %v499
    %1368 = vmatprep.subr.bf16.mxu0 %v504
    %1369 = vmatpush1.bf16.msra.mxu0 %v503
    %1370 = vmatprep.subr.bf16.mxu0 %v508
    %1371 = vmatpush1.bf16.msra.mxu0 %v507
    %1372 = vmatprep.subr.bf16.mxu0 %v512
    %1373 = vmatpush1.bf16.msra.mxu0 %v511
    %1374 = vmatprep.mubr.bf16.mxu0 %v1341
    %1375 = vmatmul.mubr.bf16.gmra.mrb[0].mxu0 %v1340
    %v1376 = vpop.f32.mrb[0].mxu0
    %v1377 = vadd.f32 %v207, %v1376
    %v1378 = vpop.f32.mrb[0].mxu0
    %v1379 = vadd.f32 %v211, %v1378
    %v1380 = vpop.f32.mrb[0].mxu0
    %v1381 = vpop.f32.mrb[0].mxu0
    %1382 = vdwg.mxu0
    %1383 = vmatprep.subr.bf16.mxu0 %v454
    %1384 = vmatpush1.bf16.msra.mxu0 %v453
    %1385 = vmatprep.subr.bf16.mxu0 %v458
    %1386 = vmatpush1.bf16.msra.mxu0 %v457
    %1387 = vmatprep.subr.bf16.mxu0 %v462
    %1388 = vmatpush1.bf16.msra.mxu0 %v461
    %1389 = vmatprep.subr.bf16.mxu0 %v466
    %1390 = vmatpush1.bf16.msra.mxu0 %v465
    %1391 = vmatprep.subr.bf16.mxu0 %v470
    %1392 = vmatpush1.bf16.msra.mxu0 %v469
    %1393 = vmatprep.subr.bf16.mxu0 %v474
    %1394 = vmatpush1.bf16.msra.mxu0 %v473
    %1395 = vmatprep.subr.bf16.mxu0 %v478
    %1396 = vmatpush1.bf16.msra.mxu0 %v477
    %1397 = vmatprep.subr.bf16.mxu0 %v482
    %1398 = vmatpush1.bf16.msra.mxu0 %v481
    %1399 = vmatprep.subr.bf16.mxu0 %v486
    %1400 = vmatpush1.bf16.msra.mxu0 %v485
    %1401 = vmatprep.subr.bf16.mxu0 %v490
    %1402 = vmatpush1.bf16.msra.mxu0 %v489
    %1403 = vmatprep.subr.bf16.mxu0 %v494
    %1404 = vmatpush1.bf16.msra.mxu0 %v493
    %1405 = vmatprep.subr.bf16.mxu0 %v498
    %1406 = vmatpush1.bf16.msra.mxu0 %v497
    %1407 = vmatprep.subr.bf16.mxu0 %v502
    %1408 = vmatpush1.bf16.msra.mxu0 %v501
    %1409 = vmatprep.subr.bf16.mxu0 %v506
    %1410 = vmatpush1.bf16.msra.mxu0 %v505
    %1411 = vmatprep.subr.bf16.mxu0 %v510
    %1412 = vmatpush1.bf16.msra.mxu0 %v509
    %1413 = vmatprep.subr.bf16.mxu0 %v514
    %1414 = vmatpush1.bf16.msra.mxu0 %v513
    %1415 = vmatprep.mubr.bf16.mxu0 %v1341
    %1416 = vmatmul.mubr.bf16.gmra.mrb[0].mxu0 %v1340
    %v1417 = vpop.f32.mrb[0].mxu0
    %v1418 = vadd.f32 %v215, %v1417
    %v1419 = vpop.f32.mrb[0].mxu0
    %v1420 = vadd.f32 %v219, %v1419
    %v1421 = vpop.f32.mrb[0].mxu0
    %v1422 = vpop.f32.mrb[0].mxu0
    %1423 = vdwg.mxu0
    %v1424 = vxor.u32 %v1377, 2147483648
    %v1425 = vmul.f32 %v1424, 1.442695
    %v1426 = vpow.pop %v1425
    %v1427 = vadd.f32 %v1426, 1.0
    %v1428 = vrcp.pop %v1427
    %v1429 = vmul.f32 1.0, %v1428
    %v1430 = vxor.u32 %v1379, 2147483648
    %v1431 = vmul.f32 %v1430, 1.442695
    %v1432 = vpow.pop %v1431
    %v1433 = vadd.f32 %v1432, 1.0
    %v1434 = vrcp.pop %v1433
    %v1435 = vmul.f32 1.0, %v1434
    %v1436 = vtanh.pop %v1418
    %v1437 = vxor.u32 %v1420, 2147483648
    %v1438 = vmul.f32 %v1437, 1.442695
    %v1439 = vpow.pop %v1438
    %v1440 = vadd.f32 %v1439, 1.0
    %v1441 = vrcp.pop %v1440
    %v1442 = vmul.f32 1.0, %v1441
    %v1443 = vmul.f32 %v1435, %v1336
    %v1444 = vmul.f32 %v1429, %v1436
    %v1445 = vadd.f32 %v1443, %v1444
    %v1446 = vtanh.pop %v1445
    %v1447 = vmul.f32 %v1442, %v1446
    %1448 = vst [vmem:[%s9] sm:$0xff] 0.0
    %vm1449 = vcmp.eq.s32.totalorder %v256, 0
    %s1450 = sld [smem:[#allocation2]]
    %v1451 = vstv %s1450
    %v1452 = vsel %vm1449, %v1451, 128
    %vm1453 = vcmp.eq.s32.totalorder %v256, 1
    %s1454 = sld [smem:[#allocation2 + $0x1]]
    %v1455 = vstv %s1454
    %v1456 = vsel %vm1453, %v1455, %v1452
    %vm1457 = vcmp.eq.s32.totalorder %v254, %v1456
    %v1458 = vsel %vm1457, 1.0, 0.0
    %v1459 = vpack.c.bf16 %v1458, %v1458
    %v1460 = vpack.c.bf16 %v1447, %v1447
    %v1525 = vunpack.c.l.b16 %v122
    %v1526 = vunpack.c.h.b16 %v122
    %v1527 = vunpack.c.l.b16 %v123
    %v1528 = vunpack.c.h.b16 %v123
    %v1529 = vunpack.c.l.b16 %v124
    %v1530 = vunpack.c.h.b16 %v124
    %v1531 = vunpack.c.l.b16 %v125
    %v1532 = vunpack.c.h.b16 %v125
    %v1533 = vunpack.c.l.b16 %v126
    %v1534 = vunpack.c.h.b16 %v126
    %v1535 = vunpack.c.l.b16 %v127
    %v1536 = vunpack.c.h.b16 %v127
    %v1537 = vunpack.c.l.b16 %v128
    %v1538 = vunpack.c.h.b16 %v128
    %v1539 = vunpack.c.l.b16 %v129
    %v1540 = vunpack.c.h.b16 %v129
    %v1541 = vunpack.c.l.b16 %v130
    %v1542 = vunpack.c.h.b16 %v130
    %v1543 = vunpack.c.l.b16 %v131
    %v1544 = vunpack.c.h.b16 %v131
    %v1545 = vunpack.c.l.b16 %v132
    %v1546 = vunpack.c.h.b16 %v132
    %v1547 = vunpack.c.l.b16 %v133
    %v1548 = vunpack.c.h.b16 %v133
    %v1549 = vunpack.c.l.b16 %v134
    %v1550 = vunpack.c.h.b16 %v134
    %v1551 = vunpack.c.l.b16 %v135
    %v1552 = vunpack.c.h.b16 %v135
    %v1553 = vunpack.c.l.b16 %v136
    %v1554 = vunpack.c.h.b16 %v136
    %v1555 = vunpack.c.l.b16 %v137
    %v1556 = vunpack.c.h.b16 %v137
    %v1557 = vunpack.c.l.b16 %v138
    %v1558 = vunpack.c.h.b16 %v138
    %v1559 = vunpack.c.l.b16 %v139
    %v1560 = vunpack.c.h.b16 %v139
    %v1561 = vunpack.c.l.b16 %v140
    %v1562 = vunpack.c.h.b16 %v140
    %v1563 = vunpack.c.l.b16 %v141
    %v1564 = vunpack.c.h.b16 %v141
    %v1565 = vunpack.c.l.b16 %v142
    %v1566 = vunpack.c.h.b16 %v142
    %v1567 = vunpack.c.l.b16 %v143
    %v1568 = vunpack.c.h.b16 %v143
    %v1569 = vunpack.c.l.b16 %v144
    %v1570 = vunpack.c.h.b16 %v144
    %v1571 = vunpack.c.l.b16 %v145
    %v1572 = vunpack.c.h.b16 %v145
    %v1573 = vunpack.c.l.b16 %v146
    %v1574 = vunpack.c.h.b16 %v146
    %v1575 = vunpack.c.l.b16 %v147
    %v1576 = vunpack.c.h.b16 %v147
    %v1577 = vunpack.c.l.b16 %v148
    %v1578 = vunpack.c.h.b16 %v148
    %v1579 = vunpack.c.l.b16 %v149
    %v1580 = vunpack.c.h.b16 %v149
    %v1581 = vunpack.c.l.b16 %v150
    %v1582 = vunpack.c.h.b16 %v150
    %v1583 = vunpack.c.l.b16 %v151
    %v1584 = vunpack.c.h.b16 %v151
    %v1585 = vunpack.c.l.b16 %v152
    %v1586 = vunpack.c.h.b16 %v152
    %v1587 = vunpack.c.l.b16 %v153
    %v1588 = vunpack.c.h.b16 %v153
    %v1589 = vunpack.c.l.b16 %v154
    %v1590 = vunpack.c.h.b16 %v154
    %v1591 = vunpack.c.l.b16 %v155
    %v1592 = vunpack.c.h.b16 %v155
    %v1593 = vunpack.c.l.b16 %v156
    %v1594 = vunpack.c.h.b16 %v156
    %v1595 = vunpack.c.l.b16 %v157
    %v1596 = vunpack.c.h.b16 %v157
    %v1597 = vunpack.c.l.b16 %v158
    %v1598 = vunpack.c.h.b16 %v158
    %v1599 = vunpack.c.l.b16 %v159
    %v1600 = vunpack.c.h.b16 %v159
    %v1601 = vunpack.c.l.b16 %v160
    %v1602 = vunpack.c.h.b16 %v160
    %v1603 = vunpack.c.l.b16 %v161
    %v1604 = vunpack.c.h.b16 %v161
    %v1605 = vunpack.c.l.b16 %v162
    %v1606 = vunpack.c.h.b16 %v162
    %v1607 = vunpack.c.l.b16 %v163
    %v1608 = vunpack.c.h.b16 %v163
    %v1609 = vunpack.c.l.b16 %v164
    %v1610 = vunpack.c.h.b16 %v164
    %v1611 = vunpack.c.l.b16 %v165
    %v1612 = vunpack.c.h.b16 %v165
    %v1613 = vunpack.c.l.b16 %v166
    %v1614 = vunpack.c.h.b16 %v166
    %v1615 = vunpack.c.l.b16 %v167
    %v1616 = vunpack.c.h.b16 %v167
    %v1617 = vunpack.c.l.b16 %v168
    %v1618 = vunpack.c.h.b16 %v168
    %v1619 = vunpack.c.l.b16 %v169
    %v1620 = vunpack.c.h.b16 %v169
    %v1621 = vunpack.c.l.b16 %v170
    %v1622 = vunpack.c.h.b16 %v170
    %v1623 = vunpack.c.l.b16 %v171
    %v1624 = vunpack.c.h.b16 %v171
    %v1625 = vunpack.c.l.b16 %v172
    %v1626 = vunpack.c.h.b16 %v172
    %v1627 = vunpack.c.l.b16 %v173
    %v1628 = vunpack.c.h.b16 %v173
    %v1629 = vunpack.c.l.b16 %v174
    %v1630 = vunpack.c.h.b16 %v174
    %v1631 = vunpack.c.l.b16 %v175
    %v1632 = vunpack.c.h.b16 %v175
    %v1633 = vunpack.c.l.b16 %v176
    %v1634 = vunpack.c.h.b16 %v176
    %v1635 = vunpack.c.l.b16 %v177
    %v1636 = vunpack.c.h.b16 %v177
    %v1637 = vunpack.c.l.b16 %v178
    %v1638 = vunpack.c.h.b16 %v178
    %v1639 = vunpack.c.l.b16 %v179
    %v1640 = vunpack.c.h.b16 %v179
    %v1641 = vunpack.c.l.b16 %v180
    %v1642 = vunpack.c.h.b16 %v180
    %v1643 = vunpack.c.l.b16 %v181
    %v1644 = vunpack.c.h.b16 %v181
    %v1645 = vunpack.c.l.b16 %v182
    %v1646 = vunpack.c.h.b16 %v182
    %v1647 = vunpack.c.l.b16 %v183
    %v1648 = vunpack.c.h.b16 %v183
    %v1649 = vunpack.c.l.b16 %v184
    %v1650 = vunpack.c.h.b16 %v184
    %v1651 = vunpack.c.l.b16 %v185
    %v1652 = vunpack.c.h.b16 %v185
    %v1653 = vpack.c.b16 %v1529, %v1525
    %v1654 = vpack.c.b16 %v1530, %v1526
    %v1655 = vpack.c.b16 %v1531, %v1527
    %v1656 = vpack.c.b16 %v1532, %v1528
    %v1657 = vpack.c.b16 %v1537, %v1533
    %v1658 = vpack.c.b16 %v1538, %v1534
    %v1659 = vpack.c.b16 %v1539, %v1535
    %v1660 = vpack.c.b16 %v1540, %v1536
    %v1661 = vpack.c.b16 %v1545, %v1541
    %v1662 = vpack.c.b16 %v1546, %v1542
    %v1663 = vpack.c.b16 %v1547, %v1543
    %v1664 = vpack.c.b16 %v1548, %v1544
    %v1665 = vpack.c.b16 %v1553, %v1549
    %v1666 = vpack.c.b16 %v1554, %v1550
    %v1667 = vpack.c.b16 %v1555, %v1551
    %v1668 = vpack.c.b16 %v1556, %v1552
    %v1669 = vpack.c.b16 %v1561, %v1557
    %v1670 = vpack.c.b16 %v1562, %v1558
    %v1671 = vpack.c.b16 %v1563, %v1559
    %v1672 = vpack.c.b16 %v1564, %v1560
    %v1673 = vpack.c.b16 %v1569, %v1565
    %v1674 = vpack.c.b16 %v1570, %v1566
    %v1675 = vpack.c.b16 %v1571, %v1567
    %v1676 = vpack.c.b16 %v1572, %v1568
    %v1677 = vpack.c.b16 %v1577, %v1573
    %v1678 = vpack.c.b16 %v1578, %v1574
    %v1679 = vpack.c.b16 %v1579, %v1575
    %v1680 = vpack.c.b16 %v1580, %v1576
    %v1681 = vpack.c.b16 %v1585, %v1581
    %v1682 = vpack.c.b16 %v1586, %v1582
    %v1683 = vpack.c.b16 %v1587, %v1583
    %v1684 = vpack.c.b16 %v1588, %v1584
    %v1685 = vpack.c.b16 %v1593, %v1589
    %v1686 = vpack.c.b16 %v1594, %v1590
    %v1687 = vpack.c.b16 %v1595, %v1591
    %v1688 = vpack.c.b16 %v1596, %v1592
    %v1689 = vpack.c.b16 %v1601, %v1597
    %v1690 = vpack.c.b16 %v1602, %v1598
    %v1691 = vpack.c.b16 %v1603, %v1599
    %v1692 = vpack.c.b16 %v1604, %v1600
    %v1693 = vpack.c.b16 %v1609, %v1605
    %v1694 = vpack.c.b16 %v1610, %v1606
    %v1695 = vpack.c.b16 %v1611, %v1607
    %v1696 = vpack.c.b16 %v1612, %v1608
    %v1697 = vpack.c.b16 %v1617, %v1613
    %v1698 = vpack.c.b16 %v1618, %v1614
    %v1699 = vpack.c.b16 %v1619, %v1615
    %v1700 = vpack.c.b16 %v1620, %v1616
    %v1701 = vpack.c.b16 %v1625, %v1621
    %v1702 = vpack.c.b16 %v1626, %v1622
    %v1703 = vpack.c.b16 %v1627, %v1623
    %v1704 = vpack.c.b16 %v1628, %v1624
    %v1705 = vpack.c.b16 %v1633, %v1629
    %v1706 = vpack.c.b16 %v1634, %v1630
    %v1707 = vpack.c.b16 %v1635, %v1631
    %v1708 = vpack.c.b16 %v1636, %v1632
    %v1709 = vpack.c.b16 %v1641, %v1637
    %v1710 = vpack.c.b16 %v1642, %v1638
    %v1711 = vpack.c.b16 %v1643, %v1639
    %v1712 = vpack.c.b16 %v1644, %v1640
    %v1713 = vpack.c.b16 %v1649, %v1645
    %v1714 = vpack.c.b16 %v1650, %v1646
    %v1715 = vpack.c.b16 %v1651, %v1647
    %v1716 = vpack.c.b16 %v1652, %v1648
    %1781 = vmatprep.subr.bf16.mxu0 %v1654
    %1782 = vmatpush1.bf16.msra.mxu0 %v1653
    %1783 = vmatprep.subr.bf16.mxu0 %v1658
    %1784 = vmatpush1.bf16.msra.mxu0 %v1657
    %1785 = vmatprep.subr.bf16.mxu0 %v1662
    %1786 = vmatpush1.bf16.msra.mxu0 %v1661
    %1787 = vmatprep.subr.bf16.mxu0 %v1666
    %1788 = vmatpush1.bf16.msra.mxu0 %v1665
    %1789 = vmatprep.subr.bf16.mxu0 %v1670
    %1790 = vmatpush1.bf16.msra.mxu0 %v1669
    %1791 = vmatprep.subr.bf16.mxu0 %v1674
    %1792 = vmatpush1.bf16.msra.mxu0 %v1673
    %1793 = vmatprep.subr.bf16.mxu0 %v1678
    %1794 = vmatpush1.bf16.msra.mxu0 %v1677
    %1795 = vmatprep.subr.bf16.mxu0 %v1682
    %1796 = vmatpush1.bf16.msra.mxu0 %v1681
    %1797 = vmatprep.subr.bf16.mxu0 %v1686
    %1798 = vmatpush1.bf16.msra.mxu0 %v1685
    %1799 = vmatprep.subr.bf16.mxu0 %v1690
    %1800 = vmatpush1.bf16.msra.mxu0 %v1689
    %1801 = vmatprep.subr.bf16.mxu0 %v1694
    %1802 = vmatpush1.bf16.msra.mxu0 %v1693
    %1803 = vmatprep.subr.bf16.mxu0 %v1698
    %1804 = vmatpush1.bf16.msra.mxu0 %v1697
    %1805 = vmatprep.subr.bf16.mxu0 %v1702
    %1806 = vmatpush1.bf16.msra.mxu0 %v1701
    %1807 = vmatprep.subr.bf16.mxu0 %v1706
    %1808 = vmatpush1.bf16.msra.mxu0 %v1705
    %1809 = vmatprep.subr.bf16.mxu0 %v1710
    %1810 = vmatpush1.bf16.msra.mxu0 %v1709
    %1811 = vmatprep.subr.bf16.mxu0 %v1714
    %1812 = vmatpush1.bf16.msra.mxu0 %v1713
    %1813 = vmatprep.mubr.bf16.mxu0 %v1460
    %1814 = vmatmul.mubr.bf16.gmra.mrb[0].mxu0 %v1459
    %v1815 = vpop.f32.mrb[0].mxu0
    %v1816 = vadd.f32 %v229, %v1815
    %v1817 = vpop.f32.mrb[0].mxu0
    %v1818 = vadd.f32 %v233, %v1817
    %v1819 = vpop.f32.mrb[0].mxu0
    %v1820 = vpop.f32.mrb[0].mxu0
    %1821 = vdwg.mxu0
    %1822 = vmatprep.subr.bf16.mxu0 %v1656
    %1823 = vmatpush1.bf16.msra.mxu0 %v1655
    %1824 = vmatprep.subr.bf16.mxu0 %v1660
    %1825 = vmatpush1.bf16.msra.mxu0 %v1659
    %1826 = vmatprep.subr.bf16.mxu0 %v1664
    %1827 = vmatpush1.bf16.msra.mxu0 %v1663
    %1828 = vmatprep.subr.bf16.mxu0 %v1668
    %1829 = vmatpush1.bf16.msra.mxu0 %v1667
    %1830 = vmatprep.subr.bf16.mxu0 %v1672
    %1831 = vmatpush1.bf16.msra.mxu0 %v1671
    %1832 = vmatprep.subr.bf16.mxu0 %v1676
    %1833 = vmatpush1.bf16.msra.mxu0 %v1675
    %1834 = vmatprep.subr.bf16.mxu0 %v1680
    %1835 = vmatpush1.bf16.msra.mxu0 %v1679
    %1836 = vmatprep.subr.bf16.mxu0 %v1684
    %1837 = vmatpush1.bf16.msra.mxu0 %v1683
    %1838 = vmatprep.subr.bf16.mxu0 %v1688
    %1839 = vmatpush1.bf16.msra.mxu0 %v1687
    %1840 = vmatprep.subr.bf16.mxu0 %v1692
    %1841 = vmatpush1.bf16.msra.mxu0 %v1691
    %1842 = vmatprep.subr.bf16.mxu0 %v1696
    %1843 = vmatpush1.bf16.msra.mxu0 %v1695
    %1844 = vmatprep.subr.bf16.mxu0 %v1700
    %1845 = vmatpush1.bf16.msra.mxu0 %v1699
    %1846 = vmatprep.subr.bf16.mxu0 %v1704
    %1847 = vmatpush1.bf16.msra.mxu0 %v1703
    %1848 = vmatprep.subr.bf16.mxu0 %v1708
    %1849 = vmatpush1.bf16.msra.mxu0 %v1707
    %1850 = vmatprep.subr.bf16.mxu0 %v1712
    %1851 = vmatpush1.bf16.msra.mxu0 %v1711
    %1852 = vmatprep.subr.bf16.mxu0 %v1716
    %1853 = vmatpush1.bf16.msra.mxu0 %v1715
    %1854 = vmatprep.mubr.bf16.mxu0 %v1460
    %1855 = vmatmul.mubr.bf16.gmra.mrb[0].mxu0 %v1459
    %v1856 = vpop.f32.mrb[0].mxu0
    %v1857 = vadd.f32 %v237, %v1856
    %v1858 = vpop.f32.mrb[0].mxu0
    %v1859 = vadd.f32 %v241, %v1858
    %v1860 = vpop.f32.mrb[0].mxu0
    %v1861 = vpop.f32.mrb[0].mxu0
    %1862 = vdwg.mxu0
    %v1863 = vxor.u32 %v1816, 2147483648
    %v1864 = vmul.f32 %v1863, 1.442695
    %v1865 = vpow.pop %v1864
    %v1866 = vadd.f32 %v1865, 1.0
    %v1867 = vrcp.pop %v1866
    %v1868 = vmul.f32 1.0, %v1867
    %v1869 = vxor.u32 %v1818, 2147483648
    %v1870 = vmul.f32 %v1869, 1.442695
    %v1871 = vpow.pop %v1870
    %v1872 = vadd.f32 %v1871, 1.0
    %v1873 = vrcp.pop %v1872
    %v1874 = vmul.f32 1.0, %v1873
    %v1875 = vtanh.pop %v1857
    %v1876 = vxor.u32 %v1859, 2147483648
    %v1877 = vmul.f32 %v1876, 1.442695
    %v1878 = vpow.pop %v1877
    %v1879 = vadd.f32 %v1878, 1.0
    %v1880 = vrcp.pop %v1879
    %v1881 = vmul.f32 1.0, %v1880
    %v1882 = vmul.f32 %v1874, %v1445
    %v1883 = vmul.f32 %v1868, %v1875
    %v1884 = vadd.f32 %v1882, %v1883
    %v1885 = vtanh.pop %v1884
    %v1886 = vmul.f32 %v1881, %v1885
    %v1887 = vpack.c.bf16 %v1886, %v1886
    %v1904 = vunpack.c.l.b16 %v186
    %v1905 = vunpack.c.l.b16 %v187
    %v1906 = vunpack.c.l.b16 %v188
    %v1907 = vunpack.c.l.b16 %v189
    %v1908 = vunpack.c.l.b16 %v190
    %v1909 = vunpack.c.l.b16 %v191
    %v1910 = vunpack.c.l.b16 %v192
    %v1911 = vunpack.c.l.b16 %v193
    %v1912 = vunpack.c.l.b16 %v194
    %v1913 = vunpack.c.l.b16 %v195
    %v1914 = vunpack.c.l.b16 %v196
    %v1915 = vunpack.c.l.b16 %v197
    %v1916 = vunpack.c.l.b16 %v198
    %v1917 = vunpack.c.l.b16 %v199
    %v1918 = vunpack.c.l.b16 %v200
    %v1919 = vunpack.c.l.b16 %v201
    %v1920 = vpack.c.b16 %v1905, %v1904
    %v1921 = vpack.c.b16 %v1907, %v1906
    %v1922 = vpack.c.b16 %v1909, %v1908
    %v1923 = vpack.c.b16 %v1911, %v1910
    %v1924 = vpack.c.b16 %v1913, %v1912
    %v1925 = vpack.c.b16 %v1915, %v1914
    %v1926 = vpack.c.b16 %v1917, %v1916
    %v1927 = vpack.c.b16 %v1919, %v1918
    %1936 = vmatprep.subr.bf16.mxu0 0
    %1937 = vmatpush1.bf16.msra.mxu0 %v1920
    %1938 = vmatprep.subr.bf16.mxu0 0
    %1939 = vmatpush1.bf16.msra.mxu0 %v1921
    %1940 = vmatprep.subr.bf16.mxu0 0
    %1941 = vmatpush1.bf16.msra.mxu0 %v1922
    %1942 = vmatprep.subr.bf16.mxu0 0
    %1943 = vmatpush1.bf16.msra.mxu0 %v1923
    %1944 = vmatprep.subr.bf16.mxu0 0
    %1945 = vmatpush1.bf16.msra.mxu0 %v1924
    %1946 = vmatprep.subr.bf16.mxu0 0
    %1947 = vmatpush1.bf16.msra.mxu0 %v1925
    %1948 = vmatprep.subr.bf16.mxu0 0
    %1949 = vmatpush1.bf16.msra.mxu0 %v1926
    %1950 = vmatprep.subr.bf16.mxu0 0
    %1951 = vmatpush1.bf16.msra.mxu0 %v1927
    %1952 = vmatprep.subr.bf16.mxu0 0
    %1953 = vmatpush1.bf16.msra.mxu0 0
    %1954 = vmatprep.subr.bf16.mxu0 0
    %1955 = vmatpush1.bf16.msra.mxu0 0
    %1956 = vmatprep.subr.bf16.mxu0 0
    %1957 = vmatpush1.bf16.msra.mxu0 0
    %1958 = vmatprep.subr.bf16.mxu0 0
    %1959 = vmatpush1.bf16.msra.mxu0 0
    %1960 = vmatprep.subr.bf16.mxu0 0
    %1961 = vmatpush1.bf16.msra.mxu0 0
    %1962 = vmatprep.subr.bf16.mxu0 0
    %1963 = vmatpush1.bf16.msra.mxu0 0
    %1964 = vmatprep.subr.bf16.mxu0 0
    %1965 = vmatpush1.bf16.msra.mxu0 0
    %1966 = vmatprep.subr.bf16.mxu0 0
    %1967 = vmatpush1.bf16.msra.mxu0 0
    %1968 = vmatprep.mubr.bf16.mxu0 0
    %1969 = vmatmul.mubr.bf16.gmra.mrb[0].mxu0 %v1887
    %v1970 = vpop.f32.mrb[0].mxu0
    %v1971 = vadd.f32 %v251, %v1970
    %v1972 = vpop.f32.mrb[0].mxu0
    %v1973 = vpop.f32.mrb[0].mxu0
    %v1974 = vpop.f32.mrb[0].mxu0
    %1975 = vdwg.mxu0
    %s1976 = scalar_lea.vmem %s9, 8
    %1977 = vst [vmem:[%s1976] sm:$0xff] %v1971
    %v1978 = vsel %vm257, %v1971, -1e+30
    %1979 = vmax.xlane.f32.xlu0 %v1978
    %v1980 = vpop.xlane.xlu0 %1979
    %vm1981 = vcmp.eq.f32.partialorder %v1978, %v1980
    %v1982 = vsel %vm1981, %v254, 128
    %v1983 = vand.u32 %v1982, 65535
    %v1984 = vshra.s32 %v1982, 16
    %v1985 = vcvt.s32.f32 %v1983
    %v1986 = vcvt.s32.f32 %v1984
    %1987 = vmin.xlane.f32.xlu0 %v1986
    %v1988 = vpop.xlane.xlu0 %1987
    %vm1989 = vcmp.eq.f32.partialorder %v1986, %v1988
    %v1990 = vsel %vm1989, %v1985, inf
    %1991 = vmin.xlane.f32.xlu0 %v1990
    %v1992 = vpop.xlane.xlu0 %1991
    %v1993 = vcvt.f32.s32 %v1992
    %v1994 = vcvt.f32.s32 %v1988
    %v1995 = vshll.u32 %v1994, 16
    %v1996 = vadd.s32 %v1995, %v1993
    %s1997 = sld [smem:[#allocation4 + $0x1]]
    %s1998 = sld [smem:[#allocation2 + $0x2]]
    %v1999 = vstv %s1998
    %v2000 = vsel %vm1449, %v1999, 128
    %s2001 = sld [smem:[#allocation2 + $0x3]]
    %v2002 = vstv %s2001
    %v2003 = vsel %vm1453, %v2002, %v2000
    %v2004 = vstv %s1997
    %v2005 = vmul.u32 %v2004, %v2003
    %s2006 = ssub.s32 1, %s1997
    %v2007 = vstv %s2006
    %v2008 = vmul.u32 %v2007, %v1996
    %v2009 = vadd.s32 %v2005, %v2008
    %vm2010 = vcmp.eq.s32.totalorder %v254, %v2009
    %v2011 = vsel %vm2010, 1.0, 0.0
    %v2012 = vpack.c.bf16 %v2011, %v2011
    %2013 = vmatprep.subr.bf16.mxu0 %v1654
    %2014 = vmatpush1.bf16.msra.mxu0 %v1653
    %2015 = vmatprep.subr.bf16.mxu0 %v1658
    %2016 = vmatpush1.bf16.msra.mxu0 %v1657
    %2017 = vmatprep.subr.bf16.mxu0 %v1662
    %2018 = vmatpush1.bf16.msra.mxu0 %v1661
    %2019 = vmatprep.subr.bf16.mxu0 %v1666
    %2020 = vmatpush1.bf16.msra.mxu0 %v1665
    %2021 = vmatprep.subr.bf16.mxu0 %v1670
    %2022 = vmatpush1.bf16.msra.mxu0 %v1669
    %2023 = vmatprep.subr.bf16.mxu0 %v1674
    %2024 = vmatpush1.bf16.msra.mxu0 %v1673
    %2025 = vmatprep.subr.bf16.mxu0 %v1678
    %2026 = vmatpush1.bf16.msra.mxu0 %v1677
    %2027 = vmatprep.subr.bf16.mxu0 %v1682
    %2028 = vmatpush1.bf16.msra.mxu0 %v1681
    %2029 = vmatprep.subr.bf16.mxu0 %v1686
    %2030 = vmatpush1.bf16.msra.mxu0 %v1685
    %2031 = vmatprep.subr.bf16.mxu0 %v1690
    %2032 = vmatpush1.bf16.msra.mxu0 %v1689
    %2033 = vmatprep.subr.bf16.mxu0 %v1694
    %2034 = vmatpush1.bf16.msra.mxu0 %v1693
    %2035 = vmatprep.subr.bf16.mxu0 %v1698
    %2036 = vmatpush1.bf16.msra.mxu0 %v1697
    %2037 = vmatprep.subr.bf16.mxu0 %v1702
    %2038 = vmatpush1.bf16.msra.mxu0 %v1701
    %2039 = vmatprep.subr.bf16.mxu0 %v1706
    %2040 = vmatpush1.bf16.msra.mxu0 %v1705
    %2041 = vmatprep.subr.bf16.mxu0 %v1710
    %2042 = vmatpush1.bf16.msra.mxu0 %v1709
    %2043 = vmatprep.subr.bf16.mxu0 %v1714
    %2044 = vmatpush1.bf16.msra.mxu0 %v1713
    %2045 = vmatprep.mubr.bf16.mxu0 %v1887
    %2046 = vmatmul.mubr.bf16.gmra.mrb[0].mxu0 %v2012
    %v2047 = vpop.f32.mrb[0].mxu0
    %v2048 = vadd.f32 %v229, %v2047
    %v2049 = vpop.f32.mrb[0].mxu0
    %v2050 = vadd.f32 %v233, %v2049
    %v2051 = vpop.f32.mrb[0].mxu0
    %v2052 = vpop.f32.mrb[0].mxu0
    %2053 = vdwg.mxu0
    %2054 = vmatprep.subr.bf16.mxu0 %v1656
    %2055 = vmatpush1.bf16.msra.mxu0 %v1655
    %2056 = vmatprep.subr.bf16.mxu0 %v1660
    %2057 = vmatpush1.bf16.msra.mxu0 %v1659
    %2058 = vmatprep.subr.bf16.mxu0 %v1664
    %2059 = vmatpush1.bf16.msra.mxu0 %v1663
    %2060 = vmatprep.subr.bf16.mxu0 %v1668
    %2061 = vmatpush1.bf16.msra.mxu0 %v1667
    %2062 = vmatprep.subr.bf16.mxu0 %v1672
    %2063 = vmatpush1.bf16.msra.mxu0 %v1671
    %2064 = vmatprep.subr.bf16.mxu0 %v1676
    %2065 = vmatpush1.bf16.msra.mxu0 %v1675
    %2066 = vmatprep.subr.bf16.mxu0 %v1680
    %2067 = vmatpush1.bf16.msra.mxu0 %v1679
    %2068 = vmatprep.subr.bf16.mxu0 %v1684
    %2069 = vmatpush1.bf16.msra.mxu0 %v1683
    %2070 = vmatprep.subr.bf16.mxu0 %v1688
    %2071 = vmatpush1.bf16.msra.mxu0 %v1687
    %2072 = vmatprep.subr.bf16.mxu0 %v1692
    %2073 = vmatpush1.bf16.msra.mxu0 %v1691
    %2074 = vmatprep.subr.bf16.mxu0 %v1696
    %2075 = vmatpush1.bf16.msra.mxu0 %v1695
    %2076 = vmatprep.subr.bf16.mxu0 %v1700
    %2077 = vmatpush1.bf16.msra.mxu0 %v1699
    %2078 = vmatprep.subr.bf16.mxu0 %v1704
    %2079 = vmatpush1.bf16.msra.mxu0 %v1703
    %2080 = vmatprep.subr.bf16.mxu0 %v1708
    %2081 = vmatpush1.bf16.msra.mxu0 %v1707
    %2082 = vmatprep.subr.bf16.mxu0 %v1712
    %2083 = vmatpush1.bf16.msra.mxu0 %v1711
    %2084 = vmatprep.subr.bf16.mxu0 %v1716
    %2085 = vmatpush1.bf16.msra.mxu0 %v1715
    %2086 = vmatprep.mubr.bf16.mxu0 %v1887
    %2087 = vmatmul.mubr.bf16.gmra.mrb[0].mxu0 %v2012
    %v2088 = vpop.f32.mrb[0].mxu0
    %v2089 = vadd.f32 %v237, %v2088
    %v2090 = vpop.f32.mrb[0].mxu0
    %v2091 = vadd.f32 %v241, %v2090
    %v2092 = vpop.f32.mrb[0].mxu0
    %v2093 = vpop.f32.mrb[0].mxu0
    %2094 = vdwg.mxu0
    %v2095 = vxor.u32 %v2048, 2147483648
    %v2096 = vmul.f32 %v2095, 1.442695
    %v2097 = vpow.pop %v2096
    %v2098 = vadd.f32 %v2097, 1.0
    %v2099 = vrcp.pop %v2098
    %v2100 = vmul.f32 1.0, %v2099
    %v2101 = vxor.u32 %v2050, 2147483648
    %v2102 = vmul.f32 %v2101, 1.442695
    %v2103 = vpow.pop %v2102
    %v2104 = vadd.f32 %v2103, 1.0
    %v2105 = vrcp.pop %v2104
    %v2106 = vmul.f32 1.0, %v2105
    %v2107 = vtanh.pop %v2089
    %v2108 = vxor.u32 %v2091, 2147483648
    %v2109 = vmul.f32 %v2108, 1.442695
    %v2110 = vpow.pop %v2109
    %v2111 = vadd.f32 %v2110, 1.0
    %v2112 = vrcp.pop %v2111
    %v2113 = vmul.f32 1.0, %v2112
    %v2114 = vmul.f32 %v2106, %v1884
    %v2115 = vmul.f32 %v2100, %v2107
    %v2116 = vadd.f32 %v2114, %v2115
    %v2117 = vtanh.pop %v2116
    %v2118 = vmul.f32 %v2113, %v2117
    %v2119 = vpack.c.bf16 %v2118, %v2118
    %2120 = vmatprep.subr.bf16.mxu0 0
    %2121 = vmatpush1.bf16.msra.mxu0 %v1920
    %2122 = vmatprep.subr.bf16.mxu0 0
    %2123 = vmatpush1.bf16.msra.mxu0 %v1921
    %2124 = vmatprep.subr.bf16.mxu0 0
    %2125 = vmatpush1.bf16.msra.mxu0 %v1922
    %2126 = vmatprep.subr.bf16.mxu0 0
    %2127 = vmatpush1.bf16.msra.mxu0 %v1923
    %2128 = vmatprep.subr.bf16.mxu0 0
    %2129 = vmatpush1.bf16.msra.mxu0 %v1924
    %2130 = vmatprep.subr.bf16.mxu0 0
    %2131 = vmatpush1.bf16.msra.mxu0 %v1925
    %2132 = vmatprep.subr.bf16.mxu0 0
    %2133 = vmatpush1.bf16.msra.mxu0 %v1926
    %2134 = vmatprep.subr.bf16.mxu0 0
    %2135 = vmatpush1.bf16.msra.mxu0 %v1927
    %2136 = vmatprep.subr.bf16.mxu0 0
    %2137 = vmatpush1.bf16.msra.mxu0 0
    %2138 = vmatprep.subr.bf16.mxu0 0
    %2139 = vmatpush1.bf16.msra.mxu0 0
    %2140 = vmatprep.subr.bf16.mxu0 0
    %2141 = vmatpush1.bf16.msra.mxu0 0
    %2142 = vmatprep.subr.bf16.mxu0 0
    %2143 = vmatpush1.bf16.msra.mxu0 0
    %2144 = vmatprep.subr.bf16.mxu0 0
    %2145 = vmatpush1.bf16.msra.mxu0 0
    %2146 = vmatprep.subr.bf16.mxu0 0
    %2147 = vmatpush1.bf16.msra.mxu0 0
    %2148 = vmatprep.subr.bf16.mxu0 0
    %2149 = vmatpush1.bf16.msra.mxu0 0
    %2150 = vmatprep.subr.bf16.mxu0 0
    %2151 = vmatpush1.bf16.msra.mxu0 0
    %2152 = vmatprep.mubr.bf16.mxu0 0
    %2153 = vmatmul.mubr.bf16.gmra.mrb[0].mxu0 %v2119
    %v2154 = vpop.f32.mrb[0].mxu0
    %v2155 = vadd.f32 %v251, %v2154
    %v2156 = vpop.f32.mrb[0].mxu0
    %v2157 = vpop.f32.mrb[0].mxu0
    %v2158 = vpop.f32.mrb[0].mxu0
    %2159 = vdwg.mxu0
    %s2160 = scalar_lea.vmem %s9, 16
    %2161 = vst [vmem:[%s2160] sm:$0xff] %v2155
    %v2162 = vsel %vm257, %v2155, -1e+30
    %2163 = vmax.xlane.f32.xlu0 %v2162
    %v2164 = vpop.xlane.xlu0 %2163
    %vm2165 = vcmp.eq.f32.partialorder %v2162, %v2164
    %v2166 = vsel %vm2165, %v254, 128
    %v2167 = vand.u32 %v2166, 65535
    %v2168 = vshra.s32 %v2166, 16
    %v2169 = vcvt.s32.f32 %v2167
    %v2170 = vcvt.s32.f32 %v2168
    %2171 = vmin.xlane.f32.xlu0 %v2170
    %v2172 = vpop.xlane.xlu0 %2171
    %vm2173 = vcmp.eq.f32.partialorder %v2170, %v2172
    %v2174 = vsel %vm2173, %v2169, inf
    %2175 = vmin.xlane.f32.xlu0 %v2174
    %v2176 = vpop.xlane.xlu0 %2175
    %v2177 = vcvt.f32.s32 %v2176
    %v2178 = vcvt.f32.s32 %v2172
    %v2179 = vshll.u32 %v2178, 16
    %v2180 = vadd.s32 %v2179, %v2177
    %s2181 = sld [smem:[#allocation4 + $0x2]]
    %s2182 = sld [smem:[#allocation2 + $0x4]]
    %v2183 = vstv %s2182
    %v2184 = vsel %vm1449, %v2183, 128
    %s2185 = sld [smem:[#allocation2 + $0x5]]
    %v2186 = vstv %s2185
    %v2187 = vsel %vm1453, %v2186, %v2184
    %v2188 = vstv %s2181
    %v2189 = vmul.u32 %v2188, %v2187
    %s2190 = ssub.s32 1, %s2181
    %v2191 = vstv %s2190
    %v2192 = vmul.u32 %v2191, %v2180
    %v2193 = vadd.s32 %v2189, %v2192
    %vm2194 = vcmp.eq.s32.totalorder %v254, %v2193
    %v2195 = vsel %vm2194, 1.0, 0.0
    %v2196 = vpack.c.bf16 %v2195, %v2195
    %2197 = vmatprep.subr.bf16.mxu0 %v1654
    %2198 = vmatpush1.bf16.msra.mxu0 %v1653
    %2199 = vmatprep.subr.bf16.mxu0 %v1658
    %2200 = vmatpush1.bf16.msra.mxu0 %v1657
    %2201 = vmatprep.subr.bf16.mxu0 %v1662
    %2202 = vmatpush1.bf16.msra.mxu0 %v1661
    %2203 = vmatprep.subr.bf16.mxu0 %v1666
    %2204 = vmatpush1.bf16.msra.mxu0 %v1665
    %2205 = vmatprep.subr.bf16.mxu0 %v1670
    %2206 = vmatpush1.bf16.msra.mxu0 %v1669
    %2207 = vmatprep.subr.bf16.mxu0 %v1674
    %2208 = vmatpush1.bf16.msra.mxu0 %v1673
    %2209 = vmatprep.subr.bf16.mxu0 %v1678
    %2210 = vmatpush1.bf16.msra.mxu0 %v1677
    %2211 = vmatprep.subr.bf16.mxu0 %v1682
    %2212 = vmatpush1.bf16.msra.mxu0 %v1681
    %2213 = vmatprep.subr.bf16.mxu0 %v1686
    %2214 = vmatpush1.bf16.msra.mxu0 %v1685
    %2215 = vmatprep.subr.bf16.mxu0 %v1690
    %2216 = vmatpush1.bf16.msra.mxu0 %v1689
    %2217 = vmatprep.subr.bf16.mxu0 %v1694
    %2218 = vmatpush1.bf16.msra.mxu0 %v1693
    %2219 = vmatprep.subr.bf16.mxu0 %v1698
    %2220 = vmatpush1.bf16.msra.mxu0 %v1697
    %2221 = vmatprep.subr.bf16.mxu0 %v1702
    %2222 = vmatpush1.bf16.msra.mxu0 %v1701
    %2223 = vmatprep.subr.bf16.mxu0 %v1706
    %2224 = vmatpush1.bf16.msra.mxu0 %v1705
    %2225 = vmatprep.subr.bf16.mxu0 %v1710
    %2226 = vmatpush1.bf16.msra.mxu0 %v1709
    %2227 = vmatprep.subr.bf16.mxu0 %v1714
    %2228 = vmatpush1.bf16.msra.mxu0 %v1713
    %2229 = vmatprep.mubr.bf16.mxu0 %v2119
    %2230 = vmatmul.mubr.bf16.gmra.mrb[0].mxu0 %v2196
    %v2231 = vpop.f32.mrb[0].mxu0
    %v2232 = vadd.f32 %v229, %v2231
    %v2233 = vpop.f32.mrb[0].mxu0
    %v2234 = vadd.f32 %v233, %v2233
    %v2235 = vpop.f32.mrb[0].mxu0
    %v2236 = vpop.f32.mrb[0].mxu0
    %2237 = vdwg.mxu0
    %2238 = vmatprep.subr.bf16.mxu0 %v1656
    %2239 = vmatpush1.bf16.msra.mxu0 %v1655
    %2240 = vmatprep.subr.bf16.mxu0 %v1660
    %2241 = vmatpush1.bf16.msra.mxu0 %v1659
    %2242 = vmatprep.subr.bf16.mxu0 %v1664
    %2243 = vmatpush1.bf16.msra.mxu0 %v1663
    %2244 = vmatprep.subr.bf16.mxu0 %v1668
    %2245 = vmatpush1.bf16.msra.mxu0 %v1667
    %2246 = vmatprep.subr.bf16.mxu0 %v1672
    %2247 = vmatpush1.bf16.msra.mxu0 %v1671
    %2248 = vmatprep.subr.bf16.mxu0 %v1676
    %2249 = vmatpush1.bf16.msra.mxu0 %v1675
    %2250 = vmatprep.subr.bf16.mxu0 %v1680
    %2251 = vmatpush1.bf16.msra.mxu0 %v1679
    %2252 = vmatprep.subr.bf16.mxu0 %v1684
    %2253 = vmatpush1.bf16.msra.mxu0 %v1683
    %2254 = vmatprep.subr.bf16.mxu0 %v1688
    %2255 = vmatpush1.bf16.msra.mxu0 %v1687
    %2256 = vmatprep.subr.bf16.mxu0 %v1692
    %2257 = vmatpush1.bf16.msra.mxu0 %v1691
    %2258 = vmatprep.subr.bf16.mxu0 %v1696
    %2259 = vmatpush1.bf16.msra.mxu0 %v1695
    %2260 = vmatprep.subr.bf16.mxu0 %v1700
    %2261 = vmatpush1.bf16.msra.mxu0 %v1699
    %2262 = vmatprep.subr.bf16.mxu0 %v1704
    %2263 = vmatpush1.bf16.msra.mxu0 %v1703
    %2264 = vmatprep.subr.bf16.mxu0 %v1708
    %2265 = vmatpush1.bf16.msra.mxu0 %v1707
    %2266 = vmatprep.subr.bf16.mxu0 %v1712
    %2267 = vmatpush1.bf16.msra.mxu0 %v1711
    %2268 = vmatprep.subr.bf16.mxu0 %v1716
    %2269 = vmatpush1.bf16.msra.mxu0 %v1715
    %2270 = vmatprep.mubr.bf16.mxu0 %v2119
    %2271 = vmatmul.mubr.bf16.gmra.mrb[0].mxu0 %v2196
    %v2272 = vpop.f32.mrb[0].mxu0
    %v2273 = vadd.f32 %v237, %v2272
    %v2274 = vpop.f32.mrb[0].mxu0
    %v2275 = vadd.f32 %v241, %v2274
    %v2276 = vpop.f32.mrb[0].mxu0
    %v2277 = vpop.f32.mrb[0].mxu0
    %2278 = vdwg.mxu0
    %v2279 = vxor.u32 %v2232, 2147483648
    %v2280 = vmul.f32 %v2279, 1.442695
    %v2281 = vpow.pop %v2280
    %v2282 = vadd.f32 %v2281, 1.0
    %v2283 = vrcp.pop %v2282
    %v2284 = vmul.f32 1.0, %v2283
    %v2285 = vxor.u32 %v2234, 2147483648
    %v2286 = vmul.f32 %v2285, 1.442695
    %v2287 = vpow.pop %v2286
    %v2288 = vadd.f32 %v2287, 1.0
    %v2289 = vrcp.pop %v2288
    %v2290 = vmul.f32 1.0, %v2289
    %v2291 = vtanh.pop %v2273
    %v2292 = vxor.u32 %v2275, 2147483648
    %v2293 = vmul.f32 %v2292, 1.442695
    %v2294 = vpow.pop %v2293
    %v2295 = vadd.f32 %v2294, 1.0
    %v2296 = vrcp.pop %v2295
    %v2297 = vmul.f32 1.0, %v2296
    %v2298 = vmul.f32 %v2290, %v2116
    %v2299 = vmul.f32 %v2284, %v2291
    %v2300 = vadd.f32 %v2298, %v2299
    %v2301 = vtanh.pop %v2300
    %v2302 = vmul.f32 %v2297, %v2301
    %v2303 = vpack.c.bf16 %v2302, %v2302
    %2304 = vmatprep.subr.bf16.mxu0 0
    %2305 = vmatpush1.bf16.msra.mxu0 %v1920
    %2306 = vmatprep.subr.bf16.mxu0 0
    %2307 = vmatpush1.bf16.msra.mxu0 %v1921
    %2308 = vmatprep.subr.bf16.mxu0 0
    %2309 = vmatpush1.bf16.msra.mxu0 %v1922
    %2310 = vmatprep.subr.bf16.mxu0 0
    %2311 = vmatpush1.bf16.msra.mxu0 %v1923
    %2312 = vmatprep.subr.bf16.mxu0 0
    %2313 = vmatpush1.bf16.msra.mxu0 %v1924
    %2314 = vmatprep.subr.bf16.mxu0 0
    %2315 = vmatpush1.bf16.msra.mxu0 %v1925
    %2316 = vmatprep.subr.bf16.mxu0 0
    %2317 = vmatpush1.bf16.msra.mxu0 %v1926
    %2318 = vmatprep.subr.bf16.mxu0 0
    %2319 = vmatpush1.bf16.msra.mxu0 %v1927
    %2320 = vmatprep.subr.bf16.mxu0 0
    %2321 = vmatpush1.bf16.msra.mxu0 0
    %2322 = vmatprep.subr.bf16.mxu0 0
    %2323 = vmatpush1.bf16.msra.mxu0 0
    %2324 = vmatprep.subr.bf16.mxu0 0
    %2325 = vmatpush1.bf16.msra.mxu0 0
    %2326 = vmatprep.subr.bf16.mxu0 0
    %2327 = vmatpush1.bf16.msra.mxu0 0
    %2328 = vmatprep.subr.bf16.mxu0 0
    %2329 = vmatpush1.bf16.msra.mxu0 0
    %2330 = vmatprep.subr.bf16.mxu0 0
    %2331 = vmatpush1.bf16.msra.mxu0 0
    %2332 = vmatprep.subr.bf16.mxu0 0
    %2333 = vmatpush1.bf16.msra.mxu0 0
    %2334 = vmatprep.subr.bf16.mxu0 0
    %2335 = vmatpush1.bf16.msra.mxu0 0
    %2336 = vmatprep.mubr.bf16.mxu0 0
    %2337 = vmatmul.mubr.bf16.gmra.mrb[0].mxu0 %v2303
    %v2338 = vpop.f32.mrb[0].mxu0
    %v2339 = vadd.f32 %v251, %v2338
    %v2340 = vpop.f32.mrb[0].mxu0
    %v2341 = vpop.f32.mrb[0].mxu0
    %v2342 = vpop.f32.mrb[0].mxu0
    %2343 = vdwg.mxu0
    %s2344 = scalar_lea.vmem %s9, 24
    %2345 = vst [vmem:[%s2344] sm:$0xff] %v2339
    %v2346 = vsel %vm257, %v2339, -1e+30
    %2347 = vmax.xlane.f32.xlu0 %v2346
    %v2348 = vpop.xlane.xlu0 %2347
    %vm2349 = vcmp.eq.f32.partialorder %v2346, %v2348
    %v2350 = vsel %vm2349, %v254, 128
    %v2351 = vand.u32 %v2350, 65535
    %v2352 = vshra.s32 %v2350, 16
    %v2353 = vcvt.s32.f32 %v2351
    %v2354 = vcvt.s32.f32 %v2352
    %2355 = vmin.xlane.f32.xlu0 %v2354
    %v2356 = vpop.xlane.xlu0 %2355
    %vm2357 = vcmp.eq.f32.partialorder %v2354, %v2356
    %v2358 = vsel %vm2357, %v2353, inf
    %2359 = vmin.xlane.f32.xlu0 %v2358
    %v2360 = vpop.xlane.xlu0 %2359
    %v2361 = vcvt.f32.s32 %v2360
    %v2362 = vcvt.f32.s32 %v2356
    %v2363 = vshll.u32 %v2362, 16
    %v2364 = vadd.s32 %v2363, %v2361
    %s2365 = sld [smem:[#allocation4 + $0x3]]
    %s2366 = sld [smem:[#allocation2 + $0x6]]
    %v2367 = vstv %s2366
    %v2368 = vsel %vm1449, %v2367, 128
    %s2369 = sld [smem:[#allocation2 + $0x7]]
    %v2370 = vstv %s2369
    %v2371 = vsel %vm1453, %v2370, %v2368
    %v2372 = vstv %s2365
    %v2373 = vmul.u32 %v2372, %v2371
    %s2374 = ssub.s32 1, %s2365
    %v2375 = vstv %s2374
    %v2376 = vmul.u32 %v2375, %v2364
    %v2377 = vadd.s32 %v2373, %v2376
    %vm2378 = vcmp.eq.s32.totalorder %v254, %v2377
    %v2379 = vsel %vm2378, 1.0, 0.0
    %v2380 = vpack.c.bf16 %v2379, %v2379
    %2381 = vmatprep.subr.bf16.mxu0 %v1654
    %2382 = vmatpush1.bf16.msra.mxu0 %v1653
    %2383 = vmatprep.subr.bf16.mxu0 %v1658
    %2384 = vmatpush1.bf16.msra.mxu0 %v1657
    %2385 = vmatprep.subr.bf16.mxu0 %v1662
    %2386 = vmatpush1.bf16.msra.mxu0 %v1661
    %2387 = vmatprep.subr.bf16.mxu0 %v1666
    %2388 = vmatpush1.bf16.msra.mxu0 %v1665
    %2389 = vmatprep.subr.bf16.mxu0 %v1670
    %2390 = vmatpush1.bf16.msra.mxu0 %v1669
    %2391 = vmatprep.subr.bf16.mxu0 %v1674
    %2392 = vmatpush1.bf16.msra.mxu0 %v1673
    %2393 = vmatprep.subr.bf16.mxu0 %v1678
    %2394 = vmatpush1.bf16.msra.mxu0 %v1677
    %2395 = vmatprep.subr.bf16.mxu0 %v1682
    %2396 = vmatpush1.bf16.msra.mxu0 %v1681
    %2397 = vmatprep.subr.bf16.mxu0 %v1686
    %2398 = vmatpush1.bf16.msra.mxu0 %v1685
    %2399 = vmatprep.subr.bf16.mxu0 %v1690
    %2400 = vmatpush1.bf16.msra.mxu0 %v1689
    %2401 = vmatprep.subr.bf16.mxu0 %v1694
    %2402 = vmatpush1.bf16.msra.mxu0 %v1693
    %2403 = vmatprep.subr.bf16.mxu0 %v1698
    %2404 = vmatpush1.bf16.msra.mxu0 %v1697
    %2405 = vmatprep.subr.bf16.mxu0 %v1702
    %2406 = vmatpush1.bf16.msra.mxu0 %v1701
    %2407 = vmatprep.subr.bf16.mxu0 %v1706
    %2408 = vmatpush1.bf16.msra.mxu0 %v1705
    %2409 = vmatprep.subr.bf16.mxu0 %v1710
    %2410 = vmatpush1.bf16.msra.mxu0 %v1709
    %2411 = vmatprep.subr.bf16.mxu0 %v1714
    %2412 = vmatpush1.bf16.msra.mxu0 %v1713
    %2413 = vmatprep.mubr.bf16.mxu0 %v2303
    %2414 = vmatmul.mubr.bf16.gmra.mrb[0].mxu0 %v2380
    %v2415 = vpop.f32.mrb[0].mxu0
    %v2416 = vadd.f32 %v229, %v2415
    %v2417 = vpop.f32.mrb[0].mxu0
    %v2418 = vadd.f32 %v233, %v2417
    %v2419 = vpop.f32.mrb[0].mxu0
    %v2420 = vpop.f32.mrb[0].mxu0
    %2421 = vdwg.mxu0
    %2422 = vmatprep.subr.bf16.mxu0 %v1656
    %2423 = vmatpush1.bf16.msra.mxu0 %v1655
    %2424 = vmatprep.subr.bf16.mxu0 %v1660
    %2425 = vmatpush1.bf16.msra.mxu0 %v1659
    %2426 = vmatprep.subr.bf16.mxu0 %v1664
    %2427 = vmatpush1.bf16.msra.mxu0 %v1663
    %2428 = vmatprep.subr.bf16.mxu0 %v1668
    %2429 = vmatpush1.bf16.msra.mxu0 %v1667
    %2430 = vmatprep.subr.bf16.mxu0 %v1672
    %2431 = vmatpush1.bf16.msra.mxu0 %v1671
    %2432 = vmatprep.subr.bf16.mxu0 %v1676
    %2433 = vmatpush1.bf16.msra.mxu0 %v1675
    %2434 = vmatprep.subr.bf16.mxu0 %v1680
    %2435 = vmatpush1.bf16.msra.mxu0 %v1679
    %2436 = vmatprep.subr.bf16.mxu0 %v1684
    %2437 = vmatpush1.bf16.msra.mxu0 %v1683
    %2438 = vmatprep.subr.bf16.mxu0 %v1688
    %2439 = vmatpush1.bf16.msra.mxu0 %v1687
    %2440 = vmatprep.subr.bf16.mxu0 %v1692
    %2441 = vmatpush1.bf16.msra.mxu0 %v1691
    %2442 = vmatprep.subr.bf16.mxu0 %v1696
    %2443 = vmatpush1.bf16.msra.mxu0 %v1695
    %2444 = vmatprep.subr.bf16.mxu0 %v1700
    %2445 = vmatpush1.bf16.msra.mxu0 %v1699
    %2446 = vmatprep.subr.bf16.mxu0 %v1704
    %2447 = vmatpush1.bf16.msra.mxu0 %v1703
    %2448 = vmatprep.subr.bf16.mxu0 %v1708
    %2449 = vmatpush1.bf16.msra.mxu0 %v1707
    %2450 = vmatprep.subr.bf16.mxu0 %v1712
    %2451 = vmatpush1.bf16.msra.mxu0 %v1711
    %2452 = vmatprep.subr.bf16.mxu0 %v1716
    %2453 = vmatpush1.bf16.msra.mxu0 %v1715
    %2454 = vmatprep.mubr.bf16.mxu0 %v2303
    %2455 = vmatmul.mubr.bf16.gmra.mrb[0].mxu0 %v2380
    %v2456 = vpop.f32.mrb[0].mxu0
    %v2457 = vadd.f32 %v237, %v2456
    %v2458 = vpop.f32.mrb[0].mxu0
    %v2459 = vadd.f32 %v241, %v2458
    %v2460 = vpop.f32.mrb[0].mxu0
    %v2461 = vpop.f32.mrb[0].mxu0
    %2462 = vdwg.mxu0
    %v2463 = vxor.u32 %v2416, 2147483648
    %v2464 = vmul.f32 %v2463, 1.442695
    %v2465 = vpow.pop %v2464
    %v2466 = vadd.f32 %v2465, 1.0
    %v2467 = vrcp.pop %v2466
    %v2468 = vmul.f32 1.0, %v2467
    %v2469 = vxor.u32 %v2418, 2147483648
    %v2470 = vmul.f32 %v2469, 1.442695
    %v2471 = vpow.pop %v2470
    %v2472 = vadd.f32 %v2471, 1.0
    %v2473 = vrcp.pop %v2472
    %v2474 = vmul.f32 1.0, %v2473
    %v2475 = vtanh.pop %v2457
    %v2476 = vxor.u32 %v2459, 2147483648
    %v2477 = vmul.f32 %v2476, 1.442695
    %v2478 = vpow.pop %v2477
    %v2479 = vadd.f32 %v2478, 1.0
    %v2480 = vrcp.pop %v2479
    %v2481 = vmul.f32 1.0, %v2480
    %v2482 = vmul.f32 %v2474, %v2300
    %v2483 = vmul.f32 %v2468, %v2475
    %v2484 = vadd.f32 %v2482, %v2483
    %v2485 = vtanh.pop %v2484
    %v2486 = vmul.f32 %v2481, %v2485
    %v2487 = vpack.c.bf16 %v2486, %v2486
    %2488 = vmatprep.subr.bf16.mxu0 0
    %2489 = vmatpush1.bf16.msra.mxu0 %v1920
    %2490 = vmatprep.subr.bf16.mxu0 0
    %2491 = vmatpush1.bf16.msra.mxu0 %v1921
    %2492 = vmatprep.subr.bf16.mxu0 0
    %2493 = vmatpush1.bf16.msra.mxu0 %v1922
    %2494 = vmatprep.subr.bf16.mxu0 0
    %2495 = vmatpush1.bf16.msra.mxu0 %v1923
    %2496 = vmatprep.subr.bf16.mxu0 0
    %2497 = vmatpush1.bf16.msra.mxu0 %v1924
    %2498 = vmatprep.subr.bf16.mxu0 0
    %2499 = vmatpush1.bf16.msra.mxu0 %v1925
    %2500 = vmatprep.subr.bf16.mxu0 0
    %2501 = vmatpush1.bf16.msra.mxu0 %v1926
    %2502 = vmatprep.subr.bf16.mxu0 0
    %2503 = vmatpush1.bf16.msra.mxu0 %v1927
    %2504 = vmatprep.subr.bf16.mxu0 0
    %2505 = vmatpush1.bf16.msra.mxu0 0
    %2506 = vmatprep.subr.bf16.mxu0 0
    %2507 = vmatpush1.bf16.msra.mxu0 0
    %2508 = vmatprep.subr.bf16.mxu0 0
    %2509 = vmatpush1.bf16.msra.mxu0 0
    %2510 = vmatprep.subr.bf16.mxu0 0
    %2511 = vmatpush1.bf16.msra.mxu0 0
    %2512 = vmatprep.subr.bf16.mxu0 0
    %2513 = vmatpush1.bf16.msra.mxu0 0
    %2514 = vmatprep.subr.bf16.mxu0 0
    %2515 = vmatpush1.bf16.msra.mxu0 0
    %2516 = vmatprep.subr.bf16.mxu0 0
    %2517 = vmatpush1.bf16.msra.mxu0 0
    %2518 = vmatprep.subr.bf16.mxu0 0
    %2519 = vmatpush1.bf16.msra.mxu0 0
    %2520 = vmatprep.mubr.bf16.mxu0 0
    %2521 = vmatmul.mubr.bf16.gmra.mrb[0].mxu0 %v2487
    %v2522 = vpop.f32.mrb[0].mxu0
    %v2523 = vadd.f32 %v251, %v2522
    %v2524 = vpop.f32.mrb[0].mxu0
    %v2525 = vpop.f32.mrb[0].mxu0
    %v2526 = vpop.f32.mrb[0].mxu0
    %2527 = vdwg.mxu0
    %s2528 = scalar_lea.vmem %s9, 32
    %2529 = vst [vmem:[%s2528] sm:$0xff] %v2523
    %v2530 = vsel %vm257, %v2523, -1e+30
    %2531 = vmax.xlane.f32.xlu0 %v2530
    %v2532 = vpop.xlane.xlu0 %2531
    %vm2533 = vcmp.eq.f32.partialorder %v2530, %v2532
    %v2534 = vsel %vm2533, %v254, 128
    %v2535 = vand.u32 %v2534, 65535
    %v2536 = vshra.s32 %v2534, 16
    %v2537 = vcvt.s32.f32 %v2535
    %v2538 = vcvt.s32.f32 %v2536
    %2539 = vmin.xlane.f32.xlu0 %v2538
    %v2540 = vpop.xlane.xlu0 %2539
    %vm2541 = vcmp.eq.f32.partialorder %v2538, %v2540
    %v2542 = vsel %vm2541, %v2537, inf
    %2543 = vmin.xlane.f32.xlu0 %v2542
    %v2544 = vpop.xlane.xlu0 %2543
    %v2545 = vcvt.f32.s32 %v2544
    %v2546 = vcvt.f32.s32 %v2540
    %v2547 = vshll.u32 %v2546, 16
    %v2548 = vadd.s32 %v2547, %v2545
    %s2549 = sld [smem:[#allocation4 + $0x4]]
    %s2550 = sld [smem:[#allocation2 + $0x8]]
    %v2551 = vstv %s2550
    %v2552 = vsel %vm1449, %v2551, 128
    %s2553 = sld [smem:[#allocation2 + $0x9]]
    %v2554 = vstv %s2553
    %v2555 = vsel %vm1453, %v2554, %v2552
    %v2556 = vstv %s2549
    %v2557 = vmul.u32 %v2556, %v2555
    %s2558 = ssub.s32 1, %s2549
    %v2559 = vstv %s2558
    %v2560 = vmul.u32 %v2559, %v2548
    %v2561 = vadd.s32 %v2557, %v2560
    %vm2562 = vcmp.eq.s32.totalorder %v254, %v2561
    %v2563 = vsel %vm2562, 1.0, 0.0
    %v2564 = vpack.c.bf16 %v2563, %v2563
    %2565 = vmatprep.subr.bf16.mxu0 %v1654
    %2566 = vmatpush1.bf16.msra.mxu0 %v1653
    %2567 = vmatprep.subr.bf16.mxu0 %v1658
    %2568 = vmatpush1.bf16.msra.mxu0 %v1657
    %2569 = vmatprep.subr.bf16.mxu0 %v1662
    %2570 = vmatpush1.bf16.msra.mxu0 %v1661
    %2571 = vmatprep.subr.bf16.mxu0 %v1666
    %2572 = vmatpush1.bf16.msra.mxu0 %v1665
    %2573 = vmatprep.subr.bf16.mxu0 %v1670
    %2574 = vmatpush1.bf16.msra.mxu0 %v1669
    %2575 = vmatprep.subr.bf16.mxu0 %v1674
    %2576 = vmatpush1.bf16.msra.mxu0 %v1673
    %2577 = vmatprep.subr.bf16.mxu0 %v1678
    %2578 = vmatpush1.bf16.msra.mxu0 %v1677
    %2579 = vmatprep.subr.bf16.mxu0 %v1682
    %2580 = vmatpush1.bf16.msra.mxu0 %v1681
    %2581 = vmatprep.subr.bf16.mxu0 %v1686
    %2582 = vmatpush1.bf16.msra.mxu0 %v1685
    %2583 = vmatprep.subr.bf16.mxu0 %v1690
    %2584 = vmatpush1.bf16.msra.mxu0 %v1689
    %2585 = vmatprep.subr.bf16.mxu0 %v1694
    %2586 = vmatpush1.bf16.msra.mxu0 %v1693
    %2587 = vmatprep.subr.bf16.mxu0 %v1698
    %2588 = vmatpush1.bf16.msra.mxu0 %v1697
    %2589 = vmatprep.subr.bf16.mxu0 %v1702
    %2590 = vmatpush1.bf16.msra.mxu0 %v1701
    %2591 = vmatprep.subr.bf16.mxu0 %v1706
    %2592 = vmatpush1.bf16.msra.mxu0 %v1705
    %2593 = vmatprep.subr.bf16.mxu0 %v1710
    %2594 = vmatpush1.bf16.msra.mxu0 %v1709
    %2595 = vmatprep.subr.bf16.mxu0 %v1714
    %2596 = vmatpush1.bf16.msra.mxu0 %v1713
    %2597 = vmatprep.mubr.bf16.mxu0 %v2487
    %2598 = vmatmul.mubr.bf16.gmra.mrb[0].mxu0 %v2564
    %v2599 = vpop.f32.mrb[0].mxu0
    %v2600 = vadd.f32 %v229, %v2599
    %v2601 = vpop.f32.mrb[0].mxu0
    %v2602 = vadd.f32 %v233, %v2601
    %v2603 = vpop.f32.mrb[0].mxu0
    %v2604 = vpop.f32.mrb[0].mxu0
    %2605 = vdwg.mxu0
    %2606 = vmatprep.subr.bf16.mxu0 %v1656
    %2607 = vmatpush1.bf16.msra.mxu0 %v1655
    %2608 = vmatprep.subr.bf16.mxu0 %v1660
    %2609 = vmatpush1.bf16.msra.mxu0 %v1659
    %2610 = vmatprep.subr.bf16.mxu0 %v1664
    %2611 = vmatpush1.bf16.msra.mxu0 %v1663
    %2612 = vmatprep.subr.bf16.mxu0 %v1668
    %2613 = vmatpush1.bf16.msra.mxu0 %v1667
    %2614 = vmatprep.subr.bf16.mxu0 %v1672
    %2615 = vmatpush1.bf16.msra.mxu0 %v1671
    %2616 = vmatprep.subr.bf16.mxu0 %v1676
    %2617 = vmatpush1.bf16.msra.mxu0 %v1675
    %2618 = vmatprep.subr.bf16.mxu0 %v1680
    %2619 = vmatpush1.bf16.msra.mxu0 %v1679
    %2620 = vmatprep.subr.bf16.mxu0 %v1684
    %2621 = vmatpush1.bf16.msra.mxu0 %v1683
    %2622 = vmatprep.subr.bf16.mxu0 %v1688
    %2623 = vmatpush1.bf16.msra.mxu0 %v1687
    %2624 = vmatprep.subr.bf16.mxu0 %v1692
    %2625 = vmatpush1.bf16.msra.mxu0 %v1691
    %2626 = vmatprep.subr.bf16.mxu0 %v1696
    %2627 = vmatpush1.bf16.msra.mxu0 %v1695
    %2628 = vmatprep.subr.bf16.mxu0 %v1700
    %2629 = vmatpush1.bf16.msra.mxu0 %v1699
    %2630 = vmatprep.subr.bf16.mxu0 %v1704
    %2631 = vmatpush1.bf16.msra.mxu0 %v1703
    %2632 = vmatprep.subr.bf16.mxu0 %v1708
    %2633 = vmatpush1.bf16.msra.mxu0 %v1707
    %2634 = vmatprep.subr.bf16.mxu0 %v1712
    %2635 = vmatpush1.bf16.msra.mxu0 %v1711
    %2636 = vmatprep.subr.bf16.mxu0 %v1716
    %2637 = vmatpush1.bf16.msra.mxu0 %v1715
    %2638 = vmatprep.mubr.bf16.mxu0 %v2487
    %2639 = vmatmul.mubr.bf16.gmra.mrb[0].mxu0 %v2564
    %v2640 = vpop.f32.mrb[0].mxu0
    %v2641 = vadd.f32 %v237, %v2640
    %v2642 = vpop.f32.mrb[0].mxu0
    %v2643 = vadd.f32 %v241, %v2642
    %v2644 = vpop.f32.mrb[0].mxu0
    %v2645 = vpop.f32.mrb[0].mxu0
    %2646 = vdwg.mxu0
    %v2647 = vxor.u32 %v2600, 2147483648
    %v2648 = vmul.f32 %v2647, 1.442695
    %v2649 = vpow.pop %v2648
    %v2650 = vadd.f32 %v2649, 1.0
    %v2651 = vrcp.pop %v2650
    %v2652 = vmul.f32 1.0, %v2651
    %v2653 = vxor.u32 %v2602, 2147483648
    %v2654 = vmul.f32 %v2653, 1.442695
    %v2655 = vpow.pop %v2654
    %v2656 = vadd.f32 %v2655, 1.0
    %v2657 = vrcp.pop %v2656
    %v2658 = vmul.f32 1.0, %v2657
    %v2659 = vtanh.pop %v2641
    %v2660 = vxor.u32 %v2643, 2147483648
    %v2661 = vmul.f32 %v2660, 1.442695
    %v2662 = vpow.pop %v2661
    %v2663 = vadd.f32 %v2662, 1.0
    %v2664 = vrcp.pop %v2663
    %v2665 = vmul.f32 1.0, %v2664
    %v2666 = vmul.f32 %v2658, %v2484
    %v2667 = vmul.f32 %v2652, %v2659
    %v2668 = vadd.f32 %v2666, %v2667
    %v2669 = vtanh.pop %v2668
    %v2670 = vmul.f32 %v2665, %v2669
    %v2671 = vpack.c.bf16 %v2670, %v2670
    %2672 = vmatprep.subr.bf16.mxu0 0
    %2673 = vmatpush1.bf16.msra.mxu0 %v1920
    %2674 = vmatprep.subr.bf16.mxu0 0
    %2675 = vmatpush1.bf16.msra.mxu0 %v1921
    %2676 = vmatprep.subr.bf16.mxu0 0
    %2677 = vmatpush1.bf16.msra.mxu0 %v1922
    %2678 = vmatprep.subr.bf16.mxu0 0
    %2679 = vmatpush1.bf16.msra.mxu0 %v1923
    %2680 = vmatprep.subr.bf16.mxu0 0
    %2681 = vmatpush1.bf16.msra.mxu0 %v1924
    %2682 = vmatprep.subr.bf16.mxu0 0
    %2683 = vmatpush1.bf16.msra.mxu0 %v1925
    %2684 = vmatprep.subr.bf16.mxu0 0
    %2685 = vmatpush1.bf16.msra.mxu0 %v1926
    %2686 = vmatprep.subr.bf16.mxu0 0
    %2687 = vmatpush1.bf16.msra.mxu0 %v1927
    %2688 = vmatprep.subr.bf16.mxu0 0
    %2689 = vmatpush1.bf16.msra.mxu0 0
    %2690 = vmatprep.subr.bf16.mxu0 0
    %2691 = vmatpush1.bf16.msra.mxu0 0
    %2692 = vmatprep.subr.bf16.mxu0 0
    %2693 = vmatpush1.bf16.msra.mxu0 0
    %2694 = vmatprep.subr.bf16.mxu0 0
    %2695 = vmatpush1.bf16.msra.mxu0 0
    %2696 = vmatprep.subr.bf16.mxu0 0
    %2697 = vmatpush1.bf16.msra.mxu0 0
    %2698 = vmatprep.subr.bf16.mxu0 0
    %2699 = vmatpush1.bf16.msra.mxu0 0
    %2700 = vmatprep.subr.bf16.mxu0 0
    %2701 = vmatpush1.bf16.msra.mxu0 0
    %2702 = vmatprep.subr.bf16.mxu0 0
    %2703 = vmatpush1.bf16.msra.mxu0 0
    %2704 = vmatprep.mubr.bf16.mxu0 0
    %2705 = vmatmul.mubr.bf16.gmra.mrb[0].mxu0 %v2671
    %v2706 = vpop.f32.mrb[0].mxu0
    %v2707 = vadd.f32 %v251, %v2706
    %v2708 = vpop.f32.mrb[0].mxu0
    %v2709 = vpop.f32.mrb[0].mxu0
    %v2710 = vpop.f32.mrb[0].mxu0
    %2711 = vdwg.mxu0
    %s2712 = scalar_lea.vmem %s9, 40
    %2713 = vst [vmem:[%s2712] sm:$0xff] %v2707
    %v2714 = vsel %vm257, %v2707, -1e+30
    %2715 = vmax.xlane.f32.xlu0 %v2714
    %v2716 = vpop.xlane.xlu0 %2715
    %vm2717 = vcmp.eq.f32.partialorder %v2714, %v2716
    %v2718 = vsel %vm2717, %v254, 128
    %v2719 = vand.u32 %v2718, 65535
    %v2720 = vshra.s32 %v2718, 16
    %v2721 = vcvt.s32.f32 %v2719
    %v2722 = vcvt.s32.f32 %v2720
    %2723 = vmin.xlane.f32.xlu0 %v2722
    %v2724 = vpop.xlane.xlu0 %2723
    %vm2725 = vcmp.eq.f32.partialorder %v2722, %v2724
    %v2726 = vsel %vm2725, %v2721, inf
    %2727 = vmin.xlane.f32.xlu0 %v2726
    %v2728 = vpop.xlane.xlu0 %2727
    %v2729 = vcvt.f32.s32 %v2728
    %v2730 = vcvt.f32.s32 %v2724
    %v2731 = vshll.u32 %v2730, 16
    %v2732 = vadd.s32 %v2731, %v2729
    %s2733 = sld [smem:[#allocation4 + $0x5]]
    %s2734 = sld [smem:[#allocation2 + $0xa]]
    %v2735 = vstv %s2734
    %v2736 = vsel %vm1449, %v2735, 128
    %s2737 = sld [smem:[#allocation2 + $0xb]]
    %v2738 = vstv %s2737
    %v2739 = vsel %vm1453, %v2738, %v2736
    %v2740 = vstv %s2733
    %v2741 = vmul.u32 %v2740, %v2739
    %s2742 = ssub.s32 1, %s2733
    %v2743 = vstv %s2742
    %v2744 = vmul.u32 %v2743, %v2732
    %v2745 = vadd.s32 %v2741, %v2744
    %vm2746 = vcmp.eq.s32.totalorder %v254, %v2745
    %v2747 = vsel %vm2746, 1.0, 0.0
    %v2748 = vpack.c.bf16 %v2747, %v2747
    %2749 = vmatprep.subr.bf16.mxu0 %v1654
    %2750 = vmatpush1.bf16.msra.mxu0 %v1653
    %2751 = vmatprep.subr.bf16.mxu0 %v1658
    %2752 = vmatpush1.bf16.msra.mxu0 %v1657
    %2753 = vmatprep.subr.bf16.mxu0 %v1662
    %2754 = vmatpush1.bf16.msra.mxu0 %v1661
    %2755 = vmatprep.subr.bf16.mxu0 %v1666
    %2756 = vmatpush1.bf16.msra.mxu0 %v1665
    %2757 = vmatprep.subr.bf16.mxu0 %v1670
    %2758 = vmatpush1.bf16.msra.mxu0 %v1669
    %2759 = vmatprep.subr.bf16.mxu0 %v1674
    %2760 = vmatpush1.bf16.msra.mxu0 %v1673
    %2761 = vmatprep.subr.bf16.mxu0 %v1678
    %2762 = vmatpush1.bf16.msra.mxu0 %v1677
    %2763 = vmatprep.subr.bf16.mxu0 %v1682
    %2764 = vmatpush1.bf16.msra.mxu0 %v1681
    %2765 = vmatprep.subr.bf16.mxu0 %v1686
    %2766 = vmatpush1.bf16.msra.mxu0 %v1685
    %2767 = vmatprep.subr.bf16.mxu0 %v1690
    %2768 = vmatpush1.bf16.msra.mxu0 %v1689
    %2769 = vmatprep.subr.bf16.mxu0 %v1694
    %2770 = vmatpush1.bf16.msra.mxu0 %v1693
    %2771 = vmatprep.subr.bf16.mxu0 %v1698
    %2772 = vmatpush1.bf16.msra.mxu0 %v1697
    %2773 = vmatprep.subr.bf16.mxu0 %v1702
    %2774 = vmatpush1.bf16.msra.mxu0 %v1701
    %2775 = vmatprep.subr.bf16.mxu0 %v1706
    %2776 = vmatpush1.bf16.msra.mxu0 %v1705
    %2777 = vmatprep.subr.bf16.mxu0 %v1710
    %2778 = vmatpush1.bf16.msra.mxu0 %v1709
    %2779 = vmatprep.subr.bf16.mxu0 %v1714
    %2780 = vmatpush1.bf16.msra.mxu0 %v1713
    %2781 = vmatprep.mubr.bf16.mxu0 %v2671
    %2782 = vmatmul.mubr.bf16.gmra.mrb[0].mxu0 %v2748
    %v2783 = vpop.f32.mrb[0].mxu0
    %v2784 = vadd.f32 %v229, %v2783
    %v2785 = vpop.f32.mrb[0].mxu0
    %v2786 = vadd.f32 %v233, %v2785
    %v2787 = vpop.f32.mrb[0].mxu0
    %v2788 = vpop.f32.mrb[0].mxu0
    %2789 = vdwg.mxu0
    %2790 = vmatprep.subr.bf16.mxu0 %v1656
    %2791 = vmatpush1.bf16.msra.mxu0 %v1655
    %2792 = vmatprep.subr.bf16.mxu0 %v1660
    %2793 = vmatpush1.bf16.msra.mxu0 %v1659
    %2794 = vmatprep.subr.bf16.mxu0 %v1664
    %2795 = vmatpush1.bf16.msra.mxu0 %v1663
    %2796 = vmatprep.subr.bf16.mxu0 %v1668
    %2797 = vmatpush1.bf16.msra.mxu0 %v1667
    %2798 = vmatprep.subr.bf16.mxu0 %v1672
    %2799 = vmatpush1.bf16.msra.mxu0 %v1671
    %2800 = vmatprep.subr.bf16.mxu0 %v1676
    %2801 = vmatpush1.bf16.msra.mxu0 %v1675
    %2802 = vmatprep.subr.bf16.mxu0 %v1680
    %2803 = vmatpush1.bf16.msra.mxu0 %v1679
    %2804 = vmatprep.subr.bf16.mxu0 %v1684
    %2805 = vmatpush1.bf16.msra.mxu0 %v1683
    %2806 = vmatprep.subr.bf16.mxu0 %v1688
    %2807 = vmatpush1.bf16.msra.mxu0 %v1687
    %2808 = vmatprep.subr.bf16.mxu0 %v1692
    %2809 = vmatpush1.bf16.msra.mxu0 %v1691
    %2810 = vmatprep.subr.bf16.mxu0 %v1696
    %2811 = vmatpush1.bf16.msra.mxu0 %v1695
    %2812 = vmatprep.subr.bf16.mxu0 %v1700
    %2813 = vmatpush1.bf16.msra.mxu0 %v1699
    %2814 = vmatprep.subr.bf16.mxu0 %v1704
    %2815 = vmatpush1.bf16.msra.mxu0 %v1703
    %2816 = vmatprep.subr.bf16.mxu0 %v1708
    %2817 = vmatpush1.bf16.msra.mxu0 %v1707
    %2818 = vmatprep.subr.bf16.mxu0 %v1712
    %2819 = vmatpush1.bf16.msra.mxu0 %v1711
    %2820 = vmatprep.subr.bf16.mxu0 %v1716
    %2821 = vmatpush1.bf16.msra.mxu0 %v1715
    %2822 = vmatprep.mubr.bf16.mxu0 %v2671
    %2823 = vmatmul.mubr.bf16.gmra.mrb[0].mxu0 %v2748
    %v2824 = vpop.f32.mrb[0].mxu0
    %v2825 = vadd.f32 %v237, %v2824
    %v2826 = vpop.f32.mrb[0].mxu0
    %v2827 = vadd.f32 %v241, %v2826
    %v2828 = vpop.f32.mrb[0].mxu0
    %v2829 = vpop.f32.mrb[0].mxu0
    %2830 = vdwg.mxu0
    %v2831 = vxor.u32 %v2784, 2147483648
    %v2832 = vmul.f32 %v2831, 1.442695
    %v2833 = vpow.pop %v2832
    %v2834 = vadd.f32 %v2833, 1.0
    %v2835 = vrcp.pop %v2834
    %v2836 = vmul.f32 1.0, %v2835
    %v2837 = vxor.u32 %v2786, 2147483648
    %v2838 = vmul.f32 %v2837, 1.442695
    %v2839 = vpow.pop %v2838
    %v2840 = vadd.f32 %v2839, 1.0
    %v2841 = vrcp.pop %v2840
    %v2842 = vmul.f32 1.0, %v2841
    %v2843 = vtanh.pop %v2825
    %v2844 = vxor.u32 %v2827, 2147483648
    %v2845 = vmul.f32 %v2844, 1.442695
    %v2846 = vpow.pop %v2845
    %v2847 = vadd.f32 %v2846, 1.0
    %v2848 = vrcp.pop %v2847
    %v2849 = vmul.f32 1.0, %v2848
    %v2850 = vmul.f32 %v2842, %v2668
    %v2851 = vmul.f32 %v2836, %v2843
    %v2852 = vadd.f32 %v2850, %v2851
    %v2853 = vtanh.pop %v2852
    %v2854 = vmul.f32 %v2849, %v2853
    %v2855 = vpack.c.bf16 %v2854, %v2854
    %2856 = vmatprep.subr.bf16.mxu0 0
    %2857 = vmatpush1.bf16.msra.mxu0 %v1920
    %2858 = vmatprep.subr.bf16.mxu0 0
    %2859 = vmatpush1.bf16.msra.mxu0 %v1921
    %2860 = vmatprep.subr.bf16.mxu0 0
    %2861 = vmatpush1.bf16.msra.mxu0 %v1922
    %2862 = vmatprep.subr.bf16.mxu0 0
    %2863 = vmatpush1.bf16.msra.mxu0 %v1923
    %2864 = vmatprep.subr.bf16.mxu0 0
    %2865 = vmatpush1.bf16.msra.mxu0 %v1924
    %2866 = vmatprep.subr.bf16.mxu0 0
    %2867 = vmatpush1.bf16.msra.mxu0 %v1925
    %2868 = vmatprep.subr.bf16.mxu0 0
    %2869 = vmatpush1.bf16.msra.mxu0 %v1926
    %2870 = vmatprep.subr.bf16.mxu0 0
    %2871 = vmatpush1.bf16.msra.mxu0 %v1927
    %2872 = vmatprep.subr.bf16.mxu0 0
    %2873 = vmatpush1.bf16.msra.mxu0 0
    %2874 = vmatprep.subr.bf16.mxu0 0
    %2875 = vmatpush1.bf16.msra.mxu0 0
    %2876 = vmatprep.subr.bf16.mxu0 0
    %2877 = vmatpush1.bf16.msra.mxu0 0
    %2878 = vmatprep.subr.bf16.mxu0 0
    %2879 = vmatpush1.bf16.msra.mxu0 0
    %2880 = vmatprep.subr.bf16.mxu0 0
    %2881 = vmatpush1.bf16.msra.mxu0 0
    %2882 = vmatprep.subr.bf16.mxu0 0
    %2883 = vmatpush1.bf16.msra.mxu0 0
    %2884 = vmatprep.subr.bf16.mxu0 0
    %2885 = vmatpush1.bf16.msra.mxu0 0
    %2886 = vmatprep.subr.bf16.mxu0 0
    %2887 = vmatpush1.bf16.msra.mxu0 0
    %2888 = vmatprep.mubr.bf16.mxu0 0
    %2889 = vmatmul.mubr.bf16.gmra.mrb[0].mxu0 %v2855
    %v2890 = vpop.f32.mrb[0].mxu0
    %v2891 = vadd.f32 %v251, %v2890
    %v2892 = vpop.f32.mrb[0].mxu0
    %v2893 = vpop.f32.mrb[0].mxu0
    %v2894 = vpop.f32.mrb[0].mxu0
    %2895 = vdwg.mxu0
    %s2896 = scalar_lea.vmem %s9, 48
    %2897 = vst [vmem:[%s2896] sm:$0xff] %v2891
    %v2898 = vsel %vm257, %v2891, -1e+30
    %2899 = vmax.xlane.f32.xlu0 %v2898
    %v2900 = vpop.xlane.xlu0 %2899
    %vm2901 = vcmp.eq.f32.partialorder %v2898, %v2900
    %v2902 = vsel %vm2901, %v254, 128
    %v2903 = vand.u32 %v2902, 65535
    %v2904 = vshra.s32 %v2902, 16
    %v2905 = vcvt.s32.f32 %v2903
    %v2906 = vcvt.s32.f32 %v2904
    %2907 = vmin.xlane.f32.xlu0 %v2906
    %v2908 = vpop.xlane.xlu0 %2907
    %vm2909 = vcmp.eq.f32.partialorder %v2906, %v2908
    %v2910 = vsel %vm2909, %v2905, inf
    %2911 = vmin.xlane.f32.xlu0 %v2910
    %v2912 = vpop.xlane.xlu0 %2911
    %v2913 = vcvt.f32.s32 %v2912
    %v2914 = vcvt.f32.s32 %v2908
    %v2915 = vshll.u32 %v2914, 16
    %v2916 = vadd.s32 %v2915, %v2913
    %s2917 = sld [smem:[#allocation4 + $0x6]]
    %s2918 = sld [smem:[#allocation2 + $0xc]]
    %v2919 = vstv %s2918
    %v2920 = vsel %vm1449, %v2919, 128
    %s2921 = sld [smem:[#allocation2 + $0xd]]
    %v2922 = vstv %s2921
    %v2923 = vsel %vm1453, %v2922, %v2920
    %v2924 = vstv %s2917
    %v2925 = vmul.u32 %v2924, %v2923
    %s2926 = ssub.s32 1, %s2917
    %v2927 = vstv %s2926
    %v2928 = vmul.u32 %v2927, %v2916
    %v2929 = vadd.s32 %v2925, %v2928
    %vm2930 = vcmp.eq.s32.totalorder %v254, %v2929
    %v2931 = vsel %vm2930, 1.0, 0.0
    %v2932 = vpack.c.bf16 %v2931, %v2931
    %2933 = vmatprep.subr.bf16.mxu0 %v1654
    %2934 = vmatpush1.bf16.msra.mxu0 %v1653
    %2935 = vmatprep.subr.bf16.mxu0 %v1658
    %2936 = vmatpush1.bf16.msra.mxu0 %v1657
    %2937 = vmatprep.subr.bf16.mxu0 %v1662
    %2938 = vmatpush1.bf16.msra.mxu0 %v1661
    %2939 = vmatprep.subr.bf16.mxu0 %v1666
    %2940 = vmatpush1.bf16.msra.mxu0 %v1665
    %2941 = vmatprep.subr.bf16.mxu0 %v1670
    %2942 = vmatpush1.bf16.msra.mxu0 %v1669
    %2943 = vmatprep.subr.bf16.mxu0 %v1674
    %2944 = vmatpush1.bf16.msra.mxu0 %v1673
    %2945 = vmatprep.subr.bf16.mxu0 %v1678
    %2946 = vmatpush1.bf16.msra.mxu0 %v1677
    %2947 = vmatprep.subr.bf16.mxu0 %v1682
    %2948 = vmatpush1.bf16.msra.mxu0 %v1681
    %2949 = vmatprep.subr.bf16.mxu0 %v1686
    %2950 = vmatpush1.bf16.msra.mxu0 %v1685
    %2951 = vmatprep.subr.bf16.mxu0 %v1690
    %2952 = vmatpush1.bf16.msra.mxu0 %v1689
    %2953 = vmatprep.subr.bf16.mxu0 %v1694
    %2954 = vmatpush1.bf16.msra.mxu0 %v1693
    %2955 = vmatprep.subr.bf16.mxu0 %v1698
    %2956 = vmatpush1.bf16.msra.mxu0 %v1697
    %2957 = vmatprep.subr.bf16.mxu0 %v1702
    %2958 = vmatpush1.bf16.msra.mxu0 %v1701
    %2959 = vmatprep.subr.bf16.mxu0 %v1706
    %2960 = vmatpush1.bf16.msra.mxu0 %v1705
    %2961 = vmatprep.subr.bf16.mxu0 %v1710
    %2962 = vmatpush1.bf16.msra.mxu0 %v1709
    %2963 = vmatprep.subr.bf16.mxu0 %v1714
    %2964 = vmatpush1.bf16.msra.mxu0 %v1713
    %2965 = vmatprep.mubr.bf16.mxu0 %v2855
    %2966 = vmatmul.mubr.bf16.gmra.mrb[0].mxu0 %v2932
    %v2967 = vpop.f32.mrb[0].mxu0
    %v2968 = vadd.f32 %v229, %v2967
    %v2969 = vpop.f32.mrb[0].mxu0
    %v2970 = vadd.f32 %v233, %v2969
    %v2971 = vpop.f32.mrb[0].mxu0
    %v2972 = vpop.f32.mrb[0].mxu0
    %2973 = vdwg.mxu0
    %2974 = vmatprep.subr.bf16.mxu0 %v1656
    %2975 = vmatpush1.bf16.msra.mxu0 %v1655
    %2976 = vmatprep.subr.bf16.mxu0 %v1660
    %2977 = vmatpush1.bf16.msra.mxu0 %v1659
    %2978 = vmatprep.subr.bf16.mxu0 %v1664
    %2979 = vmatpush1.bf16.msra.mxu0 %v1663
    %2980 = vmatprep.subr.bf16.mxu0 %v1668
    %2981 = vmatpush1.bf16.msra.mxu0 %v1667
    %2982 = vmatprep.subr.bf16.mxu0 %v1672
    %2983 = vmatpush1.bf16.msra.mxu0 %v1671
    %2984 = vmatprep.subr.bf16.mxu0 %v1676
    %2985 = vmatpush1.bf16.msra.mxu0 %v1675
    %2986 = vmatprep.subr.bf16.mxu0 %v1680
    %2987 = vmatpush1.bf16.msra.mxu0 %v1679
    %2988 = vmatprep.subr.bf16.mxu0 %v1684
    %2989 = vmatpush1.bf16.msra.mxu0 %v1683
    %2990 = vmatprep.subr.bf16.mxu0 %v1688
    %2991 = vmatpush1.bf16.msra.mxu0 %v1687
    %2992 = vmatprep.subr.bf16.mxu0 %v1692
    %2993 = vmatpush1.bf16.msra.mxu0 %v1691
    %2994 = vmatprep.subr.bf16.mxu0 %v1696
    %2995 = vmatpush1.bf16.msra.mxu0 %v1695
    %2996 = vmatprep.subr.bf16.mxu0 %v1700
    %2997 = vmatpush1.bf16.msra.mxu0 %v1699
    %2998 = vmatprep.subr.bf16.mxu0 %v1704
    %2999 = vmatpush1.bf16.msra.mxu0 %v1703
    %3000 = vmatprep.subr.bf16.mxu0 %v1708
    %3001 = vmatpush1.bf16.msra.mxu0 %v1707
    %3002 = vmatprep.subr.bf16.mxu0 %v1712
    %3003 = vmatpush1.bf16.msra.mxu0 %v1711
    %3004 = vmatprep.subr.bf16.mxu0 %v1716
    %3005 = vmatpush1.bf16.msra.mxu0 %v1715
    %3006 = vmatprep.mubr.bf16.mxu0 %v2855
    %3007 = vmatmul.mubr.bf16.gmra.mrb[0].mxu0 %v2932
    %v3008 = vpop.f32.mrb[0].mxu0
    %v3009 = vadd.f32 %v237, %v3008
    %v3010 = vpop.f32.mrb[0].mxu0
    %v3011 = vadd.f32 %v241, %v3010
    %v3012 = vpop.f32.mrb[0].mxu0
    %v3013 = vpop.f32.mrb[0].mxu0
    %3014 = vdwg.mxu0
    %v3015 = vxor.u32 %v2968, 2147483648
    %v3016 = vmul.f32 %v3015, 1.442695
    %v3017 = vpow.pop %v3016
    %v3018 = vadd.f32 %v3017, 1.0
    %v3019 = vrcp.pop %v3018
    %v3020 = vmul.f32 1.0, %v3019
    %v3021 = vxor.u32 %v2970, 2147483648
    %v3022 = vmul.f32 %v3021, 1.442695
    %v3023 = vpow.pop %v3022
    %v3024 = vadd.f32 %v3023, 1.0
    %v3025 = vrcp.pop %v3024
    %v3026 = vmul.f32 1.0, %v3025
    %v3027 = vtanh.pop %v3009
    %v3028 = vxor.u32 %v3011, 2147483648
    %v3029 = vmul.f32 %v3028, 1.442695
    %v3030 = vpow.pop %v3029
    %v3031 = vadd.f32 %v3030, 1.0
    %v3032 = vrcp.pop %v3031
    %v3033 = vmul.f32 1.0, %v3032
    %v3034 = vmul.f32 %v3026, %v2852
    %v3035 = vmul.f32 %v3020, %v3027
    %v3036 = vadd.f32 %v3034, %v3035
    %v3037 = vtanh.pop %v3036
    %v3038 = vmul.f32 %v3033, %v3037
    %v3039 = vpack.c.bf16 %v3038, %v3038
    %3040 = vmatprep.subr.bf16.mxu0 0
    %3041 = vmatpush1.bf16.msra.mxu0 %v1920
    %3042 = vmatprep.subr.bf16.mxu0 0
    %3043 = vmatpush1.bf16.msra.mxu0 %v1921
    %3044 = vmatprep.subr.bf16.mxu0 0
    %3045 = vmatpush1.bf16.msra.mxu0 %v1922
    %3046 = vmatprep.subr.bf16.mxu0 0
    %3047 = vmatpush1.bf16.msra.mxu0 %v1923
    %3048 = vmatprep.subr.bf16.mxu0 0
    %3049 = vmatpush1.bf16.msra.mxu0 %v1924
    %3050 = vmatprep.subr.bf16.mxu0 0
    %3051 = vmatpush1.bf16.msra.mxu0 %v1925
    %3052 = vmatprep.subr.bf16.mxu0 0
    %3053 = vmatpush1.bf16.msra.mxu0 %v1926
    %3054 = vmatprep.subr.bf16.mxu0 0
    %3055 = vmatpush1.bf16.msra.mxu0 %v1927
    %3056 = vmatprep.subr.bf16.mxu0 0
    %3057 = vmatpush1.bf16.msra.mxu0 0
    %3058 = vmatprep.subr.bf16.mxu0 0
    %3059 = vmatpush1.bf16.msra.mxu0 0
    %3060 = vmatprep.subr.bf16.mxu0 0
    %3061 = vmatpush1.bf16.msra.mxu0 0
    %3062 = vmatprep.subr.bf16.mxu0 0
    %3063 = vmatpush1.bf16.msra.mxu0 0
    %3064 = vmatprep.subr.bf16.mxu0 0
    %3065 = vmatpush1.bf16.msra.mxu0 0
    %3066 = vmatprep.subr.bf16.mxu0 0
    %3067 = vmatpush1.bf16.msra.mxu0 0
    %3068 = vmatprep.subr.bf16.mxu0 0
    %3069 = vmatpush1.bf16.msra.mxu0 0
    %3070 = vmatprep.subr.bf16.mxu0 0
    %3071 = vmatpush1.bf16.msra.mxu0 0
    %3072 = vmatprep.mubr.bf16.mxu0 0
    %3073 = vmatmul.mubr.bf16.gmra.mrb[0].mxu0 %v3039
    %v3074 = vpop.f32.mrb[0].mxu0
    %v3075 = vadd.f32 %v251, %v3074
    %v3076 = vpop.f32.mrb[0].mxu0
    %v3077 = vpop.f32.mrb[0].mxu0
    %v3078 = vpop.f32.mrb[0].mxu0
    %3079 = vdwg.mxu0
    %s3080 = scalar_lea.vmem %s9, 56
    %3081 = vst [vmem:[%s3080] sm:$0xff] %v3075
    // Predicated region
    $region46: #{seq2seq_forward.1} parent=1 // pred_check
      _
    $region47: #{seq2seq_forward.1} parent=1 // pred_check_branch
      %3083 = sbr.rel (0) target = $region49
    $region48: #{seq2seq_forward.1} parent=1 // pred_region
      _
    $region49: #{seq2seq_forward.1} parent=1 // pred_fallthru
      _
    // Predicated region
    $region50: #{seq2seq_forward.1} parent=1 // pred_check
      _
    $region51: #{seq2seq_forward.1} parent=1 // pred_check_branch
      %3085 = sbr.rel (0) target = $region53
    $region52: #{seq2seq_forward.1} parent=1 // pred_region
      _
    $region53: #{seq2seq_forward.1} parent=1 // pred_fallthru
      _
    %3086 = vsyncpa [#allocation3], 1
    %3087 = vsyncpa [#allocation5], 1

</llo_original>
